<compile_context>
chip_gen: v6e
topology: v6e:2x2x1
jax: 0.10.0
libtpu: 0.0.40
codegen_flags: <defaults>
</compile_context>

<pallas_src>
import jax
import jax.numpy as jnp
from jax import lax
from jax.experimental import pallas as pl
from jax.experimental.pallas import tpu as pltpu
import numpy as np

EPS = 1e-5  # nn.BatchNorm2d default eps


def _conv_stats_kernel(x_ref, w_ref, o_ref, sum_ref, ssq_ref):
    """Fused upsample(2x nearest) + 3x3 'same' conv + per-channel sum/sumsq.

    x_ref:   (1, H+2, W+2, Cin)  original-resolution input, zero-padded by 1 (NHWC)
    w_ref:   (Cout, 9*Cin)       conv weight, ordered (dy*3+dx)*Cin + c
    o_ref:   (1, Cout, TH2*W2)   un-normalized conv tile (channel-major, lane-dense)
    sum_ref: (1, Cout, 1)        per-channel running sum   (accumulated over row blocks)
    ssq_ref: (1, Cout, 1)        per-channel running sumsq (accumulated over row blocks)
    """
    j = pl.program_id(1)

    _, Hp, Wp, Cin = x_ref.shape
    Cout = w_ref.shape[0]
    M = o_ref.shape[2]
    W2 = 2 * (Wp - 2)          # upsampled width
    TH2 = M // W2              # upsampled rows per tile
    TH = TH2 // 2 + 2          # original (padded) rows needed, incl. halo

    # Rows of the padded original image needed by this tile (input block is resident
    # across the row-block axis; only re-DMAed when the batch index changes).
    row0 = pl.multiple_of(j * (TH2 // 2), TH2 // 2)
    xblk = x_ref[0, pl.ds(row0, TH)]                       # (TH, Wp, Cin)

    # Fused nearest 2x upsample with a 1-pixel conv halo on every side:
    # upsampled+halo index u maps to padded-original index (u+1)//2,
    # i.e. "repeat 2x, drop first & last".  Cin stays the minor (lane) dim, so
    # these are lane-preserving relayouts only.
    up = jnp.repeat(xblk, 2, axis=0)[1:-1]                 # (TH2+2, Wp,   Cin)
    up = jnp.repeat(up, 2, axis=1)[:, 1:-1]                # (TH2+2, W2+2, Cin)

    # im2col: one (TH2*W2, 9*Cin) tile -> ONE matmul with K = 9*Cin.
    taps = [up[dy:dy + TH2, dx:dx + W2] for dy in range(3) for dx in range(3)]
    col = jnp.concatenate(taps, axis=-1).reshape(TH2 * W2, 9 * Cin)

    # (Cout, 9Cin) . (TH2*W2, 9Cin)^T -> (Cout, TH2*W2): channel-major, lane-dense.
    acc = lax.dot_general(w_ref[...], col, (((1,), (1,)), ((), ())),
                          preferred_element_type=jnp.float32)
    o_ref[0] = acc

    # BatchNorm batch statistics: accumulate per-channel sum / sum-of-squares across
    # the row-block ("arbitrary") grid axis.  (Conv bias is intentionally omitted:
    # it is exactly cancelled by the batch mean in train-mode BN.)
    @pl.when(j == 0)
    def _():
        sum_ref[...] = jnp.zeros_like(sum_ref)
        ssq_ref[...] = jnp.zeros_like(ssq_ref)

    sum_ref[0] += jnp.sum(acc, axis=1, keepdims=True)
    ssq_ref[0] += jnp.sum(acc * acc, axis=1, keepdims=True)


def _bn_relu_kernel(conv_ref, scale_ref, shift_ref, o_ref):
    """Streaming y = relu(conv * scale + shift); BN folded to per-channel scale/shift."""
    o_ref[0] = jnp.maximum(conv_ref[0] * scale_ref[...] + shift_ref[...], 0.0)


def _pick_row_block(H2, W2, Cout, budget_bytes=2 * 1024 * 1024):
    """Largest even divisor of H2 whose conv tile is lane-dense and fits the budget."""
    best = H2
    for rb in range(2, H2 + 1, 2):
        if H2 % rb:
            continue
        lane_dense = (rb * W2) % 128 == 0 or rb == H2
        if lane_dense and Cout * rb * W2 * 4 <= budget_bytes:
            best = rb
    return best


def upconv_block(x_nchw, weight_oihw, bias, gamma, beta, *, row_block=None):
    """Forward pass of UpConvBlock. Input/output are NCHW (PyTorch convention).

    `bias` is accepted for signature parity but unused: a conv bias placed before a
    train-mode BatchNorm is exactly absorbed by the batch mean (output is identical).
    """
    del bias
    N, Cin, H, W = x_nchw.shape
    Cout = weight_oihw.shape[0]
    H2, W2 = 2 * H, 2 * W

    if row_block is None:
        row_block = _pick_row_block(H2, W2, Cout)
    assert H2 % row_block == 0 and row_block % 2 == 0
    assert (row_block * W2) % 128 == 0 or row_block == H2
    nrb = H2 // row_block
    M = row_block * W2

    # NCHW -> NHWC + 1-px zero pad at ORIGINAL resolution (cheap; the 4x upsampled
    # tensor is never materialized in HBM).
    x_nhwc = jnp.transpose(x_nchw, (0, 2, 3, 1)).astype(jnp.float32)
    xpad = jnp.pad(x_nhwc, ((0, 0), (1, 1), (1, 1), (0, 0)))

    # OIHW -> (Cout, 9*Cin), ordered (dy*3+dx)*Cin + c to match the kernel's im2col.
    wt = jnp.transpose(weight_oihw, (0, 2, 3, 1)).reshape(Cout, 9 * Cin).astype(jnp.float32)

    conv, psum, pssq = pl.pallas_call(
        _conv_stats_kernel,
        out_shape=(
            jax.ShapeDtypeStruct((N, Cout, H2 * W2), jnp.float32),
            jax.ShapeDtypeStruct((N, Cout, 1), jnp.float32),
            jax.ShapeDtypeStruct((N, Cout, 1), jnp.float32),
        ),
        grid=(N, nrb),
        in_specs=[
            pl.BlockSpec((1, H + 2, W + 2, Cin), lambda n, j: (n, 0, 0, 0)),
            pl.BlockSpec((Cout, 9 * Cin), lambda n, j: (0, 0)),
        ],
        out_specs=(
            pl.BlockSpec((1, Cout, M), lambda n, j: (n, 0, j)),
            pl.BlockSpec((1, Cout, 1), lambda n, j: (n, 0, 0)),
            pl.BlockSpec((1, Cout, 1), lambda n, j: (n, 0, 0)),
        ),
        compiler_params=pltpu.CompilerParams(
            dimension_semantics=("parallel", "arbitrary"),
            vmem_limit_bytes=64 * 1024 * 1024,
        ),
    )(xpad, wt)

    # Finalize BatchNorm (training-mode batch stats, biased variance) and fold
    # gamma/beta into a single per-channel scale/shift.  Tiny, f32.
    count = jnp.float32(N * H2 * W2)
    mean = jnp.sum(psum, axis=0) / count                        # (Cout, 1)
    var = jnp.maximum(jnp.sum(pssq, axis=0) / count - mean * mean, 0.0)
    scale = gamma.reshape(Cout, 1).astype(jnp.float32) * lax.rsqrt(var + EPS)
    shift = beta.reshape(Cout, 1).astype(jnp.float32) - mean * scale

    out_flat = pl.pallas_call(
        _bn_relu_kernel,
        out_shape=jax.ShapeDtypeStruct((N, Cout, H2 * W2), jnp.float32),
        grid=(N, nrb),
        in_specs=[
            pl.BlockSpec((1, Cout, M), lambda n, j: (n, 0, j)),
            pl.BlockSpec((Cout, 1), lambda n, j: (0, 0)),
            pl.BlockSpec((Cout, 1), lambda n, j: (0, 0)),
        ],
        out_specs=pl.BlockSpec((1, Cout, M), lambda n, j: (n, 0, j)),
        compiler_params=pltpu.CompilerParams(
            dimension_semantics=("parallel", "parallel"),
            vmem_limit_bytes=64 * 1024 * 1024,
        ),
    )(conv, scale, shift)

    # Channel-major kernel output is already NCHW-ordered: epilogue is a free reshape.
    return out_flat.reshape(N, Cout, H2, W2)


def reference(x_nchw, weight_oihw, bias, gamma, beta):
    """Pure-JAX reference matching PyTorch UpConvBlock.forward (training-mode BN)."""
    x_up = jnp.repeat(jnp.repeat(x_nchw, 2, axis=2), 2, axis=3)
    conv = lax.conv_general_dilated(
        x_up, weight_oihw, window_strides=(1, 1), padding="SAME",
        dimension_numbers=("NCHW", "OIHW", "NCHW"))
    conv = conv + bias[None, :, None, None]
    mean = conv.mean(axis=(0, 2, 3), keepdims=True)
    var = ((conv - mean) ** 2).mean(axis=(0, 2, 3), keepdims=True)
    y = (conv - mean) / jnp.sqrt(var + EPS)
    y = y * gamma[None, :, None, None] + beta[None, :, None, None]
    return jnp.maximum(y, 0.0)


if __name__ == "__main__":
    # Small shapes consistent with the module: batch=2, in_channels=4, out_channels=8, 16x16.
    N, Cin, Cout, H, W = 2, 4, 8, 16, 16

    key = jax.random.PRNGKey(0)
    kx, kw, kb, kg, kbe = jax.random.split(key, 5)

    x = jax.random.normal(kx, (N, Cin, H, W), dtype=jnp.float32)

    # Deterministic parameter init (shapes from nn.Conv2d(Cin, Cout, 3) / nn.BatchNorm2d(Cout)).
    fan_in = Cin * 3 * 3
    bound = 1.0 / np.sqrt(fan_in)
    conv_w = jax.random.uniform(kw, (Cout, Cin, 3, 3), jnp.float32, -bound, bound)
    conv_b = jax.random.uniform(kb, (Cout,), jnp.float32, -bound, bound)
    bn_gamma = 1.0 + 0.1 * jax.random.normal(kg, (Cout,), jnp.float32)
    bn_beta = 0.1 * jax.random.normal(kbe, (Cout,), jnp.float32)

    # row_block=8 -> grid (N=2, 4 row blocks), 256-lane conv tiles, exercises the
    # cross-tile BN-stat accumulation path.
    fwd = jax.jit(lambda *a: upconv_block(*a, row_block=8))
    out = jax.block_until_ready(fwd(x, conv_w, conv_b, bn_gamma, bn_beta))

    ref = jax.block_until_ready(reference(x, conv_w, conv_b, bn_gamma, bn_beta))
    assert out.shape == (N, Cout, 2 * H, 2 * W), out.shape
    np.testing.assert_allclose(np.asarray(out), np.asarray(ref), atol=1e-4, rtol=1e-4)

    print("KERNEL_OK")
</pallas_src>

<mosaic_0001>
module attributes {stable_mosaic.version = 11 : i64} {
  func.func @_conv_stats_kernel(%arg0: i32, %arg1: i32, %arg2: memref<1x18x18x4xf32, #tpu.memory_space<vmem>>, %arg3: memref<8x36xf32, #tpu.memory_space<vmem>>, %arg4: memref<1x8x256xf32, #tpu.memory_space<vmem>>, %arg5: memref<1x8x1xf32, #tpu.memory_space<vmem>>, %arg6: memref<1x8x1xf32, #tpu.memory_space<vmem>>) attributes {dimension_semantics = [#tpu.dimension_semantics<parallel>, #tpu.dimension_semantics<arbitrary>], iteration_bounds = array<i64: 2, 4>, scalar_prefetch = 0 : i64, scratch_operands = 0 : i64, tpu.core_type = #tpu.core_type<tc>, window_params = [{transform_indices = @transform_0, window_bounds = array<i64: 1, 18, 18, 4>}, {pipeline_mode = #tpu.pipeline_mode<synchronous>, transform_indices = @transform_1, window_bounds = array<i64: 8, 36>}, {transform_indices = @transform_2, window_bounds = array<i64: 1, 8, 256>}, {transform_indices = @transform_3, window_bounds = array<i64: 1, 8, 1>}, {transform_indices = @transform_4, window_bounds = array<i64: 1, 8, 1>}]} {
    %c4_i32 = arith.constant 4 : i32
    %0 = arith.muli %arg1, %c4_i32 : i32
    %1 = tpu.assume_multiple %0, 4 : i32
    %c0 = arith.constant 0 : index
    %2 = arith.index_cast %1 : i32 to index
    %c0_0 = arith.constant 0 : index
    %c0_1 = arith.constant 0 : index
    %3 = vector.load %arg2[%c0, %2, %c0_0, %c0_1] : memref<1x18x18x4xf32, #tpu.memory_space<vmem>>, vector<1x6x18x4xf32>
    %4 = vector.shape_cast %3 : vector<1x6x18x4xf32> to vector<6x18x4xf32>
    %5 = vector.shape_cast %4 : vector<6x18x4xf32> to vector<6x1x18x4xf32>
    %6 = vector.broadcast %5 : vector<6x1x18x4xf32> to vector<6x2x18x4xf32>
    %7 = vector.shape_cast %6 : vector<6x2x18x4xf32> to vector<12x18x4xf32>
    %8 = vector.extract_strided_slice %7 {offsets = [1, 0, 0], sizes = [10, 18, 4], strides = [1, 1, 1]} : vector<12x18x4xf32> to vector<10x18x4xf32>
    %9 = vector.shape_cast %8 : vector<10x18x4xf32> to vector<10x18x1x4xf32>
    %10 = vector.broadcast %9 : vector<10x18x1x4xf32> to vector<10x18x2x4xf32>
    %11 = vector.shape_cast %10 : vector<10x18x2x4xf32> to vector<10x36x4xf32>
    %12 = vector.extract_strided_slice %11 {offsets = [0, 1, 0], sizes = [10, 34, 4], strides = [1, 1, 1]} : vector<10x36x4xf32> to vector<10x34x4xf32>
    %13 = vector.extract_strided_slice %12 {offsets = [0, 0, 0], sizes = [8, 32, 4], strides = [1, 1, 1]} : vector<10x34x4xf32> to vector<8x32x4xf32>
    %14 = vector.extract_strided_slice %12 {offsets = [0, 1, 0], sizes = [8, 32, 4], strides = [1, 1, 1]} : vector<10x34x4xf32> to vector<8x32x4xf32>
    %15 = vector.extract_strided_slice %12 {offsets = [0, 2, 0], sizes = [8, 32, 4], strides = [1, 1, 1]} : vector<10x34x4xf32> to vector<8x32x4xf32>
    %16 = vector.extract_strided_slice %12 {offsets = [1, 0, 0], sizes = [8, 32, 4], strides = [1, 1, 1]} : vector<10x34x4xf32> to vector<8x32x4xf32>
    %17 = vector.extract_strided_slice %12 {offsets = [1, 1, 0], sizes = [8, 32, 4], strides = [1, 1, 1]} : vector<10x34x4xf32> to vector<8x32x4xf32>
    %18 = vector.extract_strided_slice %12 {offsets = [1, 2, 0], sizes = [8, 32, 4], strides = [1, 1, 1]} : vector<10x34x4xf32> to vector<8x32x4xf32>
    %19 = vector.extract_strided_slice %12 {offsets = [2, 0, 0], sizes = [8, 32, 4], strides = [1, 1, 1]} : vector<10x34x4xf32> to vector<8x32x4xf32>
    %20 = vector.extract_strided_slice %12 {offsets = [2, 1, 0], sizes = [8, 32, 4], strides = [1, 1, 1]} : vector<10x34x4xf32> to vector<8x32x4xf32>
    %21 = vector.extract_strided_slice %12 {offsets = [2, 2, 0], sizes = [8, 32, 4], strides = [1, 1, 1]} : vector<10x34x4xf32> to vector<8x32x4xf32>
    %22 = tpu.concatenate %13, %14, %15, %16, %17, %18, %19, %20, %21 in 2 : vector<8x32x4xf32>, vector<8x32x4xf32>, vector<8x32x4xf32>, vector<8x32x4xf32>, vector<8x32x4xf32>, vector<8x32x4xf32>, vector<8x32x4xf32>, vector<8x32x4xf32>, vector<8x32x4xf32> -> vector<8x32x36xf32>
    %23 = vector.shape_cast %22 : vector<8x32x36xf32> to vector<256x36xf32>
    %c0_2 = arith.constant 0 : index
    %c0_3 = arith.constant 0 : index
    %24 = vector.load %arg3[%c0_2, %c0_3] : memref<8x36xf32, #tpu.memory_space<vmem>>, vector<8x36xf32>
    %cst = arith.constant dense<0.000000e+00> : vector<8x256xf32>
    %25 = tpu.matmul %24, %23, %cst {dimension_numbers = #tpu.dot_dimension_numbers<[1], [1], [0], [0], [0, 0, 1, 0], [], []>} : vector<8x36xf32>, vector<256x36xf32>, vector<8x256xf32> -> vector<8x256xf32>
    %c0_4 = arith.constant 0 : index
    %c0_5 = arith.constant 0 : index
    %c0_6 = arith.constant 0 : index
    %26 = vector.load %arg4[%c0_4, %c0_5, %c0_6] : memref<1x8x256xf32, #tpu.memory_space<vmem>>, vector<1x8x256xf32>
    %27 = vector.shape_cast %26 : vector<1x8x256xf32> to vector<8x256xf32>
    %28 = vector.shape_cast %25 : vector<8x256xf32> to vector<1x8x256xf32>
    tpu.vector_store %arg4[%c0_4, %c0_5, %c0_6], %28 {strides = array<i32>} : memref<1x8x256xf32, #tpu.memory_space<vmem>>, vector<1x8x256xf32>,
    %c0_i32 = arith.constant 0 : i32
    %29 = arith.cmpi eq, %arg1, %c0_i32 : i32
    %30 = arith.extui %29 : i1 to i32
    %c0_i32_7 = arith.constant 0 : i32
    %31 = arith.cmpi ne, %30, %c0_i32_7 : i32
    scf.if %31 {
      %cst_22 = arith.constant 0.000000e+00 : f32
      %49 = vector.broadcast %cst_22 : f32 to vector<1x8x1xf32>
      %c0_23 = arith.constant 0 : index
      %c0_24 = arith.constant 0 : index
      %c0_25 = arith.constant 0 : index
      %50 = vector.load %arg5[%c0_23, %c0_24, %c0_25] : memref<1x8x1xf32, #tpu.memory_space<vmem>>, vector<1x8x1xf32>
      tpu.vector_store %arg5[%c0_23, %c0_24, %c0_25], %49 {strides = array<i32>} : memref<1x8x1xf32, #tpu.memory_space<vmem>>, vector<1x8x1xf32>,
      %cst_26 = arith.constant 0.000000e+00 : f32
      %51 = vector.broadcast %cst_26 : f32 to vector<1x8x1xf32>
      %c0_27 = arith.constant 0 : index
      %c0_28 = arith.constant 0 : index
      %c0_29 = arith.constant 0 : index
      %52 = vector.load %arg6[%c0_27, %c0_28, %c0_29] : memref<1x8x1xf32, #tpu.memory_space<vmem>>, vector<1x8x1xf32>
      tpu.vector_store %arg6[%c0_27, %c0_28, %c0_29], %51 {strides = array<i32>} : memref<1x8x1xf32, #tpu.memory_space<vmem>>, vector<1x8x1xf32>,
    } else {
    }
    %c0_8 = arith.constant 0 : index
    %c0_9 = arith.constant 0 : index
    %c0_10 = arith.constant 0 : index
    %32 = vector.load %arg5[%c0_8, %c0_9, %c0_10] : memref<1x8x1xf32, #tpu.memory_space<vmem>>, vector<1x8x1xf32>
    %33 = vector.shape_cast %32 : vector<1x8x1xf32> to vector<8x1xf32>
    %cst_11 = arith.constant dense<0.000000e+00> : vector<8xf32>
    %34 = vector.multi_reduction <add>, %25, %cst_11 [1] : vector<8x256xf32> to vector<8xf32>
    %35 = vector.shape_cast %34 : vector<8xf32> to vector<8x1xf32>
    %36 = arith.addf %33, %35 : vector<8x1xf32>
    %c0_12 = arith.constant 0 : index
    %c0_13 = arith.constant 0 : index
    %c0_14 = arith.constant 0 : index
    %37 = vector.load %arg5[%c0_12, %c0_13, %c0_14] : memref<1x8x1xf32, #tpu.memory_space<vmem>>, vector<1x8x1xf32>
    %38 = vector.shape_cast %37 : vector<1x8x1xf32> to vector<8x1xf32>
    %39 = vector.shape_cast %36 : vector<8x1xf32> to vector<1x8x1xf32>
    tpu.vector_store %arg5[%c0_12, %c0_13, %c0_14], %39 {strides = array<i32>} : memref<1x8x1xf32, #tpu.memory_space<vmem>>, vector<1x8x1xf32>,
    %c0_15 = arith.constant 0 : index
    %c0_16 = arith.constant 0 : index
    %c0_17 = arith.constant 0 : index
    %40 = vector.load %arg6[%c0_15, %c0_16, %c0_17] : memref<1x8x1xf32, #tpu.memory_space<vmem>>, vector<1x8x1xf32>
    %41 = vector.shape_cast %40 : vector<1x8x1xf32> to vector<8x1xf32>
    %42 = arith.mulf %25, %25 : vector<8x256xf32>
    %cst_18 = arith.constant dense<0.000000e+00> : vector<8xf32>
    %43 = vector.multi_reduction <add>, %42, %cst_18 [1] : vector<8x256xf32> to vector<8xf32>
    %44 = vector.shape_cast %43 : vector<8xf32> to vector<8x1xf32>
    %45 = arith.addf %41, %44 : vector<8x1xf32>
    %c0_19 = arith.constant 0 : index
    %c0_20 = arith.constant 0 : index
    %c0_21 = arith.constant 0 : index
    %46 = vector.load %arg6[%c0_19, %c0_20, %c0_21] : memref<1x8x1xf32, #tpu.memory_space<vmem>>, vector<1x8x1xf32>
    %47 = vector.shape_cast %46 : vector<1x8x1xf32> to vector<8x1xf32>
    %48 = vector.shape_cast %45 : vector<8x1xf32> to vector<1x8x1xf32>
    tpu.vector_store %arg6[%c0_19, %c0_20, %c0_21], %48 {strides = array<i32>} : memref<1x8x1xf32, #tpu.memory_space<vmem>>, vector<1x8x1xf32>,
    return
  }
  func.func @transform_0(%arg0: i32, %arg1: i32) -> (i32, i32, i32, i32) {
    %c0_i32 = arith.constant 0 : i32
    %c0_i32_0 = arith.constant 0 : i32
    %c0_i32_1 = arith.constant 0 : i32
    %c0_i32_2 = arith.constant 0 : i32
    return %arg0, %c0_i32, %c0_i32_0, %c0_i32_1 : i32, i32, i32, i32
  }
  func.func @transform_1(%arg0: i32, %arg1: i32) -> (i32, i32) {
    %c0_i32 = arith.constant 0 : i32
    %c0_i32_0 = arith.constant 0 : i32
    %c0_i32_1 = arith.constant 0 : i32
    return %c0_i32, %c0_i32_0 : i32, i32
  }
  func.func @transform_2(%arg0: i32, %arg1: i32) -> (i32, i32, i32) {
    %c0_i32 = arith.constant 0 : i32
    %c0_i32_0 = arith.constant 0 : i32
    return %arg0, %c0_i32, %arg1 : i32, i32, i32
  }
  func.func @transform_3(%arg0: i32, %arg1: i32) -> (i32, i32, i32) {
    %c0_i32 = arith.constant 0 : i32
    %c0_i32_0 = arith.constant 0 : i32
    %c0_i32_1 = arith.constant 0 : i32
    return %arg0, %c0_i32, %c0_i32_0 : i32, i32, i32
  }
  func.func @transform_4(%arg0: i32, %arg1: i32) -> (i32, i32, i32) {
    %c0_i32 = arith.constant 0 : i32
    %c0_i32_0 = arith.constant 0 : i32
    %c0_i32_1 = arith.constant 0 : i32
    return %arg0, %c0_i32, %c0_i32_0 : i32, i32, i32
  }
}

module attributes {stable_mosaic.version = 11 : i64} {
  func.func @_bn_relu_kernel(%arg0: i32, %arg1: i32, %arg2: memref<1x8x256xf32, #tpu.memory_space<vmem>>, %arg3: memref<8x1xf32, #tpu.memory_space<vmem>>, %arg4: memref<8x1xf32, #tpu.memory_space<vmem>>, %arg5: memref<1x8x256xf32, #tpu.memory_space<vmem>>) attributes {dimension_semantics = [#tpu.dimension_semantics<parallel>, #tpu.dimension_semantics<parallel>], iteration_bounds = array<i64: 2, 4>, scalar_prefetch = 0 : i64, scratch_operands = 0 : i64, tpu.core_type = #tpu.core_type<tc>, window_params = [{transform_indices = @transform_0, window_bounds = array<i64: 1, 8, 256>}, {pipeline_mode = #tpu.pipeline_mode<synchronous>, transform_indices = @transform_1, window_bounds = array<i64: 8, 1>}, {pipeline_mode = #tpu.pipeline_mode<synchronous>, transform_indices = @transform_2, window_bounds = array<i64: 8, 1>}, {transform_indices = @transform_3, window_bounds = array<i64: 1, 8, 256>}]} {
    %c0 = arith.constant 0 : index
    %c0_0 = arith.constant 0 : index
    %c0_1 = arith.constant 0 : index
    %0 = vector.load %arg2[%c0, %c0_0, %c0_1] : memref<1x8x256xf32, #tpu.memory_space<vmem>>, vector<1x8x256xf32>
    %1 = vector.shape_cast %0 : vector<1x8x256xf32> to vector<8x256xf32>
    %c0_2 = arith.constant 0 : index
    %c0_3 = arith.constant 0 : index
    %2 = vector.load %arg3[%c0_2, %c0_3] : memref<8x1xf32, #tpu.memory_space<vmem>>, vector<8x1xf32>
    %3 = vector.broadcast %2 : vector<8x1xf32> to vector<8x256xf32>
    %4 = arith.mulf %1, %3 : vector<8x256xf32>
    %c0_4 = arith.constant 0 : index
    %c0_5 = arith.constant 0 : index
    %5 = vector.load %arg4[%c0_4, %c0_5] : memref<8x1xf32, #tpu.memory_space<vmem>>, vector<8x1xf32>
    %6 = vector.broadcast %5 : vector<8x1xf32> to vector<8x256xf32>
    %7 = arith.addf %4, %6 : vector<8x256xf32>
    %cst = arith.constant 0.000000e+00 : f32
    %8 = vector.broadcast %cst : f32 to vector<8x256xf32>
    %9 = arith.maximumf %7, %8 : vector<8x256xf32>
    %c0_6 = arith.constant 0 : index
    %c0_7 = arith.constant 0 : index
    %c0_8 = arith.constant 0 : index
    %10 = vector.load %arg5[%c0_6, %c0_7, %c0_8] : memref<1x8x256xf32, #tpu.memory_space<vmem>>, vector<1x8x256xf32>
    %11 = vector.shape_cast %10 : vector<1x8x256xf32> to vector<8x256xf32>
    %12 = vector.shape_cast %9 : vector<8x256xf32> to vector<1x8x256xf32>
    tpu.vector_store %arg5[%c0_6, %c0_7, %c0_8], %12 {strides = array<i32>} : memref<1x8x256xf32, #tpu.memory_space<vmem>>, vector<1x8x256xf32>,
    return
  }
  func.func @transform_0(%arg0: i32, %arg1: i32) -> (i32, i32, i32) {
    %c0_i32 = arith.constant 0 : i32
    %c0_i32_0 = arith.constant 0 : i32
    return %arg0, %c0_i32, %arg1 : i32, i32, i32
  }
  func.func @transform_1(%arg0: i32, %arg1: i32) -> (i32, i32) {
    %c0_i32 = arith.constant 0 : i32
    %c0_i32_0 = arith.constant 0 : i32
    %c0_i32_1 = arith.constant 0 : i32
    return %c0_i32, %c0_i32_0 : i32, i32
  }
  func.func @transform_2(%arg0: i32, %arg1: i32) -> (i32, i32) {
    %c0_i32 = arith.constant 0 : i32
    %c0_i32_0 = arith.constant 0 : i32
    %c0_i32_1 = arith.constant 0 : i32
    return %c0_i32, %c0_i32_0 : i32, i32
  }
  func.func @transform_3(%arg0: i32, %arg1: i32) -> (i32, i32, i32) {
    %c0_i32 = arith.constant 0 : i32
    %c0_i32_0 = arith.constant 0 : i32
    return %arg0, %c0_i32, %arg1 : i32, i32, i32
  }
}

</mosaic_0001>

<llo_original>
// kernel: _lambda_.3
$region0: #{_lambda_.3}
  #allocation0 [shape = 'u32[]', space=smem, size = 0x4, offset = 0x4, fixed_abs, tag = 'smem constant byte address 0x4 - core index']
  #allocation1 [shape = 'u32[144,128]{1,0:T(1,128)}', space=vmem, size = 0x12000, scoped, tag = 'internal scratch']
  %s0 = inlined_call_operand.vmem [shape: f32[2,8,1024], index: 0, kind: input, shape index: {}]
  %s1 = inlined_call_operand.vmem [shape: f32[8,1], index: 1, kind: input, shape index: {}]
  %s2 = inlined_call_operand.vmem [shape: f32[8,1], index: 2, kind: input, shape index: {}]
  %s3 = inlined_call_operand.vmem [shape: f32[2,8,1024], index: 3, kind: output, shape index: {}]
  %s4 = sld [smem:[#allocation0]]
  $region45: #{_lambda_.3} parent=0
    _
  %s6 = ssub.s32 1, %s4
  %s7 = scalar_select 0, %s6, %s4
  loop: start=0, step=1, limit=10
  $region2: #{_lambda_.3} parent=0 // loop_pre_header
    _
  $region3: #{_lambda_.3} parent=0 // loop_header
    %s9 = sphi 0, %s13
    %p10 = scmp.ge.s32.totalorder %s9, 10
    %s16 = sphi 0, %s28
    %s17 = sphi 0, %s24
    %s18 = sphi 0, %s16
    %s19 = sphi 0, %s17
    %s20 = sphi 0, %s18
    %s21 = sphi 0, %s19
    %s33 = sphi 0, %s35
    %s36 = sphi 0, %s33
    %s37 = sphi 0, %s36
    %s53 = sphi 0, %s37
    %s57 = sphi 0, %s57
    %s59 = sphi 0, %s57
    %s60 = sphi 0, %s59
    %s74 = sphi 0, %s60
    %s78 = sphi 0, %s78
    %s80 = sphi 0, %s78
    %s81 = sphi 0, %s80
    %s95 = sphi 0, %s81
    %s103 = sphi 0, %s105
    %s106 = sphi 0, %s103
    %s107 = sphi 0, %s106
    %s123 = sphi 0, %s107
  $region4: #{_lambda_.3} parent=0 // loop_header_branch
    %12 = sbr.rel (%p10) target = $region8
  $region5: #{_lambda_.3} parent=0 // loop_body
    %s14 = ssub.s32 %s9, 1
    %s15 = ssub.s32 %s9, 2
    %s22 = sadd.s32 1, %s17
    %p23 = scmp.ge.s32.totalorder %s22, 4
    %s24 = scalar_select %p23, 0, %s22
    %s25 = sadd.s32 1, %s16
    %s26 = scalar_select %p23, %s25, %s16
    %p27 = scmp.ge.s32.totalorder %s26, 2
    %s28 = scalar_select %p27, 0, %s26
    %s29 = ssub.s32 %s16, %s28
    %s30 = ssub.s32 %s17, %s24
    %s31 = sor.u32 %s29, %s30
    %p32 = scmp.eq.s32.totalorder %s31, 0
    %s34 = sadd.s32 %s33, 1
    %s35 = scalar_select %p32, %s33, %s34
    %p38 = pneg %p32
    %p39 = scmp.eq.s32.totalorder %s9, 7
    %p40 = por %p38, %p39
    %p41 = scmp.ne.s32.totalorder %s33, %s36
    %p42 = scmp.eq.s32.totalorder %s9, 0
    %p43 = por %p41, %p42
    %p44 = scmp.ne.s32.totalorder %s33, %s36
    %p45 = scmp.eq.s32.totalorder %s14, 7
    %p46 = por %p44, %p45
    %p47 = scmp.ne.s32.totalorder %s36, %s37
    %p48 = scmp.eq.s32.totalorder %s14, 0
    %p49 = por %p47, %p48
    %p50 = scmp.ne.s32.totalorder %s36, %s37
    %p51 = scmp.eq.s32.totalorder %s15, 7
    %p52 = por %p50, %p51
    %p54 = scmp.ne.s32.totalorder %s37, %s53
    %p55 = scmp.eq.s32.totalorder %s15, 0
    %p56 = por %p54, %p55
    %s58 = sadd.s32 %s57, 1
    %p61 = scmp.eq.s32.totalorder %s9, 7
    %p62 = scmp.ne.s32.totalorder %s57, %s59
    %p63 = scmp.eq.s32.totalorder %s9, 0
    %p64 = por %p62, %p63
    %p65 = scmp.ne.s32.totalorder %s57, %s59
    %p66 = scmp.eq.s32.totalorder %s14, 7
    %p67 = por %p65, %p66
    %p68 = scmp.ne.s32.totalorder %s59, %s60
    %p69 = scmp.eq.s32.totalorder %s14, 0
    %p70 = por %p68, %p69
    %p71 = scmp.ne.s32.totalorder %s59, %s60
    %p72 = scmp.eq.s32.totalorder %s15, 7
    %p73 = por %p71, %p72
    %p75 = scmp.ne.s32.totalorder %s60, %s74
    %p76 = scmp.eq.s32.totalorder %s15, 0
    %p77 = por %p75, %p76
    %s79 = sadd.s32 %s78, 1
    %p82 = scmp.eq.s32.totalorder %s9, 7
    %p83 = scmp.ne.s32.totalorder %s78, %s80
    %p84 = scmp.eq.s32.totalorder %s9, 0
    %p85 = por %p83, %p84
    %p86 = scmp.ne.s32.totalorder %s78, %s80
    %p87 = scmp.eq.s32.totalorder %s14, 7
    %p88 = por %p86, %p87
    %p89 = scmp.ne.s32.totalorder %s80, %s81
    %p90 = scmp.eq.s32.totalorder %s14, 0
    %p91 = por %p89, %p90
    %p92 = scmp.ne.s32.totalorder %s80, %s81
    %p93 = scmp.eq.s32.totalorder %s15, 7
    %p94 = por %p92, %p93
    %p96 = scmp.ne.s32.totalorder %s81, %s95
    %p97 = scmp.eq.s32.totalorder %s15, 0
    %p98 = por %p96, %p97
    %s99 = ssub.s32 %s16, %s28
    %s100 = ssub.s32 %s17, %s24
    %s101 = sor.u32 %s99, %s100
    %p102 = scmp.eq.s32.totalorder %s101, 0
    %s104 = sadd.s32 %s103, 1
    %s105 = scalar_select %p102, %s103, %s104
    %p108 = pneg %p102
    %p109 = scmp.eq.s32.totalorder %s9, 7
    %p110 = por %p108, %p109
    %p111 = scmp.ne.s32.totalorder %s103, %s106
    %p112 = scmp.eq.s32.totalorder %s9, 0
    %p113 = por %p111, %p112
    %p114 = scmp.ne.s32.totalorder %s103, %s106
    %p115 = scmp.eq.s32.totalorder %s14, 7
    %p116 = por %p114, %p115
    %p117 = scmp.ne.s32.totalorder %s106, %s107
    %p118 = scmp.eq.s32.totalorder %s14, 0
    %p119 = por %p117, %p118
    %p120 = scmp.ne.s32.totalorder %s106, %s107
    %p121 = scmp.eq.s32.totalorder %s15, 7
    %p122 = por %p120, %p121
    %p124 = scmp.ne.s32.totalorder %s107, %s123
    %p125 = scmp.eq.s32.totalorder %s15, 0
    %p126 = por %p124, %p125
    %p127 = scmp.le.s32.totalorder 1, %s9
    %p128 = scmp.lt.s32.totalorder %s9, 9
    %p129 = pnand %p127, %p128
    %p130 = pneg %p129
    // Predicated region
    $region9: #{_lambda_.3} parent=5 // pred_check
      _
    $region10: #{_lambda_.3} parent=5 // pred_check_branch
      %132 = sbr.rel (%p129) target = $region12
    $region11: #{_lambda_.3} parent=5 // pred_region
      %s133 = ssub.s32 %s9, 1
      // Predicated region
      $region13: #{_lambda_.3} parent=11 // pred_check
        %p134 = pneg %p70
      $region14: #{_lambda_.3} parent=11 // pred_check_branch
        %136 = sbr.rel (%p134) target = $region16
      $region15: #{_lambda_.3} parent=11 // pred_region
        _
      $region16: #{_lambda_.3} parent=11 // pred_fallthru
        _
      // Predicated region
      $region17: #{_lambda_.3} parent=11 // pred_check
        %p137 = pneg %p91
      $region18: #{_lambda_.3} parent=11 // pred_check_branch
        %139 = sbr.rel (%p137) target = $region20
      $region19: #{_lambda_.3} parent=11 // pred_region
        _
      $region20: #{_lambda_.3} parent=11 // pred_fallthru
        _
    $region12: #{_lambda_.3} parent=5 // pred_fallthru
      _
    %p140 = scmp.lt.s32.totalorder %s9, 8
    // Predicated region
    $region21: #{_lambda_.3} parent=5 // pred_check
      %p141 = pneg %p140
    $region22: #{_lambda_.3} parent=5 // pred_check_branch
      %143 = sbr.rel (%p141) target = $region24
    $region23: #{_lambda_.3} parent=5 // pred_region
      // Predicated region
      $region25: #{_lambda_.3} parent=23 // pred_check
        %p144 = pneg %p43
      $region26: #{_lambda_.3} parent=23 // pred_check_branch
        %146 = sbr.rel (%p144) target = $region28
      $region27: #{_lambda_.3} parent=23 // pred_region
        %s147 = smul.u32 2, %s17
        %p148 = scmp.lt.s32.totalorder %s16, 1
        %s149 = scalar_select %p148, %s16, 1
        %p150 = scmp.lt.s32.totalorder %s147, 7
        %s151 = scalar_select %p150, %s147, 7
        %s152 = smul.addr %s149, 8
        %s153 = sadd.s32 %s151, %s152
        %s154 = smul.addr %s153, 8
        %s155 = scalar_lea.vmem %s0, %s154
        %s156 = smul.u32 2, %s17
      $region28: #{_lambda_.3} parent=23 // pred_fallthru
        _
    $region24: #{_lambda_.3} parent=5 // pred_fallthru
      _
    %p157 = scmp.le.s32.totalorder 1, %s9
    %p158 = scmp.lt.s32.totalorder %s9, 9
    %p159 = pnand %p157, %p158
    %p160 = pneg %p159
    // Predicated region
    $region29: #{_lambda_.3} parent=5 // pred_check
      _
    $region30: #{_lambda_.3} parent=5 // pred_check_branch
      %162 = sbr.rel (%p159) target = $region32
    $region31: #{_lambda_.3} parent=5 // pred_region
      %s163 = ssub.s32 %s9, 1
      %s164 = smul.u32 2, %s19
      %p165 = scmp.lt.s32.totalorder %s18, 1
      %s166 = scalar_select %p165, %s18, 1
      %p167 = scmp.lt.s32.totalorder %s164, 7
      %s168 = scalar_select %p167, %s164, 7
      %s169 = smul.addr %s166, 8
      %s170 = sadd.s32 %s168, %s169
      %s171 = smul.addr %s170, 8
      %s172 = scalar_lea.vmem %s0, %s171
      %p173 = pneg %p49
      %p174 = pneg %p46
      %p175 = pneg %p70
      %p176 = pneg %p67
      %p177 = pneg %p91
      %p178 = pneg %p88
      %p179 = pneg %p119
      %p180 = pneg %p116
      %s181 = smul.u32 2, %s19
      %p182 = scmp.lt.s32.totalorder %s18, 1
      %s183 = scalar_select %p182, %s18, 1
      %p184 = scmp.lt.s32.totalorder %s181, 7
      %s185 = scalar_select %p184, %s181, 7
      %s186 = smul.addr %s183, 8
      %s187 = sadd.s32 %s185, %s186
      %s188 = smul.addr %s187, 8
      %s189 = scalar_lea.vmem %s3, %s188
      %s190 = smul.u32 2, %s19
      %p191 = scmp.lt.s32.totalorder %s18, 1
      %s192 = scalar_select %p191, %s18, 1
      %p193 = scmp.lt.s32.totalorder %s190, 7
      %s194 = scalar_select %p193, %s190, 7
      %s195 = smul.addr %s192, 8
      %s196 = sadd.s32 %s194, %s195
      %s197 = smul.addr %s196, 8
      %s198 = scalar_lea.vmem %s0, %s197
      %s199 = smul.u32 2, %s19
      %s200 = smul.u32 2, %s19
      %p201 = scmp.lt.s32.totalorder %s18, 1
      %s202 = scalar_select %p201, %s18, 1
      %p203 = scmp.lt.s32.totalorder %s200, 7
      %s204 = scalar_select %p203, %s200, 7
      %s205 = smul.addr %s202, 8
      %s206 = sadd.s32 %s204, %s205
      %s207 = smul.addr %s206, 8
      %s208 = scalar_lea.vmem %s3, %s207
      %s209 = smul.u32 2, %s19
      %v210 = vld [vmem:[%s198] sm:$0xff]
      %v211 = vld [vmem:[%s198 + $0x8] sm:$0xff]
      %v212 = vld [vmem:[%s1] sm:$0xff]
      %214 = vset.pattern.permute.xlu0 0
      %215 = vperm.xlu0 %214, %v212
      %v216 = vpop.permute.xlu0 %215
      %v218 = vmul.f32 %v210, %v216
      %v219 = vmul.f32 %v211, %v216
      %v220 = vld [vmem:[%s2] sm:$0xff]
      %222 = vset.pattern.permute.xlu0 0
      %223 = vperm.xlu0 %222, %v220
      %v224 = vpop.permute.xlu0 %223
      %v226 = vadd.f32 %v218, %v224
      %v227 = vadd.f32 %v219, %v224
      %v228 = vmax.f32 %v226, 0.0
      %v229 = vmax.f32 %v227, 0.0
      %230 = vst [vmem:[%s208] sm:$0xff] %v228
      %231 = vst [vmem:[%s208 + $0x8] sm:$0xff] %v229
      %s232 = smul.u32 2, %s19
      %p233 = scmp.lt.s32.totalorder %s18, 1
      %s234 = scalar_select %p233, %s18, 1
      %p235 = scmp.lt.s32.totalorder %s232, 7
      %s236 = scalar_select %p235, %s232, 7
      %s237 = smul.addr %s234, 8
      %s238 = sadd.s32 %s236, %s237
      %s239 = smul.addr %s238, 8
      %s240 = scalar_lea.vmem %s3, %s239
      // Predicated region
      $region33: #{_lambda_.3} parent=31 // pred_check
        %p241 = pneg %p116
      $region34: #{_lambda_.3} parent=31 // pred_check_branch
        %243 = sbr.rel (%p241) target = $region36
      $region35: #{_lambda_.3} parent=31 // pred_region
        %s244 = smul.u32 2, %s19
      $region36: #{_lambda_.3} parent=31 // pred_fallthru
        _
    $region32: #{_lambda_.3} parent=5 // pred_fallthru
      _
    %p245 = scmp.le.s32.totalorder 2, %s9
    // Predicated region
    $region37: #{_lambda_.3} parent=5 // pred_check
      %p246 = pneg %p245
    $region38: #{_lambda_.3} parent=5 // pred_check_branch
      %248 = sbr.rel (%p246) target = $region40
    $region39: #{_lambda_.3} parent=5 // pred_region
      %s249 = ssub.s32 %s9, 2
      // Predicated region
      $region41: #{_lambda_.3} parent=39 // pred_check
        %p250 = pneg %p122
      $region42: #{_lambda_.3} parent=39 // pred_check_branch
        %252 = sbr.rel (%p250) target = $region44
      $region43: #{_lambda_.3} parent=39 // pred_region
        %s253 = smul.u32 2, %s21
        %p254 = scmp.lt.s32.totalorder %s20, 1
        %s255 = scalar_select %p254, %s20, 1
        %p256 = scmp.lt.s32.totalorder %s253, 7
        %s257 = scalar_select %p256, %s253, 7
        %s258 = smul.addr %s255, 8
        %s259 = sadd.s32 %s257, %s258
        %s260 = smul.addr %s259, 8
        %s261 = scalar_lea.vmem %s3, %s260
      $region44: #{_lambda_.3} parent=39 // pred_fallthru
        _
    $region40: #{_lambda_.3} parent=5 // pred_fallthru
      _
  $region6: #{_lambda_.3} parent=0 // loop_footer
    %s13 = sadd.s32 1, %s9
  $region7: #{_lambda_.3} parent=0 // loop_footer_branch
    %8 = sbr.rel target = $region3
  $region8: #{_lambda_.3} parent=0 // loop_exit
    _

// kernel: _lambda_.2
$region0: #{_lambda_.2}
  #allocation0 [shape = 'u32[]', space=smem, size = 0x4, offset = 0x4, fixed_abs, tag = 'smem constant byte address 0x4 - core index']
  #allocation1 [shape = 'u32[144,128]{1,0:T(1,128)}', space=vmem, size = 0x12000, scoped, tag = 'internal scratch']
  %s0 = inlined_call_operand.vmem [shape: f32[2,18,18,4], index: 0, kind: input, shape index: {}]
  %s1 = inlined_call_operand.vmem [shape: f32[8,36], index: 1, kind: input, shape index: {}]
  %s2 = inlined_call_operand.vmem [shape: f32[2,8,1024], index: 2, kind: output, shape index: {0}]
  %s3 = inlined_call_operand.vmem [shape: f32[2,8,1], index: 3, kind: output, shape index: {1}]
  %s4 = inlined_call_operand.vmem [shape: f32[2,8,1], index: 4, kind: output, shape index: {2}]
  %5 = xla_tuple %s2, %s3, %s4
  %s6 = sld [smem:[#allocation0]]
  $region61: #{_lambda_.2} parent=0
    _
  %s8 = ssub.s32 1, %s6
  %s9 = scalar_select 0, %s8, %s6
  loop: start=0, step=1, limit=10
  $region2: #{_lambda_.2} parent=0 // loop_pre_header
    _
  $region3: #{_lambda_.2} parent=0 // loop_header
    %s11 = sphi 0, %s15
    %p12 = scmp.ge.s32.totalorder %s11, 10
    %s18 = sphi 0, %s30
    %s19 = sphi 0, %s26
    %s20 = sphi 0, %s18
    %s21 = sphi 0, %s19
    %s22 = sphi 0, %s20
    %s23 = sphi 0, %s21
    %s33 = sphi 0, %s35
    %s36 = sphi 0, %s33
    %s37 = sphi 0, %s36
    %s53 = sphi 0, %s37
    %s57 = sphi 0, %s57
    %s59 = sphi 0, %s57
    %s60 = sphi 0, %s59
    %s74 = sphi 0, %s60
    %s82 = sphi 0, %s84
    %s85 = sphi 0, %s82
    %s86 = sphi 0, %s85
    %s102 = sphi 0, %s86
    %s108 = sphi 0, %s110
    %s111 = sphi 0, %s108
    %s112 = sphi 0, %s111
    %s128 = sphi 0, %s112
    %s134 = sphi 0, %s136
    %s137 = sphi 0, %s134
    %s138 = sphi 0, %s137
    %s154 = sphi 0, %s138
  $region4: #{_lambda_.2} parent=0 // loop_header_branch
    %14 = sbr.rel (%p12) target = $region8
  $region5: #{_lambda_.2} parent=0 // loop_body
    %s16 = ssub.s32 %s11, 1
    %s17 = ssub.s32 %s11, 2
    %s24 = sadd.s32 1, %s19
    %p25 = scmp.ge.s32.totalorder %s24, 4
    %s26 = scalar_select %p25, 0, %s24
    %s27 = sadd.s32 1, %s18
    %s28 = scalar_select %p25, %s27, %s18
    %p29 = scmp.ge.s32.totalorder %s28, 2
    %s30 = scalar_select %p29, 0, %s28
    %s31 = ssub.s32 %s18, %s30
    %p32 = scmp.eq.s32.totalorder %s31, 0
    %s34 = sadd.s32 %s33, 1
    %s35 = scalar_select %p32, %s33, %s34
    %p38 = pneg %p32
    %p39 = scmp.eq.s32.totalorder %s11, 7
    %p40 = por %p38, %p39
    %p41 = scmp.ne.s32.totalorder %s33, %s36
    %p42 = scmp.eq.s32.totalorder %s11, 0
    %p43 = por %p41, %p42
    %p44 = scmp.ne.s32.totalorder %s33, %s36
    %p45 = scmp.eq.s32.totalorder %s16, 7
    %p46 = por %p44, %p45
    %p47 = scmp.ne.s32.totalorder %s36, %s37
    %p48 = scmp.eq.s32.totalorder %s16, 0
    %p49 = por %p47, %p48
    %p50 = scmp.ne.s32.totalorder %s36, %s37
    %p51 = scmp.eq.s32.totalorder %s17, 7
    %p52 = por %p50, %p51
    %p54 = scmp.ne.s32.totalorder %s37, %s53
    %p55 = scmp.eq.s32.totalorder %s17, 0
    %p56 = por %p54, %p55
    %s58 = sadd.s32 %s57, 1
    %p61 = scmp.eq.s32.totalorder %s11, 7
    %p62 = scmp.ne.s32.totalorder %s57, %s59
    %p63 = scmp.eq.s32.totalorder %s11, 0
    %p64 = por %p62, %p63
    %p65 = scmp.ne.s32.totalorder %s57, %s59
    %p66 = scmp.eq.s32.totalorder %s16, 7
    %p67 = por %p65, %p66
    %p68 = scmp.ne.s32.totalorder %s59, %s60
    %p69 = scmp.eq.s32.totalorder %s16, 0
    %p70 = por %p68, %p69
    %p71 = scmp.ne.s32.totalorder %s59, %s60
    %p72 = scmp.eq.s32.totalorder %s17, 7
    %p73 = por %p71, %p72
    %p75 = scmp.ne.s32.totalorder %s60, %s74
    %p76 = scmp.eq.s32.totalorder %s17, 0
    %p77 = por %p75, %p76
    %s78 = ssub.s32 %s18, %s30
    %s79 = ssub.s32 %s19, %s26
    %s80 = sor.u32 %s78, %s79
    %p81 = scmp.eq.s32.totalorder %s80, 0
    %s83 = sadd.s32 %s82, 1
    %s84 = scalar_select %p81, %s82, %s83
    %p87 = pneg %p81
    %p88 = scmp.eq.s32.totalorder %s11, 7
    %p89 = por %p87, %p88
    %p90 = scmp.ne.s32.totalorder %s82, %s85
    %p91 = scmp.eq.s32.totalorder %s11, 0
    %p92 = por %p90, %p91
    %p93 = scmp.ne.s32.totalorder %s82, %s85
    %p94 = scmp.eq.s32.totalorder %s16, 7
    %p95 = por %p93, %p94
    %p96 = scmp.ne.s32.totalorder %s85, %s86
    %p97 = scmp.eq.s32.totalorder %s16, 0
    %p98 = por %p96, %p97
    %p99 = scmp.ne.s32.totalorder %s85, %s86
    %p100 = scmp.eq.s32.totalorder %s17, 7
    %p101 = por %p99, %p100
    %p103 = scmp.ne.s32.totalorder %s86, %s102
    %p104 = scmp.eq.s32.totalorder %s17, 0
    %p105 = por %p103, %p104
    %s106 = ssub.s32 %s18, %s30
    %p107 = scmp.eq.s32.totalorder %s106, 0
    %s109 = sadd.s32 %s108, 1
    %s110 = scalar_select %p107, %s108, %s109
    %p113 = pneg %p107
    %p114 = scmp.eq.s32.totalorder %s11, 7
    %p115 = por %p113, %p114
    %p116 = scmp.ne.s32.totalorder %s108, %s111
    %p117 = scmp.eq.s32.totalorder %s11, 0
    %p118 = por %p116, %p117
    %p119 = scmp.ne.s32.totalorder %s108, %s111
    %p120 = scmp.eq.s32.totalorder %s16, 7
    %p121 = por %p119, %p120
    %p122 = scmp.ne.s32.totalorder %s111, %s112
    %p123 = scmp.eq.s32.totalorder %s16, 0
    %p124 = por %p122, %p123
    %p125 = scmp.ne.s32.totalorder %s111, %s112
    %p126 = scmp.eq.s32.totalorder %s17, 7
    %p127 = por %p125, %p126
    %p129 = scmp.ne.s32.totalorder %s112, %s128
    %p130 = scmp.eq.s32.totalorder %s17, 0
    %p131 = por %p129, %p130
    %s132 = ssub.s32 %s18, %s30
    %p133 = scmp.eq.s32.totalorder %s132, 0
    %s135 = sadd.s32 %s134, 1
    %s136 = scalar_select %p133, %s134, %s135
    %p139 = pneg %p133
    %p140 = scmp.eq.s32.totalorder %s11, 7
    %p141 = por %p139, %p140
    %p142 = scmp.ne.s32.totalorder %s134, %s137
    %p143 = scmp.eq.s32.totalorder %s11, 0
    %p144 = por %p142, %p143
    %p145 = scmp.ne.s32.totalorder %s134, %s137
    %p146 = scmp.eq.s32.totalorder %s16, 7
    %p147 = por %p145, %p146
    %p148 = scmp.ne.s32.totalorder %s137, %s138
    %p149 = scmp.eq.s32.totalorder %s16, 0
    %p150 = por %p148, %p149
    %p151 = scmp.ne.s32.totalorder %s137, %s138
    %p152 = scmp.eq.s32.totalorder %s17, 7
    %p153 = por %p151, %p152
    %p155 = scmp.ne.s32.totalorder %s138, %s154
    %p156 = scmp.eq.s32.totalorder %s17, 0
    %p157 = por %p155, %p156
    %p158 = scmp.le.s32.totalorder 1, %s11
    %p159 = scmp.lt.s32.totalorder %s11, 9
    %p160 = pnand %p158, %p159
    %p161 = pneg %p160
    // Predicated region
    $region9: #{_lambda_.2} parent=5 // pred_check
      _
    $region10: #{_lambda_.2} parent=5 // pred_check_branch
      %163 = sbr.rel (%p160) target = $region12
    $region11: #{_lambda_.2} parent=5 // pred_region
      %s164 = ssub.s32 %s11, 1
      // Predicated region
      $region13: #{_lambda_.2} parent=11 // pred_check
        %p165 = pneg %p70
      $region14: #{_lambda_.2} parent=11 // pred_check_branch
        %167 = sbr.rel (%p165) target = $region16
      $region15: #{_lambda_.2} parent=11 // pred_region
        _
      $region16: #{_lambda_.2} parent=11 // pred_fallthru
        _
    $region12: #{_lambda_.2} parent=5 // pred_fallthru
      _
    %p168 = scmp.lt.s32.totalorder %s11, 8
    // Predicated region
    $region17: #{_lambda_.2} parent=5 // pred_check
      %p169 = pneg %p168
    $region18: #{_lambda_.2} parent=5 // pred_check_branch
      %171 = sbr.rel (%p169) target = $region20
    $region19: #{_lambda_.2} parent=5 // pred_region
      // Predicated region
      $region21: #{_lambda_.2} parent=19 // pred_check
        %p172 = pneg %p43
      $region22: #{_lambda_.2} parent=19 // pred_check_branch
        %174 = sbr.rel (%p172) target = $region24
      $region23: #{_lambda_.2} parent=19 // pred_region
        %p175 = scmp.lt.s32.totalorder %s18, 1
        %s176 = scalar_select %p175, %s18, 1
        %s177 = smul.addr %s176, 54
        %s178 = smul.addr %s177, 8
        %s179 = scalar_lea.vmem %s0, %s178
      $region24: #{_lambda_.2} parent=19 // pred_fallthru
        _
    $region20: #{_lambda_.2} parent=5 // pred_fallthru
      _
    %p180 = scmp.le.s32.totalorder 1, %s11
    %p181 = scmp.lt.s32.totalorder %s11, 9
    %p182 = pnand %p180, %p181
    %p183 = pneg %p182
    // Predicated region
    $region25: #{_lambda_.2} parent=5 // pred_check
      _
    $region26: #{_lambda_.2} parent=5 // pred_check_branch
      %185 = sbr.rel (%p182) target = $region28
    $region27: #{_lambda_.2} parent=5 // pred_region
      %s186 = ssub.s32 %s11, 1
      %p187 = scmp.lt.s32.totalorder %s20, 1
      %s188 = scalar_select %p187, %s20, 1
      %s189 = smul.addr %s188, 54
      %s190 = smul.addr %s189, 8
      %s191 = scalar_lea.vmem %s0, %s190
      %p192 = pneg %p49
      %p193 = pneg %p46
      %p194 = pneg %p70
      %p195 = pneg %p67
      %p196 = pneg %p98
      %p197 = pneg %p95
      %s198 = smul.u32 2, %s21
      %p199 = scmp.lt.s32.totalorder %s20, 1
      %s200 = scalar_select %p199, %s20, 1
      %p201 = scmp.lt.s32.totalorder %s198, 7
      %s202 = scalar_select %p201, %s198, 7
      %s203 = smul.addr %s200, 8
      %s204 = sadd.s32 %s202, %s203
      %s205 = smul.addr %s204, 8
      %s206 = scalar_lea.vmem %s2, %s205
      %p207 = pneg %p124
      %p208 = pneg %p121
      %p209 = scmp.lt.s32.totalorder %s20, 1
      %s210 = scalar_select %p209, %s20, 1
      %s211 = smul.addr %s210, 8
      %s212 = scalar_lea.vmem %s3, %s211
      %p213 = pneg %p150
      %p214 = pneg %p147
      %p215 = scmp.lt.s32.totalorder %s20, 1
      %s216 = scalar_select %p215, %s20, 1
      %s217 = smul.addr %s216, 8
      %s218 = scalar_lea.vmem %s4, %s217
      %p219 = scmp.lt.s32.totalorder %s20, 1
      %s220 = scalar_select %p219, %s20, 1
      %s221 = smul.addr %s220, 54
      %s222 = smul.addr %s221, 8
      %s223 = scalar_lea.vmem %s0, %s222
      %s224 = smul.u32 2, %s21
      %p225 = scmp.lt.s32.totalorder %s20, 1
      %s226 = scalar_select %p225, %s20, 1
      %p227 = scmp.lt.s32.totalorder %s224, 7
      %s228 = scalar_select %p227, %s224, 7
      %s229 = smul.addr %s226, 8
      %s230 = sadd.s32 %s228, %s229
      %s231 = smul.addr %s230, 8
      %s232 = scalar_lea.vmem %s2, %s231
      %s233 = smul.u32 2, %s21
      %p234 = scmp.lt.s32.totalorder %s20, 1
      %s235 = scalar_select %p234, %s20, 1
      %s236 = smul.addr %s235, 8
      %s237 = scalar_lea.vmem %s3, %s236
      %p238 = scmp.lt.s32.totalorder %s20, 1
      %s239 = scalar_select %p238, %s20, 1
      %s240 = smul.addr %s239, 8
      %s241 = scalar_lea.vmem %s4, %s240
      %s242 = smul.u32 %s21, 4
      %s243 = smul.u32 %s242, 24
      %s244 = scalar_lea.vmem %s223, %s243
      %v245 = vld [vmem:[%s244] sm:$0xff]
      %v246 = vld [vmem:[%s244 + $0x8] sm:$0xff]
      %v247 = vld [vmem:[%s244 + $0x10] sm:$0x3]
      %v248 = vld [vmem:[%s244 + $0x18] sm:$0xff]
      %v249 = vld [vmem:[%s244 + $0x20] sm:$0xff]
      %v250 = vld [vmem:[%s244 + $0x28] sm:$0x3]
      %v251 = vld [vmem:[%s244 + $0x30] sm:$0xff]
      %v252 = vld [vmem:[%s244 + $0x38] sm:$0xff]
      %v253 = vld [vmem:[%s244 + $0x40] sm:$0x3]
      %v254 = vld [vmem:[%s244 + $0x48] sm:$0xff]
      %v255 = vld [vmem:[%s244 + $0x50] sm:$0xff]
      %v256 = vld [vmem:[%s244 + $0x58] sm:$0x3]
      %v257 = vld [vmem:[%s244 + $0x60] sm:$0xff]
      %v258 = vld [vmem:[%s244 + $0x68] sm:$0xff]
      %v259 = vld [vmem:[%s244 + $0x70] sm:$0x3]
      %v260 = vld [vmem:[%s244 + $0x78] sm:$0xff]
      %v261 = vld [vmem:[%s244 + $0x80] sm:$0xff]
      %v262 = vld [vmem:[%s244 + $0x88] sm:$0x3]
      %v281 = vcombine.high %v245, %v245
      %v283 = vunpack.c.l.s4 1966171168
      %v284 = vunpack.c.0.s8 %v283
      %v285 = vlaneseq
      %v286 = vshrl.u32 %v285, 7
      %v287 = vsub.s32 %v284, %v286
      %v288 = vrot.slane %v245, %v287
      %v290 = vunpack.c.l.s4 1966171168
      %v291 = vunpack.c.0.s8 %v290
      %v292 = vlaneseq
      %v293 = vshrl.u32 %v292, 7
      %v294 = vsub.s32 %v291, %v293
      %v295 = vrot.slane %v281, %v294
      %v296 = vcombine.high %v288, %v288
      %v297 = vcombine.high %v295, %v295
      %v299 = vunpack.c.l.s4 1966171168
      %v300 = vunpack.c.0.s8 %v299
      %v301 = vlaneseq
      %v302 = vshrl.u32 %v301, 7
      %v303 = vsub.s32 %v300, %v302
      %v304 = vrot.slane %v288, %v303
      %v306 = vunpack.c.l.s4 1966171168
      %v307 = vunpack.c.0.s8 %v306
      %v308 = vlaneseq
      %v309 = vshrl.u32 %v308, 7
      %v310 = vsub.s32 %v307, %v309
      %v311 = vrot.slane %v295, %v310
      %v313 = vunpack.c.l.s4 1966171168
      %v314 = vunpack.c.0.s8 %v313
      %v315 = vlaneseq
      %v316 = vshrl.u32 %v315, 7
      %v317 = vsub.s32 %v314, %v316
      %v318 = vrot.slane %v296, %v317
      %v320 = vunpack.c.l.s4 1966171168
      %v321 = vunpack.c.0.s8 %v320
      %v322 = vlaneseq
      %v323 = vshrl.u32 %v322, 7
      %v324 = vsub.s32 %v321, %v323
      %v325 = vrot.slane %v297, %v324
      %v326 = vcombine.high %v304, %v304
      %v327 = vcombine.high %v311, %v311
      %v328 = vcombine.high %v318, %v318
      %v329 = vcombine.high %v325, %v325
      %v330 = vcombine.high %v246, %v246
      %v332 = vunpack.c.l.s4 1966171168
      %v333 = vunpack.c.0.s8 %v332
      %v334 = vlaneseq
      %v335 = vshrl.u32 %v334, 7
      %v336 = vsub.s32 %v333, %v335
      %v337 = vrot.slane %v246, %v336
      %v339 = vunpack.c.l.s4 1966171168
      %v340 = vunpack.c.0.s8 %v339
      %v341 = vlaneseq
      %v342 = vshrl.u32 %v341, 7
      %v343 = vsub.s32 %v340, %v342
      %v344 = vrot.slane %v330, %v343
      %v345 = vcombine.high %v337, %v337
      %v346 = vcombine.high %v344, %v344
      %v348 = vunpack.c.l.s4 1966171168
      %v349 = vunpack.c.0.s8 %v348
      %v350 = vlaneseq
      %v351 = vshrl.u32 %v350, 7
      %v352 = vsub.s32 %v349, %v351
      %v353 = vrot.slane %v337, %v352
      %v355 = vunpack.c.l.s4 1966171168
      %v356 = vunpack.c.0.s8 %v355
      %v357 = vlaneseq
      %v358 = vshrl.u32 %v357, 7
      %v359 = vsub.s32 %v356, %v358
      %v360 = vrot.slane %v344, %v359
      %v362 = vunpack.c.l.s4 1966171168
      %v363 = vunpack.c.0.s8 %v362
      %v364 = vlaneseq
      %v365 = vshrl.u32 %v364, 7
      %v366 = vsub.s32 %v363, %v365
      %v367 = vrot.slane %v345, %v366
      %v369 = vunpack.c.l.s4 1966171168
      %v370 = vunpack.c.0.s8 %v369
      %v371 = vlaneseq
      %v372 = vshrl.u32 %v371, 7
      %v373 = vsub.s32 %v370, %v372
      %v374 = vrot.slane %v346, %v373
      %v375 = vcombine.high %v353, %v353
      %v376 = vcombine.high %v360, %v360
      %v377 = vcombine.high %v367, %v367
      %v378 = vcombine.high %v374, %v374
      %v380 = vunpack.c.l.s4 1966171168
      %v381 = vunpack.c.0.s8 %v380
      %v382 = vlaneseq
      %v383 = vshrl.u32 %v382, 7
      %v384 = vsub.s32 %v381, %v383
      %v385 = vrot.slane %v247, %v384
      %v386 = vcombine.high %v385, %v385
      %v388 = vunpack.c.l.s4 1966171168
      %v389 = vunpack.c.0.s8 %v388
      %v390 = vlaneseq
      %v391 = vshrl.u32 %v390, 7
      %v392 = vsub.s32 %v389, %v391
      %v393 = vrot.slane %v385, %v392
      %v395 = vunpack.c.l.s4 1966171168
      %v396 = vunpack.c.0.s8 %v395
      %v397 = vlaneseq
      %v398 = vshrl.u32 %v397, 7
      %v399 = vsub.s32 %v396, %v398
      %v400 = vrot.slane %v386, %v399
      %v401 = vcombine.high %v248, %v248
      %v403 = vunpack.c.l.s4 1966171168
      %v404 = vunpack.c.0.s8 %v403
      %v405 = vlaneseq
      %v406 = vshrl.u32 %v405, 7
      %v407 = vsub.s32 %v404, %v406
      %v408 = vrot.slane %v248, %v407
      %v410 = vunpack.c.l.s4 1966171168
      %v411 = vunpack.c.0.s8 %v410
      %v412 = vlaneseq
      %v413 = vshrl.u32 %v412, 7
      %v414 = vsub.s32 %v411, %v413
      %v415 = vrot.slane %v401, %v414
      %v416 = vcombine.high %v408, %v408
      %v417 = vcombine.high %v415, %v415
      %v419 = vunpack.c.l.s4 1966171168
      %v420 = vunpack.c.0.s8 %v419
      %v421 = vlaneseq
      %v422 = vshrl.u32 %v421, 7
      %v423 = vsub.s32 %v420, %v422
      %v424 = vrot.slane %v408, %v423
      %v426 = vunpack.c.l.s4 1966171168
      %v427 = vunpack.c.0.s8 %v426
      %v428 = vlaneseq
      %v429 = vshrl.u32 %v428, 7
      %v430 = vsub.s32 %v427, %v429
      %v431 = vrot.slane %v415, %v430
      %v433 = vunpack.c.l.s4 1966171168
      %v434 = vunpack.c.0.s8 %v433
      %v435 = vlaneseq
      %v436 = vshrl.u32 %v435, 7
      %v437 = vsub.s32 %v434, %v436
      %v438 = vrot.slane %v416, %v437
      %v440 = vunpack.c.l.s4 1966171168
      %v441 = vunpack.c.0.s8 %v440
      %v442 = vlaneseq
      %v443 = vshrl.u32 %v442, 7
      %v444 = vsub.s32 %v441, %v443
      %v445 = vrot.slane %v417, %v444
      %v446 = vcombine.high %v424, %v424
      %v447 = vcombine.high %v431, %v431
      %v448 = vcombine.high %v438, %v438
      %v449 = vcombine.high %v445, %v445
      %v450 = vcombine.high %v249, %v249
      %v452 = vunpack.c.l.s4 1966171168
      %v453 = vunpack.c.0.s8 %v452
      %v454 = vlaneseq
      %v455 = vshrl.u32 %v454, 7
      %v456 = vsub.s32 %v453, %v455
      %v457 = vrot.slane %v249, %v456
      %v459 = vunpack.c.l.s4 1966171168
      %v460 = vunpack.c.0.s8 %v459
      %v461 = vlaneseq
      %v462 = vshrl.u32 %v461, 7
      %v463 = vsub.s32 %v460, %v462
      %v464 = vrot.slane %v450, %v463
      %v465 = vcombine.high %v457, %v457
      %v466 = vcombine.high %v464, %v464
      %v468 = vunpack.c.l.s4 1966171168
      %v469 = vunpack.c.0.s8 %v468
      %v470 = vlaneseq
      %v471 = vshrl.u32 %v470, 7
      %v472 = vsub.s32 %v469, %v471
      %v473 = vrot.slane %v457, %v472
      %v475 = vunpack.c.l.s4 1966171168
      %v476 = vunpack.c.0.s8 %v475
      %v477 = vlaneseq
      %v478 = vshrl.u32 %v477, 7
      %v479 = vsub.s32 %v476, %v478
      %v480 = vrot.slane %v464, %v479
      %v482 = vunpack.c.l.s4 1966171168
      %v483 = vunpack.c.0.s8 %v482
      %v484 = vlaneseq
      %v485 = vshrl.u32 %v484, 7
      %v486 = vsub.s32 %v483, %v485
      %v487 = vrot.slane %v465, %v486
      %v489 = vunpack.c.l.s4 1966171168
      %v490 = vunpack.c.0.s8 %v489
      %v491 = vlaneseq
      %v492 = vshrl.u32 %v491, 7
      %v493 = vsub.s32 %v490, %v492
      %v494 = vrot.slane %v466, %v493
      %v495 = vcombine.high %v473, %v473
      %v496 = vcombine.high %v480, %v480
      %v497 = vcombine.high %v487, %v487
      %v498 = vcombine.high %v494, %v494
      %v500 = vunpack.c.l.s4 1966171168
      %v501 = vunpack.c.0.s8 %v500
      %v502 = vlaneseq
      %v503 = vshrl.u32 %v502, 7
      %v504 = vsub.s32 %v501, %v503
      %v505 = vrot.slane %v250, %v504
      %v506 = vcombine.high %v505, %v505
      %v508 = vunpack.c.l.s4 1966171168
      %v509 = vunpack.c.0.s8 %v508
      %v510 = vlaneseq
      %v511 = vshrl.u32 %v510, 7
      %v512 = vsub.s32 %v509, %v511
      %v513 = vrot.slane %v505, %v512
      %v515 = vunpack.c.l.s4 1966171168
      %v516 = vunpack.c.0.s8 %v515
      %v517 = vlaneseq
      %v518 = vshrl.u32 %v517, 7
      %v519 = vsub.s32 %v516, %v518
      %v520 = vrot.slane %v506, %v519
      %v521 = vcombine.high %v251, %v251
      %v523 = vunpack.c.l.s4 1966171168
      %v524 = vunpack.c.0.s8 %v523
      %v525 = vlaneseq
      %v526 = vshrl.u32 %v525, 7
      %v527 = vsub.s32 %v524, %v526
      %v528 = vrot.slane %v251, %v527
      %v530 = vunpack.c.l.s4 1966171168
      %v531 = vunpack.c.0.s8 %v530
      %v532 = vlaneseq
      %v533 = vshrl.u32 %v532, 7
      %v534 = vsub.s32 %v531, %v533
      %v535 = vrot.slane %v521, %v534
      %v536 = vcombine.high %v528, %v528
      %v537 = vcombine.high %v535, %v535
      %v539 = vunpack.c.l.s4 1966171168
      %v540 = vunpack.c.0.s8 %v539
      %v541 = vlaneseq
      %v542 = vshrl.u32 %v541, 7
      %v543 = vsub.s32 %v540, %v542
      %v544 = vrot.slane %v528, %v543
      %v546 = vunpack.c.l.s4 1966171168
      %v547 = vunpack.c.0.s8 %v546
      %v548 = vlaneseq
      %v549 = vshrl.u32 %v548, 7
      %v550 = vsub.s32 %v547, %v549
      %v551 = vrot.slane %v535, %v550
      %v553 = vunpack.c.l.s4 1966171168
      %v554 = vunpack.c.0.s8 %v553
      %v555 = vlaneseq
      %v556 = vshrl.u32 %v555, 7
      %v557 = vsub.s32 %v554, %v556
      %v558 = vrot.slane %v536, %v557
      %v560 = vunpack.c.l.s4 1966171168
      %v561 = vunpack.c.0.s8 %v560
      %v562 = vlaneseq
      %v563 = vshrl.u32 %v562, 7
      %v564 = vsub.s32 %v561, %v563
      %v565 = vrot.slane %v537, %v564
      %v566 = vcombine.high %v544, %v544
      %v567 = vcombine.high %v551, %v551
      %v568 = vcombine.high %v558, %v558
      %v569 = vcombine.high %v565, %v565
      %v570 = vcombine.high %v252, %v252
      %v572 = vunpack.c.l.s4 1966171168
      %v573 = vunpack.c.0.s8 %v572
      %v574 = vlaneseq
      %v575 = vshrl.u32 %v574, 7
      %v576 = vsub.s32 %v573, %v575
      %v577 = vrot.slane %v252, %v576
      %v579 = vunpack.c.l.s4 1966171168
      %v580 = vunpack.c.0.s8 %v579
      %v581 = vlaneseq
      %v582 = vshrl.u32 %v581, 7
      %v583 = vsub.s32 %v580, %v582
      %v584 = vrot.slane %v570, %v583
      %v585 = vcombine.high %v577, %v577
      %v586 = vcombine.high %v584, %v584
      %v588 = vunpack.c.l.s4 1966171168
      %v589 = vunpack.c.0.s8 %v588
      %v590 = vlaneseq
      %v591 = vshrl.u32 %v590, 7
      %v592 = vsub.s32 %v589, %v591
      %v593 = vrot.slane %v577, %v592
      %v595 = vunpack.c.l.s4 1966171168
      %v596 = vunpack.c.0.s8 %v595
      %v597 = vlaneseq
      %v598 = vshrl.u32 %v597, 7
      %v599 = vsub.s32 %v596, %v598
      %v600 = vrot.slane %v584, %v599
      %v602 = vunpack.c.l.s4 1966171168
      %v603 = vunpack.c.0.s8 %v602
      %v604 = vlaneseq
      %v605 = vshrl.u32 %v604, 7
      %v606 = vsub.s32 %v603, %v605
      %v607 = vrot.slane %v585, %v606
      %v609 = vunpack.c.l.s4 1966171168
      %v610 = vunpack.c.0.s8 %v609
      %v611 = vlaneseq
      %v612 = vshrl.u32 %v611, 7
      %v613 = vsub.s32 %v610, %v612
      %v614 = vrot.slane %v586, %v613
      %v615 = vcombine.high %v593, %v593
      %v616 = vcombine.high %v600, %v600
      %v617 = vcombine.high %v607, %v607
      %v618 = vcombine.high %v614, %v614
      %v620 = vunpack.c.l.s4 1966171168
      %v621 = vunpack.c.0.s8 %v620
      %v622 = vlaneseq
      %v623 = vshrl.u32 %v622, 7
      %v624 = vsub.s32 %v621, %v623
      %v625 = vrot.slane %v253, %v624
      %v626 = vcombine.high %v625, %v625
      %v628 = vunpack.c.l.s4 1966171168
      %v629 = vunpack.c.0.s8 %v628
      %v630 = vlaneseq
      %v631 = vshrl.u32 %v630, 7
      %v632 = vsub.s32 %v629, %v631
      %v633 = vrot.slane %v625, %v632
      %v635 = vunpack.c.l.s4 1966171168
      %v636 = vunpack.c.0.s8 %v635
      %v637 = vlaneseq
      %v638 = vshrl.u32 %v637, 7
      %v639 = vsub.s32 %v636, %v638
      %v640 = vrot.slane %v626, %v639
      %v641 = vcombine.high %v254, %v254
      %v643 = vunpack.c.l.s4 1966171168
      %v644 = vunpack.c.0.s8 %v643
      %v645 = vlaneseq
      %v646 = vshrl.u32 %v645, 7
      %v647 = vsub.s32 %v644, %v646
      %v648 = vrot.slane %v254, %v647
      %v650 = vunpack.c.l.s4 1966171168
      %v651 = vunpack.c.0.s8 %v650
      %v652 = vlaneseq
      %v653 = vshrl.u32 %v652, 7
      %v654 = vsub.s32 %v651, %v653
      %v655 = vrot.slane %v641, %v654
      %v656 = vcombine.high %v648, %v648
      %v657 = vcombine.high %v655, %v655
      %v659 = vunpack.c.l.s4 1966171168
      %v660 = vunpack.c.0.s8 %v659
      %v661 = vlaneseq
      %v662 = vshrl.u32 %v661, 7
      %v663 = vsub.s32 %v660, %v662
      %v664 = vrot.slane %v648, %v663
      %v666 = vunpack.c.l.s4 1966171168
      %v667 = vunpack.c.0.s8 %v666
      %v668 = vlaneseq
      %v669 = vshrl.u32 %v668, 7
      %v670 = vsub.s32 %v667, %v669
      %v671 = vrot.slane %v655, %v670
      %v673 = vunpack.c.l.s4 1966171168
      %v674 = vunpack.c.0.s8 %v673
      %v675 = vlaneseq
      %v676 = vshrl.u32 %v675, 7
      %v677 = vsub.s32 %v674, %v676
      %v678 = vrot.slane %v656, %v677
      %v680 = vunpack.c.l.s4 1966171168
      %v681 = vunpack.c.0.s8 %v680
      %v682 = vlaneseq
      %v683 = vshrl.u32 %v682, 7
      %v684 = vsub.s32 %v681, %v683
      %v685 = vrot.slane %v657, %v684
      %v686 = vcombine.high %v664, %v664
      %v687 = vcombine.high %v671, %v671
      %v688 = vcombine.high %v678, %v678
      %v689 = vcombine.high %v685, %v685
      %v690 = vcombine.high %v255, %v255
      %v692 = vunpack.c.l.s4 1966171168
      %v693 = vunpack.c.0.s8 %v692
      %v694 = vlaneseq
      %v695 = vshrl.u32 %v694, 7
      %v696 = vsub.s32 %v693, %v695
      %v697 = vrot.slane %v255, %v696
      %v699 = vunpack.c.l.s4 1966171168
      %v700 = vunpack.c.0.s8 %v699
      %v701 = vlaneseq
      %v702 = vshrl.u32 %v701, 7
      %v703 = vsub.s32 %v700, %v702
      %v704 = vrot.slane %v690, %v703
      %v705 = vcombine.high %v697, %v697
      %v706 = vcombine.high %v704, %v704
      %v708 = vunpack.c.l.s4 1966171168
      %v709 = vunpack.c.0.s8 %v708
      %v710 = vlaneseq
      %v711 = vshrl.u32 %v710, 7
      %v712 = vsub.s32 %v709, %v711
      %v713 = vrot.slane %v697, %v712
      %v715 = vunpack.c.l.s4 1966171168
      %v716 = vunpack.c.0.s8 %v715
      %v717 = vlaneseq
      %v718 = vshrl.u32 %v717, 7
      %v719 = vsub.s32 %v716, %v718
      %v720 = vrot.slane %v704, %v719
      %v722 = vunpack.c.l.s4 1966171168
      %v723 = vunpack.c.0.s8 %v722
      %v724 = vlaneseq
      %v725 = vshrl.u32 %v724, 7
      %v726 = vsub.s32 %v723, %v725
      %v727 = vrot.slane %v705, %v726
      %v729 = vunpack.c.l.s4 1966171168
      %v730 = vunpack.c.0.s8 %v729
      %v731 = vlaneseq
      %v732 = vshrl.u32 %v731, 7
      %v733 = vsub.s32 %v730, %v732
      %v734 = vrot.slane %v706, %v733
      %v735 = vcombine.high %v713, %v713
      %v736 = vcombine.high %v720, %v720
      %v737 = vcombine.high %v727, %v727
      %v738 = vcombine.high %v734, %v734
      %v740 = vunpack.c.l.s4 1966171168
      %v741 = vunpack.c.0.s8 %v740
      %v742 = vlaneseq
      %v743 = vshrl.u32 %v742, 7
      %v744 = vsub.s32 %v741, %v743
      %v745 = vrot.slane %v256, %v744
      %v746 = vcombine.high %v745, %v745
      %v748 = vunpack.c.l.s4 1966171168
      %v749 = vunpack.c.0.s8 %v748
      %v750 = vlaneseq
      %v751 = vshrl.u32 %v750, 7
      %v752 = vsub.s32 %v749, %v751
      %v753 = vrot.slane %v745, %v752
      %v755 = vunpack.c.l.s4 1966171168
      %v756 = vunpack.c.0.s8 %v755
      %v757 = vlaneseq
      %v758 = vshrl.u32 %v757, 7
      %v759 = vsub.s32 %v756, %v758
      %v760 = vrot.slane %v746, %v759
      %v761 = vcombine.high %v257, %v257
      %v763 = vunpack.c.l.s4 1966171168
      %v764 = vunpack.c.0.s8 %v763
      %v765 = vlaneseq
      %v766 = vshrl.u32 %v765, 7
      %v767 = vsub.s32 %v764, %v766
      %v768 = vrot.slane %v257, %v767
      %v770 = vunpack.c.l.s4 1966171168
      %v771 = vunpack.c.0.s8 %v770
      %v772 = vlaneseq
      %v773 = vshrl.u32 %v772, 7
      %v774 = vsub.s32 %v771, %v773
      %v775 = vrot.slane %v761, %v774
      %v776 = vcombine.high %v768, %v768
      %v777 = vcombine.high %v775, %v775
      %v779 = vunpack.c.l.s4 1966171168
      %v780 = vunpack.c.0.s8 %v779
      %v781 = vlaneseq
      %v782 = vshrl.u32 %v781, 7
      %v783 = vsub.s32 %v780, %v782
      %v784 = vrot.slane %v768, %v783
      %v786 = vunpack.c.l.s4 1966171168
      %v787 = vunpack.c.0.s8 %v786
      %v788 = vlaneseq
      %v789 = vshrl.u32 %v788, 7
      %v790 = vsub.s32 %v787, %v789
      %v791 = vrot.slane %v775, %v790
      %v793 = vunpack.c.l.s4 1966171168
      %v794 = vunpack.c.0.s8 %v793
      %v795 = vlaneseq
      %v796 = vshrl.u32 %v795, 7
      %v797 = vsub.s32 %v794, %v796
      %v798 = vrot.slane %v776, %v797
      %v800 = vunpack.c.l.s4 1966171168
      %v801 = vunpack.c.0.s8 %v800
      %v802 = vlaneseq
      %v803 = vshrl.u32 %v802, 7
      %v804 = vsub.s32 %v801, %v803
      %v805 = vrot.slane %v777, %v804
      %v806 = vcombine.high %v784, %v784
      %v807 = vcombine.high %v791, %v791
      %v808 = vcombine.high %v798, %v798
      %v809 = vcombine.high %v805, %v805
      %v810 = vcombine.high %v258, %v258
      %v812 = vunpack.c.l.s4 1966171168
      %v813 = vunpack.c.0.s8 %v812
      %v814 = vlaneseq
      %v815 = vshrl.u32 %v814, 7
      %v816 = vsub.s32 %v813, %v815
      %v817 = vrot.slane %v258, %v816
      %v819 = vunpack.c.l.s4 1966171168
      %v820 = vunpack.c.0.s8 %v819
      %v821 = vlaneseq
      %v822 = vshrl.u32 %v821, 7
      %v823 = vsub.s32 %v820, %v822
      %v824 = vrot.slane %v810, %v823
      %v825 = vcombine.high %v817, %v817
      %v826 = vcombine.high %v824, %v824
      %v828 = vunpack.c.l.s4 1966171168
      %v829 = vunpack.c.0.s8 %v828
      %v830 = vlaneseq
      %v831 = vshrl.u32 %v830, 7
      %v832 = vsub.s32 %v829, %v831
      %v833 = vrot.slane %v817, %v832
      %v835 = vunpack.c.l.s4 1966171168
      %v836 = vunpack.c.0.s8 %v835
      %v837 = vlaneseq
      %v838 = vshrl.u32 %v837, 7
      %v839 = vsub.s32 %v836, %v838
      %v840 = vrot.slane %v824, %v839
      %v842 = vunpack.c.l.s4 1966171168
      %v843 = vunpack.c.0.s8 %v842
      %v844 = vlaneseq
      %v845 = vshrl.u32 %v844, 7
      %v846 = vsub.s32 %v843, %v845
      %v847 = vrot.slane %v825, %v846
      %v849 = vunpack.c.l.s4 1966171168
      %v850 = vunpack.c.0.s8 %v849
      %v851 = vlaneseq
      %v852 = vshrl.u32 %v851, 7
      %v853 = vsub.s32 %v850, %v852
      %v854 = vrot.slane %v826, %v853
      %v855 = vcombine.high %v833, %v833
      %v856 = vcombine.high %v840, %v840
      %v857 = vcombine.high %v847, %v847
      %v858 = vcombine.high %v854, %v854
      %v860 = vunpack.c.l.s4 1966171168
      %v861 = vunpack.c.0.s8 %v860
      %v862 = vlaneseq
      %v863 = vshrl.u32 %v862, 7
      %v864 = vsub.s32 %v861, %v863
      %v865 = vrot.slane %v259, %v864
      %v866 = vcombine.high %v865, %v865
      %v868 = vunpack.c.l.s4 1966171168
      %v869 = vunpack.c.0.s8 %v868
      %v870 = vlaneseq
      %v871 = vshrl.u32 %v870, 7
      %v872 = vsub.s32 %v869, %v871
      %v873 = vrot.slane %v865, %v872
      %v875 = vunpack.c.l.s4 1966171168
      %v876 = vunpack.c.0.s8 %v875
      %v877 = vlaneseq
      %v878 = vshrl.u32 %v877, 7
      %v879 = vsub.s32 %v876, %v878
      %v880 = vrot.slane %v866, %v879
      %v881 = vcombine.high %v260, %v260
      %v883 = vunpack.c.l.s4 1966171168
      %v884 = vunpack.c.0.s8 %v883
      %v885 = vlaneseq
      %v886 = vshrl.u32 %v885, 7
      %v887 = vsub.s32 %v884, %v886
      %v888 = vrot.slane %v260, %v887
      %v890 = vunpack.c.l.s4 1966171168
      %v891 = vunpack.c.0.s8 %v890
      %v892 = vlaneseq
      %v893 = vshrl.u32 %v892, 7
      %v894 = vsub.s32 %v891, %v893
      %v895 = vrot.slane %v881, %v894
      %v896 = vcombine.high %v888, %v888
      %v897 = vcombine.high %v895, %v895
      %v899 = vunpack.c.l.s4 1966171168
      %v900 = vunpack.c.0.s8 %v899
      %v901 = vlaneseq
      %v902 = vshrl.u32 %v901, 7
      %v903 = vsub.s32 %v900, %v902
      %v904 = vrot.slane %v888, %v903
      %v906 = vunpack.c.l.s4 1966171168
      %v907 = vunpack.c.0.s8 %v906
      %v908 = vlaneseq
      %v909 = vshrl.u32 %v908, 7
      %v910 = vsub.s32 %v907, %v909
      %v911 = vrot.slane %v895, %v910
      %v913 = vunpack.c.l.s4 1966171168
      %v914 = vunpack.c.0.s8 %v913
      %v915 = vlaneseq
      %v916 = vshrl.u32 %v915, 7
      %v917 = vsub.s32 %v914, %v916
      %v918 = vrot.slane %v896, %v917
      %v920 = vunpack.c.l.s4 1966171168
      %v921 = vunpack.c.0.s8 %v920
      %v922 = vlaneseq
      %v923 = vshrl.u32 %v922, 7
      %v924 = vsub.s32 %v921, %v923
      %v925 = vrot.slane %v897, %v924
      %v926 = vcombine.high %v904, %v904
      %v927 = vcombine.high %v911, %v911
      %v928 = vcombine.high %v918, %v918
      %v929 = vcombine.high %v925, %v925
      %v930 = vcombine.high %v261, %v261
      %v932 = vunpack.c.l.s4 1966171168
      %v933 = vunpack.c.0.s8 %v932
      %v934 = vlaneseq
      %v935 = vshrl.u32 %v934, 7
      %v936 = vsub.s32 %v933, %v935
      %v937 = vrot.slane %v261, %v936
      %v939 = vunpack.c.l.s4 1966171168
      %v940 = vunpack.c.0.s8 %v939
      %v941 = vlaneseq
      %v942 = vshrl.u32 %v941, 7
      %v943 = vsub.s32 %v940, %v942
      %v944 = vrot.slane %v930, %v943
      %v945 = vcombine.high %v937, %v937
      %v946 = vcombine.high %v944, %v944
      %v948 = vunpack.c.l.s4 1966171168
      %v949 = vunpack.c.0.s8 %v948
      %v950 = vlaneseq
      %v951 = vshrl.u32 %v950, 7
      %v952 = vsub.s32 %v949, %v951
      %v953 = vrot.slane %v937, %v952
      %v955 = vunpack.c.l.s4 1966171168
      %v956 = vunpack.c.0.s8 %v955
      %v957 = vlaneseq
      %v958 = vshrl.u32 %v957, 7
      %v959 = vsub.s32 %v956, %v958
      %v960 = vrot.slane %v944, %v959
      %v962 = vunpack.c.l.s4 1966171168
      %v963 = vunpack.c.0.s8 %v962
      %v964 = vlaneseq
      %v965 = vshrl.u32 %v964, 7
      %v966 = vsub.s32 %v963, %v965
      %v967 = vrot.slane %v945, %v966
      %v969 = vunpack.c.l.s4 1966171168
      %v970 = vunpack.c.0.s8 %v969
      %v971 = vlaneseq
      %v972 = vshrl.u32 %v971, 7
      %v973 = vsub.s32 %v970, %v972
      %v974 = vrot.slane %v946, %v973
      %v975 = vcombine.high %v953, %v953
      %v976 = vcombine.high %v960, %v960
      %v977 = vcombine.high %v967, %v967
      %v978 = vcombine.high %v974, %v974
      %v980 = vunpack.c.l.s4 1966171168
      %v981 = vunpack.c.0.s8 %v980
      %v982 = vlaneseq
      %v983 = vshrl.u32 %v982, 7
      %v984 = vsub.s32 %v981, %v983
      %v985 = vrot.slane %v262, %v984
      %v986 = vcombine.high %v985, %v985
      %v988 = vunpack.c.l.s4 1966171168
      %v989 = vunpack.c.0.s8 %v988
      %v990 = vlaneseq
      %v991 = vshrl.u32 %v990, 7
      %v992 = vsub.s32 %v989, %v991
      %v993 = vrot.slane %v985, %v992
      %v995 = vunpack.c.l.s4 1966171168
      %v996 = vunpack.c.0.s8 %v995
      %v997 = vlaneseq
      %v998 = vshrl.u32 %v997, 7
      %v999 = vsub.s32 %v996, %v998
      %v1000 = vrot.slane %v986, %v999
      %v1001 = vlaneseq
      %v1002 = vshrl.u32 %v1001, 7
      %v1003 = vsub.s32 0, %v1002
      %v1004 = vrot.slane %v304, %v1003
      %v1005 = vlaneseq
      %v1006 = vshrl.u32 %v1005, 7
      %v1007 = vsub.s32 0, %v1006
      %v1008 = vrot.slane %v318, %v1007
      %v1009 = vlaneseq
      %v1010 = vshrl.u32 %v1009, 7
      %v1011 = vsub.s32 0, %v1010
      %v1012 = vrot.slane %v326, %v1011
      %v1013 = vlaneseq
      %v1014 = vshrl.u32 %v1013, 7
      %v1015 = vsub.s32 0, %v1014
      %v1016 = vrot.slane %v328, %v1015
      %v1017 = vlaneseq
      %v1018 = vshrl.u32 %v1017, 7
      %v1019 = vsub.s32 0, %v1018
      %v1020 = vrot.slane %v311, %v1019
      %v1021 = vlaneseq
      %v1022 = vshrl.u32 %v1021, 7
      %v1023 = vsub.s32 0, %v1022
      %v1024 = vrot.slane %v325, %v1023
      %v1025 = vlaneseq
      %v1026 = vshrl.u32 %v1025, 7
      %v1027 = vsub.s32 0, %v1026
      %v1028 = vrot.slane %v327, %v1027
      %v1029 = vlaneseq
      %v1030 = vshrl.u32 %v1029, 7
      %v1031 = vsub.s32 0, %v1030
      %v1032 = vrot.slane %v329, %v1031
      %v1033 = vlaneseq
      %v1034 = vshrl.u32 %v1033, 7
      %v1035 = vsub.s32 0, %v1034
      %v1036 = vrot.slane %v353, %v1035
      %v1037 = vlaneseq
      %v1038 = vshrl.u32 %v1037, 7
      %v1039 = vsub.s32 0, %v1038
      %v1040 = vrot.slane %v367, %v1039
      %v1041 = vlaneseq
      %v1042 = vshrl.u32 %v1041, 7
      %v1043 = vsub.s32 0, %v1042
      %v1044 = vrot.slane %v375, %v1043
      %v1045 = vlaneseq
      %v1046 = vshrl.u32 %v1045, 7
      %v1047 = vsub.s32 0, %v1046
      %v1048 = vrot.slane %v377, %v1047
      %v1049 = vlaneseq
      %v1050 = vshrl.u32 %v1049, 7
      %v1051 = vsub.s32 0, %v1050
      %v1052 = vrot.slane %v360, %v1051
      %v1053 = vlaneseq
      %v1054 = vshrl.u32 %v1053, 7
      %v1055 = vsub.s32 0, %v1054
      %v1056 = vrot.slane %v374, %v1055
      %v1057 = vlaneseq
      %v1058 = vshrl.u32 %v1057, 7
      %v1059 = vsub.s32 0, %v1058
      %v1060 = vrot.slane %v376, %v1059
      %v1061 = vlaneseq
      %v1062 = vshrl.u32 %v1061, 7
      %v1063 = vsub.s32 0, %v1062
      %v1064 = vrot.slane %v378, %v1063
      %v1065 = vlaneseq
      %v1066 = vshrl.u32 %v1065, 7
      %v1067 = vsub.s32 0, %v1066
      %v1068 = vrot.slane %v393, %v1067
      %v1069 = vlaneseq
      %v1070 = vshrl.u32 %v1069, 7
      %v1071 = vsub.s32 0, %v1070
      %v1072 = vrot.slane %v400, %v1071
      %v1073 = vlaneseq
      %v1074 = vshrl.u32 %v1073, 7
      %v1075 = vsub.s32 0, %v1074
      %v1076 = vrot.slane %v424, %v1075
      %v1077 = vlaneseq
      %v1078 = vshrl.u32 %v1077, 7
      %v1079 = vsub.s32 0, %v1078
      %v1080 = vrot.slane %v438, %v1079
      %v1081 = vlaneseq
      %v1082 = vshrl.u32 %v1081, 7
      %v1083 = vsub.s32 0, %v1082
      %v1084 = vrot.slane %v446, %v1083
      %v1085 = vlaneseq
      %v1086 = vshrl.u32 %v1085, 7
      %v1087 = vsub.s32 0, %v1086
      %v1088 = vrot.slane %v448, %v1087
      %v1089 = vlaneseq
      %v1090 = vshrl.u32 %v1089, 7
      %v1091 = vsub.s32 0, %v1090
      %v1092 = vrot.slane %v431, %v1091
      %v1093 = vlaneseq
      %v1094 = vshrl.u32 %v1093, 7
      %v1095 = vsub.s32 0, %v1094
      %v1096 = vrot.slane %v445, %v1095
      %v1097 = vlaneseq
      %v1098 = vshrl.u32 %v1097, 7
      %v1099 = vsub.s32 0, %v1098
      %v1100 = vrot.slane %v447, %v1099
      %v1101 = vlaneseq
      %v1102 = vshrl.u32 %v1101, 7
      %v1103 = vsub.s32 0, %v1102
      %v1104 = vrot.slane %v449, %v1103
      %v1105 = vlaneseq
      %v1106 = vshrl.u32 %v1105, 7
      %v1107 = vsub.s32 0, %v1106
      %v1108 = vrot.slane %v473, %v1107
      %v1109 = vlaneseq
      %v1110 = vshrl.u32 %v1109, 7
      %v1111 = vsub.s32 0, %v1110
      %v1112 = vrot.slane %v487, %v1111
      %v1113 = vlaneseq
      %v1114 = vshrl.u32 %v1113, 7
      %v1115 = vsub.s32 0, %v1114
      %v1116 = vrot.slane %v495, %v1115
      %v1117 = vlaneseq
      %v1118 = vshrl.u32 %v1117, 7
      %v1119 = vsub.s32 0, %v1118
      %v1120 = vrot.slane %v497, %v1119
      %v1121 = vlaneseq
      %v1122 = vshrl.u32 %v1121, 7
      %v1123 = vsub.s32 0, %v1122
      %v1124 = vrot.slane %v480, %v1123
      %v1125 = vlaneseq
      %v1126 = vshrl.u32 %v1125, 7
      %v1127 = vsub.s32 0, %v1126
      %v1128 = vrot.slane %v494, %v1127
      %v1129 = vlaneseq
      %v1130 = vshrl.u32 %v1129, 7
      %v1131 = vsub.s32 0, %v1130
      %v1132 = vrot.slane %v496, %v1131
      %v1133 = vlaneseq
      %v1134 = vshrl.u32 %v1133, 7
      %v1135 = vsub.s32 0, %v1134
      %v1136 = vrot.slane %v498, %v1135
      %v1137 = vlaneseq
      %v1138 = vshrl.u32 %v1137, 7
      %v1139 = vsub.s32 0, %v1138
      %v1140 = vrot.slane %v513, %v1139
      %v1141 = vlaneseq
      %v1142 = vshrl.u32 %v1141, 7
      %v1143 = vsub.s32 0, %v1142
      %v1144 = vrot.slane %v520, %v1143
      %v1145 = vlaneseq
      %v1146 = vshrl.u32 %v1145, 7
      %v1147 = vsub.s32 0, %v1146
      %v1148 = vrot.slane %v544, %v1147
      %v1149 = vlaneseq
      %v1150 = vshrl.u32 %v1149, 7
      %v1151 = vsub.s32 0, %v1150
      %v1152 = vrot.slane %v558, %v1151
      %v1153 = vlaneseq
      %v1154 = vshrl.u32 %v1153, 7
      %v1155 = vsub.s32 0, %v1154
      %v1156 = vrot.slane %v566, %v1155
      %v1157 = vlaneseq
      %v1158 = vshrl.u32 %v1157, 7
      %v1159 = vsub.s32 0, %v1158
      %v1160 = vrot.slane %v568, %v1159
      %v1161 = vlaneseq
      %v1162 = vshrl.u32 %v1161, 7
      %v1163 = vsub.s32 0, %v1162
      %v1164 = vrot.slane %v551, %v1163
      %v1165 = vlaneseq
      %v1166 = vshrl.u32 %v1165, 7
      %v1167 = vsub.s32 0, %v1166
      %v1168 = vrot.slane %v565, %v1167
      %v1169 = vlaneseq
      %v1170 = vshrl.u32 %v1169, 7
      %v1171 = vsub.s32 0, %v1170
      %v1172 = vrot.slane %v567, %v1171
      %v1173 = vlaneseq
      %v1174 = vshrl.u32 %v1173, 7
      %v1175 = vsub.s32 0, %v1174
      %v1176 = vrot.slane %v569, %v1175
      %v1177 = vlaneseq
      %v1178 = vshrl.u32 %v1177, 7
      %v1179 = vsub.s32 0, %v1178
      %v1180 = vrot.slane %v593, %v1179
      %v1181 = vlaneseq
      %v1182 = vshrl.u32 %v1181, 7
      %v1183 = vsub.s32 0, %v1182
      %v1184 = vrot.slane %v607, %v1183
      %v1185 = vlaneseq
      %v1186 = vshrl.u32 %v1185, 7
      %v1187 = vsub.s32 0, %v1186
      %v1188 = vrot.slane %v615, %v1187
      %v1189 = vlaneseq
      %v1190 = vshrl.u32 %v1189, 7
      %v1191 = vsub.s32 0, %v1190
      %v1192 = vrot.slane %v617, %v1191
      %v1193 = vlaneseq
      %v1194 = vshrl.u32 %v1193, 7
      %v1195 = vsub.s32 0, %v1194
      %v1196 = vrot.slane %v600, %v1195
      %v1197 = vlaneseq
      %v1198 = vshrl.u32 %v1197, 7
      %v1199 = vsub.s32 0, %v1198
      %v1200 = vrot.slane %v614, %v1199
      %v1201 = vlaneseq
      %v1202 = vshrl.u32 %v1201, 7
      %v1203 = vsub.s32 0, %v1202
      %v1204 = vrot.slane %v616, %v1203
      %v1205 = vlaneseq
      %v1206 = vshrl.u32 %v1205, 7
      %v1207 = vsub.s32 0, %v1206
      %v1208 = vrot.slane %v618, %v1207
      %v1209 = vlaneseq
      %v1210 = vshrl.u32 %v1209, 7
      %v1211 = vsub.s32 0, %v1210
      %v1212 = vrot.slane %v633, %v1211
      %v1213 = vlaneseq
      %v1214 = vshrl.u32 %v1213, 7
      %v1215 = vsub.s32 0, %v1214
      %v1216 = vrot.slane %v640, %v1215
      %v1217 = vlaneseq
      %v1218 = vshrl.u32 %v1217, 7
      %v1219 = vsub.s32 0, %v1218
      %v1220 = vrot.slane %v664, %v1219
      %v1221 = vlaneseq
      %v1222 = vshrl.u32 %v1221, 7
      %v1223 = vsub.s32 0, %v1222
      %v1224 = vrot.slane %v678, %v1223
      %v1225 = vlaneseq
      %v1226 = vshrl.u32 %v1225, 7
      %v1227 = vsub.s32 0, %v1226
      %v1228 = vrot.slane %v686, %v1227
      %v1229 = vlaneseq
      %v1230 = vshrl.u32 %v1229, 7
      %v1231 = vsub.s32 0, %v1230
      %v1232 = vrot.slane %v688, %v1231
      %v1233 = vlaneseq
      %v1234 = vshrl.u32 %v1233, 7
      %v1235 = vsub.s32 0, %v1234
      %v1236 = vrot.slane %v671, %v1235
      %v1237 = vlaneseq
      %v1238 = vshrl.u32 %v1237, 7
      %v1239 = vsub.s32 0, %v1238
      %v1240 = vrot.slane %v685, %v1239
      %v1241 = vlaneseq
      %v1242 = vshrl.u32 %v1241, 7
      %v1243 = vsub.s32 0, %v1242
      %v1244 = vrot.slane %v687, %v1243
      %v1245 = vlaneseq
      %v1246 = vshrl.u32 %v1245, 7
      %v1247 = vsub.s32 0, %v1246
      %v1248 = vrot.slane %v689, %v1247
      %v1249 = vlaneseq
      %v1250 = vshrl.u32 %v1249, 7
      %v1251 = vsub.s32 0, %v1250
      %v1252 = vrot.slane %v713, %v1251
      %v1253 = vlaneseq
      %v1254 = vshrl.u32 %v1253, 7
      %v1255 = vsub.s32 0, %v1254
      %v1256 = vrot.slane %v727, %v1255
      %v1257 = vlaneseq
      %v1258 = vshrl.u32 %v1257, 7
      %v1259 = vsub.s32 0, %v1258
      %v1260 = vrot.slane %v735, %v1259
      %v1261 = vlaneseq
      %v1262 = vshrl.u32 %v1261, 7
      %v1263 = vsub.s32 0, %v1262
      %v1264 = vrot.slane %v737, %v1263
      %v1265 = vlaneseq
      %v1266 = vshrl.u32 %v1265, 7
      %v1267 = vsub.s32 0, %v1266
      %v1268 = vrot.slane %v720, %v1267
      %v1269 = vlaneseq
      %v1270 = vshrl.u32 %v1269, 7
      %v1271 = vsub.s32 0, %v1270
      %v1272 = vrot.slane %v734, %v1271
      %v1273 = vlaneseq
      %v1274 = vshrl.u32 %v1273, 7
      %v1275 = vsub.s32 0, %v1274
      %v1276 = vrot.slane %v736, %v1275
      %v1277 = vlaneseq
      %v1278 = vshrl.u32 %v1277, 7
      %v1279 = vsub.s32 0, %v1278
      %v1280 = vrot.slane %v738, %v1279
      %v1281 = vlaneseq
      %v1282 = vshrl.u32 %v1281, 7
      %v1283 = vsub.s32 0, %v1282
      %v1284 = vrot.slane %v753, %v1283
      %v1285 = vlaneseq
      %v1286 = vshrl.u32 %v1285, 7
      %v1287 = vsub.s32 0, %v1286
      %v1288 = vrot.slane %v760, %v1287
      %v1289 = vlaneseq
      %v1290 = vshrl.u32 %v1289, 7
      %v1291 = vsub.s32 0, %v1290
      %v1292 = vrot.slane %v784, %v1291
      %v1293 = vlaneseq
      %v1294 = vshrl.u32 %v1293, 7
      %v1295 = vsub.s32 0, %v1294
      %v1296 = vrot.slane %v798, %v1295
      %v1297 = vlaneseq
      %v1298 = vshrl.u32 %v1297, 7
      %v1299 = vsub.s32 0, %v1298
      %v1300 = vrot.slane %v806, %v1299
      %v1301 = vlaneseq
      %v1302 = vshrl.u32 %v1301, 7
      %v1303 = vsub.s32 0, %v1302
      %v1304 = vrot.slane %v808, %v1303
      %v1305 = vlaneseq
      %v1306 = vshrl.u32 %v1305, 7
      %v1307 = vsub.s32 0, %v1306
      %v1308 = vrot.slane %v791, %v1307
      %v1309 = vlaneseq
      %v1310 = vshrl.u32 %v1309, 7
      %v1311 = vsub.s32 0, %v1310
      %v1312 = vrot.slane %v805, %v1311
      %v1313 = vlaneseq
      %v1314 = vshrl.u32 %v1313, 7
      %v1315 = vsub.s32 0, %v1314
      %v1316 = vrot.slane %v807, %v1315
      %v1317 = vlaneseq
      %v1318 = vshrl.u32 %v1317, 7
      %v1319 = vsub.s32 0, %v1318
      %v1320 = vrot.slane %v809, %v1319
      %v1321 = vlaneseq
      %v1322 = vshrl.u32 %v1321, 7
      %v1323 = vsub.s32 0, %v1322
      %v1324 = vrot.slane %v833, %v1323
      %v1325 = vlaneseq
      %v1326 = vshrl.u32 %v1325, 7
      %v1327 = vsub.s32 0, %v1326
      %v1328 = vrot.slane %v847, %v1327
      %v1329 = vlaneseq
      %v1330 = vshrl.u32 %v1329, 7
      %v1331 = vsub.s32 0, %v1330
      %v1332 = vrot.slane %v855, %v1331
      %v1333 = vlaneseq
      %v1334 = vshrl.u32 %v1333, 7
      %v1335 = vsub.s32 0, %v1334
      %v1336 = vrot.slane %v857, %v1335
      %v1337 = vlaneseq
      %v1338 = vshrl.u32 %v1337, 7
      %v1339 = vsub.s32 0, %v1338
      %v1340 = vrot.slane %v840, %v1339
      %v1341 = vlaneseq
      %v1342 = vshrl.u32 %v1341, 7
      %v1343 = vsub.s32 0, %v1342
      %v1344 = vrot.slane %v854, %v1343
      %v1345 = vlaneseq
      %v1346 = vshrl.u32 %v1345, 7
      %v1347 = vsub.s32 0, %v1346
      %v1348 = vrot.slane %v856, %v1347
      %v1349 = vlaneseq
      %v1350 = vshrl.u32 %v1349, 7
      %v1351 = vsub.s32 0, %v1350
      %v1352 = vrot.slane %v858, %v1351
      %v1353 = vlaneseq
      %v1354 = vshrl.u32 %v1353, 7
      %v1355 = vsub.s32 0, %v1354
      %v1356 = vrot.slane %v873, %v1355
      %v1357 = vlaneseq
      %v1358 = vshrl.u32 %v1357, 7
      %v1359 = vsub.s32 0, %v1358
      %v1360 = vrot.slane %v880, %v1359
      %v1361 = vlaneseq
      %v1362 = vshrl.u32 %v1361, 7
      %v1363 = vsub.s32 0, %v1362
      %v1364 = vrot.slane %v904, %v1363
      %v1365 = vlaneseq
      %v1366 = vshrl.u32 %v1365, 7
      %v1367 = vsub.s32 0, %v1366
      %v1368 = vrot.slane %v918, %v1367
      %v1369 = vlaneseq
      %v1370 = vshrl.u32 %v1369, 7
      %v1371 = vsub.s32 0, %v1370
      %v1372 = vrot.slane %v926, %v1371
      %v1373 = vlaneseq
      %v1374 = vshrl.u32 %v1373, 7
      %v1375 = vsub.s32 0, %v1374
      %v1376 = vrot.slane %v928, %v1375
      %v1377 = vlaneseq
      %v1378 = vshrl.u32 %v1377, 7
      %v1379 = vsub.s32 0, %v1378
      %v1380 = vrot.slane %v911, %v1379
      %v1381 = vlaneseq
      %v1382 = vshrl.u32 %v1381, 7
      %v1383 = vsub.s32 0, %v1382
      %v1384 = vrot.slane %v925, %v1383
      %v1385 = vlaneseq
      %v1386 = vshrl.u32 %v1385, 7
      %v1387 = vsub.s32 0, %v1386
      %v1388 = vrot.slane %v927, %v1387
      %v1389 = vlaneseq
      %v1390 = vshrl.u32 %v1389, 7
      %v1391 = vsub.s32 0, %v1390
      %v1392 = vrot.slane %v929, %v1391
      %v1393 = vlaneseq
      %v1394 = vshrl.u32 %v1393, 7
      %v1395 = vsub.s32 0, %v1394
      %v1396 = vrot.slane %v953, %v1395
      %v1397 = vlaneseq
      %v1398 = vshrl.u32 %v1397, 7
      %v1399 = vsub.s32 0, %v1398
      %v1400 = vrot.slane %v967, %v1399
      %v1401 = vlaneseq
      %v1402 = vshrl.u32 %v1401, 7
      %v1403 = vsub.s32 0, %v1402
      %v1404 = vrot.slane %v975, %v1403
      %v1405 = vlaneseq
      %v1406 = vshrl.u32 %v1405, 7
      %v1407 = vsub.s32 0, %v1406
      %v1408 = vrot.slane %v977, %v1407
      %v1409 = vlaneseq
      %v1410 = vshrl.u32 %v1409, 7
      %v1411 = vsub.s32 0, %v1410
      %v1412 = vrot.slane %v960, %v1411
      %v1413 = vlaneseq
      %v1414 = vshrl.u32 %v1413, 7
      %v1415 = vsub.s32 0, %v1414
      %v1416 = vrot.slane %v974, %v1415
      %v1417 = vlaneseq
      %v1418 = vshrl.u32 %v1417, 7
      %v1419 = vsub.s32 0, %v1418
      %v1420 = vrot.slane %v976, %v1419
      %v1421 = vlaneseq
      %v1422 = vshrl.u32 %v1421, 7
      %v1423 = vsub.s32 0, %v1422
      %v1424 = vrot.slane %v978, %v1423
      %v1425 = vlaneseq
      %v1426 = vshrl.u32 %v1425, 7
      %v1427 = vsub.s32 0, %v1426
      %v1428 = vrot.slane %v993, %v1427
      %v1429 = vlaneseq
      %v1430 = vshrl.u32 %v1429, 7
      %v1431 = vsub.s32 0, %v1430
      %v1432 = vrot.slane %v1000, %v1431
      %v1433 = vcombine.low %v1004, %v1008
      %v1434 = vcombine.low %v1012, %v1016
      %v1436 = vunpack.c.l.s4 1983009808
      %v1437 = vunpack.c.0.s8 %v1436
      %v1438 = vlaneseq
      %v1439 = vshrl.u32 %v1438, 7
      %v1440 = vsub.s32 %v1437, %v1439
      %v1441 = vrot.slane %v1433, %v1440
      %v1443 = vunpack.c.l.s4 1983009808
      %v1444 = vunpack.c.0.s8 %v1443
      %v1445 = vlaneseq
      %v1446 = vshrl.u32 %v1445, 7
      %v1447 = vsub.s32 %v1444, %v1446
      %v1448 = vrot.slane %v1434, %v1447
      %v1449 = vcombine.low %v1441, %v1448
      %v1450 = vcombine.low %v1020, %v1024
      %v1451 = vcombine.low %v1028, %v1032
      %v1453 = vunpack.c.l.s4 1983009808
      %v1454 = vunpack.c.0.s8 %v1453
      %v1455 = vlaneseq
      %v1456 = vshrl.u32 %v1455, 7
      %v1457 = vsub.s32 %v1454, %v1456
      %v1458 = vrot.slane %v1450, %v1457
      %v1460 = vunpack.c.l.s4 1983009808
      %v1461 = vunpack.c.0.s8 %v1460
      %v1462 = vlaneseq
      %v1463 = vshrl.u32 %v1462, 7
      %v1464 = vsub.s32 %v1461, %v1463
      %v1465 = vrot.slane %v1451, %v1464
      %v1466 = vcombine.low %v1458, %v1465
      %v1467 = vcombine.low %v1036, %v1040
      %v1468 = vcombine.low %v1044, %v1048
      %v1470 = vunpack.c.l.s4 1983009808
      %v1471 = vunpack.c.0.s8 %v1470
      %v1472 = vlaneseq
      %v1473 = vshrl.u32 %v1472, 7
      %v1474 = vsub.s32 %v1471, %v1473
      %v1475 = vrot.slane %v1467, %v1474
      %v1477 = vunpack.c.l.s4 1983009808
      %v1478 = vunpack.c.0.s8 %v1477
      %v1479 = vlaneseq
      %v1480 = vshrl.u32 %v1479, 7
      %v1481 = vsub.s32 %v1478, %v1480
      %v1482 = vrot.slane %v1468, %v1481
      %v1483 = vcombine.low %v1475, %v1482
      %v1484 = vcombine.low %v1052, %v1056
      %v1485 = vcombine.low %v1060, %v1064
      %v1487 = vunpack.c.l.s4 1983009808
      %v1488 = vunpack.c.0.s8 %v1487
      %v1489 = vlaneseq
      %v1490 = vshrl.u32 %v1489, 7
      %v1491 = vsub.s32 %v1488, %v1490
      %v1492 = vrot.slane %v1484, %v1491
      %v1494 = vunpack.c.l.s4 1983009808
      %v1495 = vunpack.c.0.s8 %v1494
      %v1496 = vlaneseq
      %v1497 = vshrl.u32 %v1496, 7
      %v1498 = vsub.s32 %v1495, %v1497
      %v1499 = vrot.slane %v1485, %v1498
      %v1500 = vcombine.low %v1492, %v1499
      %v1502 = vunpack.c.l.s4 1983009808
      %v1503 = vunpack.c.0.s8 %v1502
      %v1504 = vlaneseq
      %v1505 = vshrl.u32 %v1504, 7
      %v1506 = vsub.s32 %v1503, %v1505
      %v1507 = vrot.slane %v1068, %v1506
      %v1508 = vcombine.low %v1076, %v1080
      %v1509 = vcombine.low %v1084, %v1088
      %v1511 = vunpack.c.l.s4 1983009808
      %v1512 = vunpack.c.0.s8 %v1511
      %v1513 = vlaneseq
      %v1514 = vshrl.u32 %v1513, 7
      %v1515 = vsub.s32 %v1512, %v1514
      %v1516 = vrot.slane %v1508, %v1515
      %v1518 = vunpack.c.l.s4 1983009808
      %v1519 = vunpack.c.0.s8 %v1518
      %v1520 = vlaneseq
      %v1521 = vshrl.u32 %v1520, 7
      %v1522 = vsub.s32 %v1519, %v1521
      %v1523 = vrot.slane %v1509, %v1522
      %v1524 = vcombine.low %v1516, %v1523
      %v1525 = vcombine.low %v1092, %v1096
      %v1526 = vcombine.low %v1100, %v1104
      %v1528 = vunpack.c.l.s4 1983009808
      %v1529 = vunpack.c.0.s8 %v1528
      %v1530 = vlaneseq
      %v1531 = vshrl.u32 %v1530, 7
      %v1532 = vsub.s32 %v1529, %v1531
      %v1533 = vrot.slane %v1525, %v1532
      %v1535 = vunpack.c.l.s4 1983009808
      %v1536 = vunpack.c.0.s8 %v1535
      %v1537 = vlaneseq
      %v1538 = vshrl.u32 %v1537, 7
      %v1539 = vsub.s32 %v1536, %v1538
      %v1540 = vrot.slane %v1526, %v1539
      %v1541 = vcombine.low %v1533, %v1540
      %v1542 = vcombine.low %v1108, %v1112
      %v1543 = vcombine.low %v1116, %v1120
      %v1545 = vunpack.c.l.s4 1983009808
      %v1546 = vunpack.c.0.s8 %v1545
      %v1547 = vlaneseq
      %v1548 = vshrl.u32 %v1547, 7
      %v1549 = vsub.s32 %v1546, %v1548
      %v1550 = vrot.slane %v1542, %v1549
      %v1552 = vunpack.c.l.s4 1983009808
      %v1553 = vunpack.c.0.s8 %v1552
      %v1554 = vlaneseq
      %v1555 = vshrl.u32 %v1554, 7
      %v1556 = vsub.s32 %v1553, %v1555
      %v1557 = vrot.slane %v1543, %v1556
      %v1558 = vcombine.low %v1550, %v1557
      %v1559 = vcombine.low %v1124, %v1128
      %v1560 = vcombine.low %v1132, %v1136
      %v1562 = vunpack.c.l.s4 1983009808
      %v1563 = vunpack.c.0.s8 %v1562
      %v1564 = vlaneseq
      %v1565 = vshrl.u32 %v1564, 7
      %v1566 = vsub.s32 %v1563, %v1565
      %v1567 = vrot.slane %v1559, %v1566
      %v1569 = vunpack.c.l.s4 1983009808
      %v1570 = vunpack.c.0.s8 %v1569
      %v1571 = vlaneseq
      %v1572 = vshrl.u32 %v1571, 7
      %v1573 = vsub.s32 %v1570, %v1572
      %v1574 = vrot.slane %v1560, %v1573
      %v1575 = vcombine.low %v1567, %v1574
      %v1577 = vunpack.c.l.s4 1983009808
      %v1578 = vunpack.c.0.s8 %v1577
      %v1579 = vlaneseq
      %v1580 = vshrl.u32 %v1579, 7
      %v1581 = vsub.s32 %v1578, %v1580
      %v1582 = vrot.slane %v1140, %v1581
      %v1583 = vcombine.low %v1148, %v1152
      %v1584 = vcombine.low %v1156, %v1160
      %v1586 = vunpack.c.l.s4 1983009808
      %v1587 = vunpack.c.0.s8 %v1586
      %v1588 = vlaneseq
      %v1589 = vshrl.u32 %v1588, 7
      %v1590 = vsub.s32 %v1587, %v1589
      %v1591 = vrot.slane %v1583, %v1590
      %v1593 = vunpack.c.l.s4 1983009808
      %v1594 = vunpack.c.0.s8 %v1593
      %v1595 = vlaneseq
      %v1596 = vshrl.u32 %v1595, 7
      %v1597 = vsub.s32 %v1594, %v1596
      %v1598 = vrot.slane %v1584, %v1597
      %v1599 = vcombine.low %v1591, %v1598
      %v1600 = vcombine.low %v1164, %v1168
      %v1601 = vcombine.low %v1172, %v1176
      %v1603 = vunpack.c.l.s4 1983009808
      %v1604 = vunpack.c.0.s8 %v1603
      %v1605 = vlaneseq
      %v1606 = vshrl.u32 %v1605, 7
      %v1607 = vsub.s32 %v1604, %v1606
      %v1608 = vrot.slane %v1600, %v1607
      %v1610 = vunpack.c.l.s4 1983009808
      %v1611 = vunpack.c.0.s8 %v1610
      %v1612 = vlaneseq
      %v1613 = vshrl.u32 %v1612, 7
      %v1614 = vsub.s32 %v1611, %v1613
      %v1615 = vrot.slane %v1601, %v1614
      %v1616 = vcombine.low %v1608, %v1615
      %v1617 = vcombine.low %v1180, %v1184
      %v1618 = vcombine.low %v1188, %v1192
      %v1620 = vunpack.c.l.s4 1983009808
      %v1621 = vunpack.c.0.s8 %v1620
      %v1622 = vlaneseq
      %v1623 = vshrl.u32 %v1622, 7
      %v1624 = vsub.s32 %v1621, %v1623
      %v1625 = vrot.slane %v1617, %v1624
      %v1627 = vunpack.c.l.s4 1983009808
      %v1628 = vunpack.c.0.s8 %v1627
      %v1629 = vlaneseq
      %v1630 = vshrl.u32 %v1629, 7
      %v1631 = vsub.s32 %v1628, %v1630
      %v1632 = vrot.slane %v1618, %v1631
      %v1633 = vcombine.low %v1625, %v1632
      %v1634 = vcombine.low %v1196, %v1200
      %v1635 = vcombine.low %v1204, %v1208
      %v1637 = vunpack.c.l.s4 1983009808
      %v1638 = vunpack.c.0.s8 %v1637
      %v1639 = vlaneseq
      %v1640 = vshrl.u32 %v1639, 7
      %v1641 = vsub.s32 %v1638, %v1640
      %v1642 = vrot.slane %v1634, %v1641
      %v1644 = vunpack.c.l.s4 1983009808
      %v1645 = vunpack.c.0.s8 %v1644
      %v1646 = vlaneseq
      %v1647 = vshrl.u32 %v1646, 7
      %v1648 = vsub.s32 %v1645, %v1647
      %v1649 = vrot.slane %v1635, %v1648
      %v1650 = vcombine.low %v1642, %v1649
      %v1652 = vunpack.c.l.s4 1983009808
      %v1653 = vunpack.c.0.s8 %v1652
      %v1654 = vlaneseq
      %v1655 = vshrl.u32 %v1654, 7
      %v1656 = vsub.s32 %v1653, %v1655
      %v1657 = vrot.slane %v1212, %v1656
      %v1658 = vcombine.low %v1220, %v1224
      %v1659 = vcombine.low %v1228, %v1232
      %v1661 = vunpack.c.l.s4 1983009808
      %v1662 = vunpack.c.0.s8 %v1661
      %v1663 = vlaneseq
      %v1664 = vshrl.u32 %v1663, 7
      %v1665 = vsub.s32 %v1662, %v1664
      %v1666 = vrot.slane %v1658, %v1665
      %v1668 = vunpack.c.l.s4 1983009808
      %v1669 = vunpack.c.0.s8 %v1668
      %v1670 = vlaneseq
      %v1671 = vshrl.u32 %v1670, 7
      %v1672 = vsub.s32 %v1669, %v1671
      %v1673 = vrot.slane %v1659, %v1672
      %v1674 = vcombine.low %v1666, %v1673
      %v1675 = vcombine.low %v1236, %v1240
      %v1676 = vcombine.low %v1244, %v1248
      %v1678 = vunpack.c.l.s4 1983009808
      %v1679 = vunpack.c.0.s8 %v1678
      %v1680 = vlaneseq
      %v1681 = vshrl.u32 %v1680, 7
      %v1682 = vsub.s32 %v1679, %v1681
      %v1683 = vrot.slane %v1675, %v1682
      %v1685 = vunpack.c.l.s4 1983009808
      %v1686 = vunpack.c.0.s8 %v1685
      %v1687 = vlaneseq
      %v1688 = vshrl.u32 %v1687, 7
      %v1689 = vsub.s32 %v1686, %v1688
      %v1690 = vrot.slane %v1676, %v1689
      %v1691 = vcombine.low %v1683, %v1690
      %v1692 = vcombine.low %v1252, %v1256
      %v1693 = vcombine.low %v1260, %v1264
      %v1695 = vunpack.c.l.s4 1983009808
      %v1696 = vunpack.c.0.s8 %v1695
      %v1697 = vlaneseq
      %v1698 = vshrl.u32 %v1697, 7
      %v1699 = vsub.s32 %v1696, %v1698
      %v1700 = vrot.slane %v1692, %v1699
      %v1702 = vunpack.c.l.s4 1983009808
      %v1703 = vunpack.c.0.s8 %v1702
      %v1704 = vlaneseq
      %v1705 = vshrl.u32 %v1704, 7
      %v1706 = vsub.s32 %v1703, %v1705
      %v1707 = vrot.slane %v1693, %v1706
      %v1708 = vcombine.low %v1700, %v1707
      %v1709 = vcombine.low %v1268, %v1272
      %v1710 = vcombine.low %v1276, %v1280
      %v1712 = vunpack.c.l.s4 1983009808
      %v1713 = vunpack.c.0.s8 %v1712
      %v1714 = vlaneseq
      %v1715 = vshrl.u32 %v1714, 7
      %v1716 = vsub.s32 %v1713, %v1715
      %v1717 = vrot.slane %v1709, %v1716
      %v1719 = vunpack.c.l.s4 1983009808
      %v1720 = vunpack.c.0.s8 %v1719
      %v1721 = vlaneseq
      %v1722 = vshrl.u32 %v1721, 7
      %v1723 = vsub.s32 %v1720, %v1722
      %v1724 = vrot.slane %v1710, %v1723
      %v1725 = vcombine.low %v1717, %v1724
      %v1727 = vunpack.c.l.s4 1983009808
      %v1728 = vunpack.c.0.s8 %v1727
      %v1729 = vlaneseq
      %v1730 = vshrl.u32 %v1729, 7
      %v1731 = vsub.s32 %v1728, %v1730
      %v1732 = vrot.slane %v1284, %v1731
      %v1733 = vcombine.low %v1292, %v1296
      %v1734 = vcombine.low %v1300, %v1304
      %v1736 = vunpack.c.l.s4 1983009808
      %v1737 = vunpack.c.0.s8 %v1736
      %v1738 = vlaneseq
      %v1739 = vshrl.u32 %v1738, 7
      %v1740 = vsub.s32 %v1737, %v1739
      %v1741 = vrot.slane %v1733, %v1740
      %v1743 = vunpack.c.l.s4 1983009808
      %v1744 = vunpack.c.0.s8 %v1743
      %v1745 = vlaneseq
      %v1746 = vshrl.u32 %v1745, 7
      %v1747 = vsub.s32 %v1744, %v1746
      %v1748 = vrot.slane %v1734, %v1747
      %v1749 = vcombine.low %v1741, %v1748
      %v1750 = vcombine.low %v1308, %v1312
      %v1751 = vcombine.low %v1316, %v1320
      %v1753 = vunpack.c.l.s4 1983009808
      %v1754 = vunpack.c.0.s8 %v1753
      %v1755 = vlaneseq
      %v1756 = vshrl.u32 %v1755, 7
      %v1757 = vsub.s32 %v1754, %v1756
      %v1758 = vrot.slane %v1750, %v1757
      %v1760 = vunpack.c.l.s4 1983009808
      %v1761 = vunpack.c.0.s8 %v1760
      %v1762 = vlaneseq
      %v1763 = vshrl.u32 %v1762, 7
      %v1764 = vsub.s32 %v1761, %v1763
      %v1765 = vrot.slane %v1751, %v1764
      %v1766 = vcombine.low %v1758, %v1765
      %v1767 = vcombine.low %v1324, %v1328
      %v1768 = vcombine.low %v1332, %v1336
      %v1770 = vunpack.c.l.s4 1983009808
      %v1771 = vunpack.c.0.s8 %v1770
      %v1772 = vlaneseq
      %v1773 = vshrl.u32 %v1772, 7
      %v1774 = vsub.s32 %v1771, %v1773
      %v1775 = vrot.slane %v1767, %v1774
      %v1777 = vunpack.c.l.s4 1983009808
      %v1778 = vunpack.c.0.s8 %v1777
      %v1779 = vlaneseq
      %v1780 = vshrl.u32 %v1779, 7
      %v1781 = vsub.s32 %v1778, %v1780
      %v1782 = vrot.slane %v1768, %v1781
      %v1783 = vcombine.low %v1775, %v1782
      %v1784 = vcombine.low %v1340, %v1344
      %v1785 = vcombine.low %v1348, %v1352
      %v1787 = vunpack.c.l.s4 1983009808
      %v1788 = vunpack.c.0.s8 %v1787
      %v1789 = vlaneseq
      %v1790 = vshrl.u32 %v1789, 7
      %v1791 = vsub.s32 %v1788, %v1790
      %v1792 = vrot.slane %v1784, %v1791
      %v1794 = vunpack.c.l.s4 1983009808
      %v1795 = vunpack.c.0.s8 %v1794
      %v1796 = vlaneseq
      %v1797 = vshrl.u32 %v1796, 7
      %v1798 = vsub.s32 %v1795, %v1797
      %v1799 = vrot.slane %v1785, %v1798
      %v1800 = vcombine.low %v1792, %v1799
      %v1802 = vunpack.c.l.s4 1983009808
      %v1803 = vunpack.c.0.s8 %v1802
      %v1804 = vlaneseq
      %v1805 = vshrl.u32 %v1804, 7
      %v1806 = vsub.s32 %v1803, %v1805
      %v1807 = vrot.slane %v1356, %v1806
      %v1833 = vcombine.low %v1008, %v1012
      %v1834 = vcombine.low %v1016, %v1020
      %v1836 = vunpack.c.l.s4 1983009808
      %v1837 = vunpack.c.0.s8 %v1836
      %v1838 = vlaneseq
      %v1839 = vshrl.u32 %v1838, 7
      %v1840 = vsub.s32 %v1837, %v1839
      %v1841 = vrot.slane %v1833, %v1840
      %v1843 = vunpack.c.l.s4 1983009808
      %v1844 = vunpack.c.0.s8 %v1843
      %v1845 = vlaneseq
      %v1846 = vshrl.u32 %v1845, 7
      %v1847 = vsub.s32 %v1844, %v1846
      %v1848 = vrot.slane %v1834, %v1847
      %v1849 = vcombine.low %v1841, %v1848
      %v1850 = vcombine.low %v1024, %v1028
      %v1851 = vcombine.low %v1032, %v1036
      %v1853 = vunpack.c.l.s4 1983009808
      %v1854 = vunpack.c.0.s8 %v1853
      %v1855 = vlaneseq
      %v1856 = vshrl.u32 %v1855, 7
      %v1857 = vsub.s32 %v1854, %v1856
      %v1858 = vrot.slane %v1850, %v1857
      %v1860 = vunpack.c.l.s4 1983009808
      %v1861 = vunpack.c.0.s8 %v1860
      %v1862 = vlaneseq
      %v1863 = vshrl.u32 %v1862, 7
      %v1864 = vsub.s32 %v1861, %v1863
      %v1865 = vrot.slane %v1851, %v1864
      %v1866 = vcombine.low %v1858, %v1865
      %v1867 = vcombine.low %v1040, %v1044
      %v1868 = vcombine.low %v1048, %v1052
      %v1870 = vunpack.c.l.s4 1983009808
      %v1871 = vunpack.c.0.s8 %v1870
      %v1872 = vlaneseq
      %v1873 = vshrl.u32 %v1872, 7
      %v1874 = vsub.s32 %v1871, %v1873
      %v1875 = vrot.slane %v1867, %v1874
      %v1877 = vunpack.c.l.s4 1983009808
      %v1878 = vunpack.c.0.s8 %v1877
      %v1879 = vlaneseq
      %v1880 = vshrl.u32 %v1879, 7
      %v1881 = vsub.s32 %v1878, %v1880
      %v1882 = vrot.slane %v1868, %v1881
      %v1883 = vcombine.low %v1875, %v1882
      %v1884 = vcombine.low %v1056, %v1060
      %v1885 = vcombine.low %v1064, %v1068
      %v1887 = vunpack.c.l.s4 1983009808
      %v1888 = vunpack.c.0.s8 %v1887
      %v1889 = vlaneseq
      %v1890 = vshrl.u32 %v1889, 7
      %v1891 = vsub.s32 %v1888, %v1890
      %v1892 = vrot.slane %v1884, %v1891
      %v1894 = vunpack.c.l.s4 1983009808
      %v1895 = vunpack.c.0.s8 %v1894
      %v1896 = vlaneseq
      %v1897 = vshrl.u32 %v1896, 7
      %v1898 = vsub.s32 %v1895, %v1897
      %v1899 = vrot.slane %v1885, %v1898
      %v1900 = vcombine.low %v1892, %v1899
      %v1901 = vcombine.low %v1080, %v1084
      %v1902 = vcombine.low %v1088, %v1092
      %v1904 = vunpack.c.l.s4 1983009808
      %v1905 = vunpack.c.0.s8 %v1904
      %v1906 = vlaneseq
      %v1907 = vshrl.u32 %v1906, 7
      %v1908 = vsub.s32 %v1905, %v1907
      %v1909 = vrot.slane %v1901, %v1908
      %v1911 = vunpack.c.l.s4 1983009808
      %v1912 = vunpack.c.0.s8 %v1911
      %v1913 = vlaneseq
      %v1914 = vshrl.u32 %v1913, 7
      %v1915 = vsub.s32 %v1912, %v1914
      %v1916 = vrot.slane %v1902, %v1915
      %v1917 = vcombine.low %v1909, %v1916
      %v1918 = vcombine.low %v1096, %v1100
      %v1919 = vcombine.low %v1104, %v1108
      %v1921 = vunpack.c.l.s4 1983009808
      %v1922 = vunpack.c.0.s8 %v1921
      %v1923 = vlaneseq
      %v1924 = vshrl.u32 %v1923, 7
      %v1925 = vsub.s32 %v1922, %v1924
      %v1926 = vrot.slane %v1918, %v1925
      %v1928 = vunpack.c.l.s4 1983009808
      %v1929 = vunpack.c.0.s8 %v1928
      %v1930 = vlaneseq
      %v1931 = vshrl.u32 %v1930, 7
      %v1932 = vsub.s32 %v1929, %v1931
      %v1933 = vrot.slane %v1919, %v1932
      %v1934 = vcombine.low %v1926, %v1933
      %v1935 = vcombine.low %v1112, %v1116
      %v1936 = vcombine.low %v1120, %v1124
      %v1938 = vunpack.c.l.s4 1983009808
      %v1939 = vunpack.c.0.s8 %v1938
      %v1940 = vlaneseq
      %v1941 = vshrl.u32 %v1940, 7
      %v1942 = vsub.s32 %v1939, %v1941
      %v1943 = vrot.slane %v1935, %v1942
      %v1945 = vunpack.c.l.s4 1983009808
      %v1946 = vunpack.c.0.s8 %v1945
      %v1947 = vlaneseq
      %v1948 = vshrl.u32 %v1947, 7
      %v1949 = vsub.s32 %v1946, %v1948
      %v1950 = vrot.slane %v1936, %v1949
      %v1951 = vcombine.low %v1943, %v1950
      %v1952 = vcombine.low %v1128, %v1132
      %v1953 = vcombine.low %v1136, %v1140
      %v1955 = vunpack.c.l.s4 1983009808
      %v1956 = vunpack.c.0.s8 %v1955
      %v1957 = vlaneseq
      %v1958 = vshrl.u32 %v1957, 7
      %v1959 = vsub.s32 %v1956, %v1958
      %v1960 = vrot.slane %v1952, %v1959
      %v1962 = vunpack.c.l.s4 1983009808
      %v1963 = vunpack.c.0.s8 %v1962
      %v1964 = vlaneseq
      %v1965 = vshrl.u32 %v1964, 7
      %v1966 = vsub.s32 %v1963, %v1965
      %v1967 = vrot.slane %v1953, %v1966
      %v1968 = vcombine.low %v1960, %v1967
      %v1969 = vcombine.low %v1152, %v1156
      %v1970 = vcombine.low %v1160, %v1164
      %v1972 = vunpack.c.l.s4 1983009808
      %v1973 = vunpack.c.0.s8 %v1972
      %v1974 = vlaneseq
      %v1975 = vshrl.u32 %v1974, 7
      %v1976 = vsub.s32 %v1973, %v1975
      %v1977 = vrot.slane %v1969, %v1976
      %v1979 = vunpack.c.l.s4 1983009808
      %v1980 = vunpack.c.0.s8 %v1979
      %v1981 = vlaneseq
      %v1982 = vshrl.u32 %v1981, 7
      %v1983 = vsub.s32 %v1980, %v1982
      %v1984 = vrot.slane %v1970, %v1983
      %v1985 = vcombine.low %v1977, %v1984
      %v1986 = vcombine.low %v1168, %v1172
      %v1987 = vcombine.low %v1176, %v1180
      %v1989 = vunpack.c.l.s4 1983009808
      %v1990 = vunpack.c.0.s8 %v1989
      %v1991 = vlaneseq
      %v1992 = vshrl.u32 %v1991, 7
      %v1993 = vsub.s32 %v1990, %v1992
      %v1994 = vrot.slane %v1986, %v1993
      %v1996 = vunpack.c.l.s4 1983009808
      %v1997 = vunpack.c.0.s8 %v1996
      %v1998 = vlaneseq
      %v1999 = vshrl.u32 %v1998, 7
      %v2000 = vsub.s32 %v1997, %v1999
      %v2001 = vrot.slane %v1987, %v2000
      %v2002 = vcombine.low %v1994, %v2001
      %v2003 = vcombine.low %v1184, %v1188
      %v2004 = vcombine.low %v1192, %v1196
      %v2006 = vunpack.c.l.s4 1983009808
      %v2007 = vunpack.c.0.s8 %v2006
      %v2008 = vlaneseq
      %v2009 = vshrl.u32 %v2008, 7
      %v2010 = vsub.s32 %v2007, %v2009
      %v2011 = vrot.slane %v2003, %v2010
      %v2013 = vunpack.c.l.s4 1983009808
      %v2014 = vunpack.c.0.s8 %v2013
      %v2015 = vlaneseq
      %v2016 = vshrl.u32 %v2015, 7
      %v2017 = vsub.s32 %v2014, %v2016
      %v2018 = vrot.slane %v2004, %v2017
      %v2019 = vcombine.low %v2011, %v2018
      %v2020 = vcombine.low %v1200, %v1204
      %v2021 = vcombine.low %v1208, %v1212
      %v2023 = vunpack.c.l.s4 1983009808
      %v2024 = vunpack.c.0.s8 %v2023
      %v2025 = vlaneseq
      %v2026 = vshrl.u32 %v2025, 7
      %v2027 = vsub.s32 %v2024, %v2026
      %v2028 = vrot.slane %v2020, %v2027
      %v2030 = vunpack.c.l.s4 1983009808
      %v2031 = vunpack.c.0.s8 %v2030
      %v2032 = vlaneseq
      %v2033 = vshrl.u32 %v2032, 7
      %v2034 = vsub.s32 %v2031, %v2033
      %v2035 = vrot.slane %v2021, %v2034
      %v2036 = vcombine.low %v2028, %v2035
      %v2037 = vcombine.low %v1224, %v1228
      %v2038 = vcombine.low %v1232, %v1236
      %v2040 = vunpack.c.l.s4 1983009808
      %v2041 = vunpack.c.0.s8 %v2040
      %v2042 = vlaneseq
      %v2043 = vshrl.u32 %v2042, 7
      %v2044 = vsub.s32 %v2041, %v2043
      %v2045 = vrot.slane %v2037, %v2044
      %v2047 = vunpack.c.l.s4 1983009808
      %v2048 = vunpack.c.0.s8 %v2047
      %v2049 = vlaneseq
      %v2050 = vshrl.u32 %v2049, 7
      %v2051 = vsub.s32 %v2048, %v2050
      %v2052 = vrot.slane %v2038, %v2051
      %v2053 = vcombine.low %v2045, %v2052
      %v2054 = vcombine.low %v1240, %v1244
      %v2055 = vcombine.low %v1248, %v1252
      %v2057 = vunpack.c.l.s4 1983009808
      %v2058 = vunpack.c.0.s8 %v2057
      %v2059 = vlaneseq
      %v2060 = vshrl.u32 %v2059, 7
      %v2061 = vsub.s32 %v2058, %v2060
      %v2062 = vrot.slane %v2054, %v2061
      %v2064 = vunpack.c.l.s4 1983009808
      %v2065 = vunpack.c.0.s8 %v2064
      %v2066 = vlaneseq
      %v2067 = vshrl.u32 %v2066, 7
      %v2068 = vsub.s32 %v2065, %v2067
      %v2069 = vrot.slane %v2055, %v2068
      %v2070 = vcombine.low %v2062, %v2069
      %v2071 = vcombine.low %v1256, %v1260
      %v2072 = vcombine.low %v1264, %v1268
      %v2074 = vunpack.c.l.s4 1983009808
      %v2075 = vunpack.c.0.s8 %v2074
      %v2076 = vlaneseq
      %v2077 = vshrl.u32 %v2076, 7
      %v2078 = vsub.s32 %v2075, %v2077
      %v2079 = vrot.slane %v2071, %v2078
      %v2081 = vunpack.c.l.s4 1983009808
      %v2082 = vunpack.c.0.s8 %v2081
      %v2083 = vlaneseq
      %v2084 = vshrl.u32 %v2083, 7
      %v2085 = vsub.s32 %v2082, %v2084
      %v2086 = vrot.slane %v2072, %v2085
      %v2087 = vcombine.low %v2079, %v2086
      %v2088 = vcombine.low %v1272, %v1276
      %v2089 = vcombine.low %v1280, %v1284
      %v2091 = vunpack.c.l.s4 1983009808
      %v2092 = vunpack.c.0.s8 %v2091
      %v2093 = vlaneseq
      %v2094 = vshrl.u32 %v2093, 7
      %v2095 = vsub.s32 %v2092, %v2094
      %v2096 = vrot.slane %v2088, %v2095
      %v2098 = vunpack.c.l.s4 1983009808
      %v2099 = vunpack.c.0.s8 %v2098
      %v2100 = vlaneseq
      %v2101 = vshrl.u32 %v2100, 7
      %v2102 = vsub.s32 %v2099, %v2101
      %v2103 = vrot.slane %v2089, %v2102
      %v2104 = vcombine.low %v2096, %v2103
      %v2105 = vcombine.low %v1296, %v1300
      %v2106 = vcombine.low %v1304, %v1308
      %v2108 = vunpack.c.l.s4 1983009808
      %v2109 = vunpack.c.0.s8 %v2108
      %v2110 = vlaneseq
      %v2111 = vshrl.u32 %v2110, 7
      %v2112 = vsub.s32 %v2109, %v2111
      %v2113 = vrot.slane %v2105, %v2112
      %v2115 = vunpack.c.l.s4 1983009808
      %v2116 = vunpack.c.0.s8 %v2115
      %v2117 = vlaneseq
      %v2118 = vshrl.u32 %v2117, 7
      %v2119 = vsub.s32 %v2116, %v2118
      %v2120 = vrot.slane %v2106, %v2119
      %v2121 = vcombine.low %v2113, %v2120
      %v2122 = vcombine.low %v1312, %v1316
      %v2123 = vcombine.low %v1320, %v1324
      %v2125 = vunpack.c.l.s4 1983009808
      %v2126 = vunpack.c.0.s8 %v2125
      %v2127 = vlaneseq
      %v2128 = vshrl.u32 %v2127, 7
      %v2129 = vsub.s32 %v2126, %v2128
      %v2130 = vrot.slane %v2122, %v2129
      %v2132 = vunpack.c.l.s4 1983009808
      %v2133 = vunpack.c.0.s8 %v2132
      %v2134 = vlaneseq
      %v2135 = vshrl.u32 %v2134, 7
      %v2136 = vsub.s32 %v2133, %v2135
      %v2137 = vrot.slane %v2123, %v2136
      %v2138 = vcombine.low %v2130, %v2137
      %v2139 = vcombine.low %v1328, %v1332
      %v2140 = vcombine.low %v1336, %v1340
      %v2142 = vunpack.c.l.s4 1983009808
      %v2143 = vunpack.c.0.s8 %v2142
      %v2144 = vlaneseq
      %v2145 = vshrl.u32 %v2144, 7
      %v2146 = vsub.s32 %v2143, %v2145
      %v2147 = vrot.slane %v2139, %v2146
      %v2149 = vunpack.c.l.s4 1983009808
      %v2150 = vunpack.c.0.s8 %v2149
      %v2151 = vlaneseq
      %v2152 = vshrl.u32 %v2151, 7
      %v2153 = vsub.s32 %v2150, %v2152
      %v2154 = vrot.slane %v2140, %v2153
      %v2155 = vcombine.low %v2147, %v2154
      %v2156 = vcombine.low %v1344, %v1348
      %v2157 = vcombine.low %v1352, %v1356
      %v2159 = vunpack.c.l.s4 1983009808
      %v2160 = vunpack.c.0.s8 %v2159
      %v2161 = vlaneseq
      %v2162 = vshrl.u32 %v2161, 7
      %v2163 = vsub.s32 %v2160, %v2162
      %v2164 = vrot.slane %v2156, %v2163
      %v2166 = vunpack.c.l.s4 1983009808
      %v2167 = vunpack.c.0.s8 %v2166
      %v2168 = vlaneseq
      %v2169 = vshrl.u32 %v2168, 7
      %v2170 = vsub.s32 %v2167, %v2169
      %v2171 = vrot.slane %v2157, %v2170
      %v2172 = vcombine.low %v2164, %v2171
      %vm2173 = vcmask 1040384
      %v2174 = vrot.slane %v1849, 7
      %v2175 = vrot.slane %v1866, 7
      %v2176 = vsel %vm2173, %v2174, %v2175
      %v2177 = vrot.slane %v1883, 7
      %v2178 = vsel %vm2173, %v2175, %v2177
      %v2179 = vrot.slane %v1900, 7
      %v2180 = vsel %vm2173, %v2177, %v2179
      %v2181 = vrot.slane %v1917, 7
      %v2182 = vrot.slane %v1934, 7
      %v2183 = vsel %vm2173, %v2181, %v2182
      %v2184 = vrot.slane %v1951, 7
      %v2185 = vsel %vm2173, %v2182, %v2184
      %v2186 = vrot.slane %v1968, 7
      %v2187 = vsel %vm2173, %v2184, %v2186
      %v2188 = vrot.slane %v1985, 7
      %v2189 = vrot.slane %v2002, 7
      %v2190 = vsel %vm2173, %v2188, %v2189
      %v2191 = vrot.slane %v2019, 7
      %v2192 = vsel %vm2173, %v2189, %v2191
      %v2193 = vrot.slane %v2036, 7
      %v2194 = vsel %vm2173, %v2191, %v2193
      %v2195 = vrot.slane %v2053, 7
      %v2196 = vrot.slane %v2070, 7
      %v2197 = vsel %vm2173, %v2195, %v2196
      %v2198 = vrot.slane %v2087, 7
      %v2199 = vsel %vm2173, %v2196, %v2198
      %v2200 = vrot.slane %v2104, 7
      %v2201 = vsel %vm2173, %v2198, %v2200
      %v2202 = vrot.slane %v2121, 7
      %v2203 = vrot.slane %v2138, 7
      %v2204 = vsel %vm2173, %v2202, %v2203
      %v2205 = vrot.slane %v2155, 7
      %v2206 = vsel %vm2173, %v2203, %v2205
      %v2207 = vrot.slane %v2172, 7
      %v2208 = vsel %vm2173, %v2205, %v2207
      %2209 = vrot.lane.b32.xlu0 %v2174, 4
      %v2210 = vpop.permute.xlu0 %2209
      %2211 = vrot.lane.b32.xlu0 %v2176, 4
      %v2212 = vpop.permute.xlu0 %2211
      %2213 = vrot.lane.b32.xlu0 %v2178, 4
      %v2214 = vpop.permute.xlu0 %2213
      %2215 = vrot.lane.b32.xlu0 %v2180, 4
      %v2216 = vpop.permute.xlu0 %2215
      %2217 = vrot.lane.b32.xlu0 %v2179, 4
      %v2218 = vpop.permute.xlu0 %2217
      %2219 = vrot.lane.b32.xlu0 %v2181, 4
      %v2220 = vpop.permute.xlu0 %2219
      %2221 = vrot.lane.b32.xlu0 %v2183, 4
      %v2222 = vpop.permute.xlu0 %2221
      %2223 = vrot.lane.b32.xlu0 %v2185, 4
      %v2224 = vpop.permute.xlu0 %2223
      %2225 = vrot.lane.b32.xlu0 %v2187, 4
      %v2226 = vpop.permute.xlu0 %2225
      %2227 = vrot.lane.b32.xlu0 %v2186, 4
      %v2228 = vpop.permute.xlu0 %2227
      %2229 = vrot.lane.b32.xlu0 %v2188, 4
      %v2230 = vpop.permute.xlu0 %2229
      %2231 = vrot.lane.b32.xlu0 %v2190, 4
      %v2232 = vpop.permute.xlu0 %2231
      %2233 = vrot.lane.b32.xlu0 %v2192, 4
      %v2234 = vpop.permute.xlu0 %2233
      %2235 = vrot.lane.b32.xlu0 %v2194, 4
      %v2236 = vpop.permute.xlu0 %2235
      %2237 = vrot.lane.b32.xlu0 %v2193, 4
      %v2238 = vpop.permute.xlu0 %2237
      %2239 = vrot.lane.b32.xlu0 %v2195, 4
      %v2240 = vpop.permute.xlu0 %2239
      %2241 = vrot.lane.b32.xlu0 %v2197, 4
      %v2242 = vpop.permute.xlu0 %2241
      %2243 = vrot.lane.b32.xlu0 %v2199, 4
      %v2244 = vpop.permute.xlu0 %2243
      %2245 = vrot.lane.b32.xlu0 %v2201, 4
      %v2246 = vpop.permute.xlu0 %2245
      %2247 = vrot.lane.b32.xlu0 %v2200, 4
      %v2248 = vpop.permute.xlu0 %2247
      %2249 = vrot.lane.b32.xlu0 %v2202, 4
      %v2250 = vpop.permute.xlu0 %2249
      %2251 = vrot.lane.b32.xlu0 %v2204, 4
      %v2252 = vpop.permute.xlu0 %2251
      %2253 = vrot.lane.b32.xlu0 %v2206, 4
      %v2254 = vpop.permute.xlu0 %2253
      %2255 = vrot.lane.b32.xlu0 %v2208, 4
      %v2256 = vpop.permute.xlu0 %2255
      %2257 = vrot.lane.b32.xlu0 %v2207, 4
      %v2258 = vpop.permute.xlu0 %2257
      %v2285 = vunpack.c.l.s4 1983009808
      %v2286 = vunpack.c.0.s8 %v2285
      %v2287 = vlaneseq
      %v2288 = vshrl.u32 %v2287, 7
      %v2289 = vsub.s32 %v2286, %v2288
      %v2290 = vrot.slane %v1072, %v2289
      %v2292 = vunpack.c.l.s4 1983009808
      %v2293 = vunpack.c.0.s8 %v2292
      %v2294 = vlaneseq
      %v2295 = vshrl.u32 %v2294, 7
      %v2296 = vsub.s32 %v2293, %v2295
      %v2297 = vrot.slane %v1144, %v2296
      %v2299 = vunpack.c.l.s4 1983009808
      %v2300 = vunpack.c.0.s8 %v2299
      %v2301 = vlaneseq
      %v2302 = vshrl.u32 %v2301, 7
      %v2303 = vsub.s32 %v2300, %v2302
      %v2304 = vrot.slane %v1216, %v2303
      %v2306 = vunpack.c.l.s4 1983009808
      %v2307 = vunpack.c.0.s8 %v2306
      %v2308 = vlaneseq
      %v2309 = vshrl.u32 %v2308, 7
      %v2310 = vsub.s32 %v2307, %v2309
      %v2311 = vrot.slane %v1288, %v2310
      %v2313 = vunpack.c.l.s4 1983009808
      %v2314 = vunpack.c.0.s8 %v2313
      %v2315 = vlaneseq
      %v2316 = vshrl.u32 %v2315, 7
      %v2317 = vsub.s32 %v2314, %v2316
      %v2318 = vrot.slane %v1360, %v2317
      %2319 = vrot.lane.b32.xlu0 %v1849, 8
      %v2320 = vpop.permute.xlu0 %2319
      %2321 = vrot.lane.b32.xlu0 %v1866, 8
      %v2322 = vpop.permute.xlu0 %2321
      %2323 = vrot.lane.b32.xlu0 %v1883, 8
      %v2324 = vpop.permute.xlu0 %2323
      %2325 = vrot.lane.b32.xlu0 %v1900, 8
      %v2326 = vpop.permute.xlu0 %2325
      %2327 = vrot.lane.b32.xlu0 %v2290, 8
      %v2328 = vpop.permute.xlu0 %2327
      %2329 = vrot.lane.b32.xlu0 %v1917, 8
      %v2330 = vpop.permute.xlu0 %2329
      %2331 = vrot.lane.b32.xlu0 %v1934, 8
      %v2332 = vpop.permute.xlu0 %2331
      %2333 = vrot.lane.b32.xlu0 %v1951, 8
      %v2334 = vpop.permute.xlu0 %2333
      %2335 = vrot.lane.b32.xlu0 %v1968, 8
      %v2336 = vpop.permute.xlu0 %2335
      %2337 = vrot.lane.b32.xlu0 %v2297, 8
      %v2338 = vpop.permute.xlu0 %2337
      %2339 = vrot.lane.b32.xlu0 %v1985, 8
      %v2340 = vpop.permute.xlu0 %2339
      %2341 = vrot.lane.b32.xlu0 %v2002, 8
      %v2342 = vpop.permute.xlu0 %2341
      %2343 = vrot.lane.b32.xlu0 %v2019, 8
      %v2344 = vpop.permute.xlu0 %2343
      %2345 = vrot.lane.b32.xlu0 %v2036, 8
      %v2346 = vpop.permute.xlu0 %2345
      %2347 = vrot.lane.b32.xlu0 %v2304, 8
      %v2348 = vpop.permute.xlu0 %2347
      %2349 = vrot.lane.b32.xlu0 %v2053, 8
      %v2350 = vpop.permute.xlu0 %2349
      %2351 = vrot.lane.b32.xlu0 %v2070, 8
      %v2352 = vpop.permute.xlu0 %2351
      %2353 = vrot.lane.b32.xlu0 %v2087, 8
      %v2354 = vpop.permute.xlu0 %2353
      %2355 = vrot.lane.b32.xlu0 %v2104, 8
      %v2356 = vpop.permute.xlu0 %2355
      %2357 = vrot.lane.b32.xlu0 %v2311, 8
      %v2358 = vpop.permute.xlu0 %2357
      %2359 = vrot.lane.b32.xlu0 %v2121, 8
      %v2360 = vpop.permute.xlu0 %2359
      %2361 = vrot.lane.b32.xlu0 %v2138, 8
      %v2362 = vpop.permute.xlu0 %2361
      %2363 = vrot.lane.b32.xlu0 %v2155, 8
      %v2364 = vpop.permute.xlu0 %2363
      %2365 = vrot.lane.b32.xlu0 %v2172, 8
      %v2366 = vpop.permute.xlu0 %2365
      %2367 = vrot.lane.b32.xlu0 %v2318, 8
      %v2368 = vpop.permute.xlu0 %2367
      %2394 = vrot.lane.b32.xlu0 %v1524, 12
      %v2395 = vpop.permute.xlu0 %2394
      %2396 = vrot.lane.b32.xlu0 %v1541, 12
      %v2397 = vpop.permute.xlu0 %2396
      %2398 = vrot.lane.b32.xlu0 %v1558, 12
      %v2399 = vpop.permute.xlu0 %2398
      %2400 = vrot.lane.b32.xlu0 %v1575, 12
      %v2401 = vpop.permute.xlu0 %2400
      %2402 = vrot.lane.b32.xlu0 %v1582, 12
      %v2403 = vpop.permute.xlu0 %2402
      %2404 = vrot.lane.b32.xlu0 %v1599, 12
      %v2405 = vpop.permute.xlu0 %2404
      %2406 = vrot.lane.b32.xlu0 %v1616, 12
      %v2407 = vpop.permute.xlu0 %2406
      %2408 = vrot.lane.b32.xlu0 %v1633, 12
      %v2409 = vpop.permute.xlu0 %2408
      %2410 = vrot.lane.b32.xlu0 %v1650, 12
      %v2411 = vpop.permute.xlu0 %2410
      %2412 = vrot.lane.b32.xlu0 %v1657, 12
      %v2413 = vpop.permute.xlu0 %2412
      %2414 = vrot.lane.b32.xlu0 %v1674, 12
      %v2415 = vpop.permute.xlu0 %2414
      %2416 = vrot.lane.b32.xlu0 %v1691, 12
      %v2417 = vpop.permute.xlu0 %2416
      %2418 = vrot.lane.b32.xlu0 %v1708, 12
      %v2419 = vpop.permute.xlu0 %2418
      %2420 = vrot.lane.b32.xlu0 %v1725, 12
      %v2421 = vpop.permute.xlu0 %2420
      %2422 = vrot.lane.b32.xlu0 %v1732, 12
      %v2423 = vpop.permute.xlu0 %2422
      %2424 = vrot.lane.b32.xlu0 %v1749, 12
      %v2425 = vpop.permute.xlu0 %2424
      %2426 = vrot.lane.b32.xlu0 %v1766, 12
      %v2427 = vpop.permute.xlu0 %2426
      %2428 = vrot.lane.b32.xlu0 %v1783, 12
      %v2429 = vpop.permute.xlu0 %2428
      %2430 = vrot.lane.b32.xlu0 %v1800, 12
      %v2431 = vpop.permute.xlu0 %2430
      %2432 = vrot.lane.b32.xlu0 %v1807, 12
      %v2433 = vpop.permute.xlu0 %2432
      %2454 = vrot.lane.b32.xlu0 %v2181, 16
      %v2455 = vpop.permute.xlu0 %2454
      %2456 = vrot.lane.b32.xlu0 %v2183, 16
      %v2457 = vpop.permute.xlu0 %2456
      %2458 = vrot.lane.b32.xlu0 %v2185, 16
      %v2459 = vpop.permute.xlu0 %2458
      %2460 = vrot.lane.b32.xlu0 %v2187, 16
      %v2461 = vpop.permute.xlu0 %2460
      %2462 = vrot.lane.b32.xlu0 %v2186, 16
      %v2463 = vpop.permute.xlu0 %2462
      %2464 = vrot.lane.b32.xlu0 %v2188, 16
      %v2465 = vpop.permute.xlu0 %2464
      %2466 = vrot.lane.b32.xlu0 %v2190, 16
      %v2467 = vpop.permute.xlu0 %2466
      %2468 = vrot.lane.b32.xlu0 %v2192, 16
      %v2469 = vpop.permute.xlu0 %2468
      %2470 = vrot.lane.b32.xlu0 %v2194, 16
      %v2471 = vpop.permute.xlu0 %2470
      %2472 = vrot.lane.b32.xlu0 %v2193, 16
      %v2473 = vpop.permute.xlu0 %2472
      %2474 = vrot.lane.b32.xlu0 %v2195, 16
      %v2475 = vpop.permute.xlu0 %2474
      %2476 = vrot.lane.b32.xlu0 %v2197, 16
      %v2477 = vpop.permute.xlu0 %2476
      %2478 = vrot.lane.b32.xlu0 %v2199, 16
      %v2479 = vpop.permute.xlu0 %2478
      %2480 = vrot.lane.b32.xlu0 %v2201, 16
      %v2481 = vpop.permute.xlu0 %2480
      %2482 = vrot.lane.b32.xlu0 %v2200, 16
      %v2483 = vpop.permute.xlu0 %2482
      %2484 = vrot.lane.b32.xlu0 %v2202, 16
      %v2485 = vpop.permute.xlu0 %2484
      %2486 = vrot.lane.b32.xlu0 %v2204, 16
      %v2487 = vpop.permute.xlu0 %2486
      %2488 = vrot.lane.b32.xlu0 %v2206, 16
      %v2489 = vpop.permute.xlu0 %2488
      %2490 = vrot.lane.b32.xlu0 %v2208, 16
      %v2491 = vpop.permute.xlu0 %2490
      %2492 = vrot.lane.b32.xlu0 %v2207, 16
      %v2493 = vpop.permute.xlu0 %2492
      %2514 = vrot.lane.b32.xlu0 %v1917, 20
      %v2515 = vpop.permute.xlu0 %2514
      %2516 = vrot.lane.b32.xlu0 %v1934, 20
      %v2517 = vpop.permute.xlu0 %2516
      %2518 = vrot.lane.b32.xlu0 %v1951, 20
      %v2519 = vpop.permute.xlu0 %2518
      %2520 = vrot.lane.b32.xlu0 %v1968, 20
      %v2521 = vpop.permute.xlu0 %2520
      %2522 = vrot.lane.b32.xlu0 %v2297, 20
      %v2523 = vpop.permute.xlu0 %2522
      %2524 = vrot.lane.b32.xlu0 %v1985, 20
      %v2525 = vpop.permute.xlu0 %2524
      %2526 = vrot.lane.b32.xlu0 %v2002, 20
      %v2527 = vpop.permute.xlu0 %2526
      %2528 = vrot.lane.b32.xlu0 %v2019, 20
      %v2529 = vpop.permute.xlu0 %2528
      %2530 = vrot.lane.b32.xlu0 %v2036, 20
      %v2531 = vpop.permute.xlu0 %2530
      %2532 = vrot.lane.b32.xlu0 %v2304, 20
      %v2533 = vpop.permute.xlu0 %2532
      %2534 = vrot.lane.b32.xlu0 %v2053, 20
      %v2535 = vpop.permute.xlu0 %2534
      %2536 = vrot.lane.b32.xlu0 %v2070, 20
      %v2537 = vpop.permute.xlu0 %2536
      %2538 = vrot.lane.b32.xlu0 %v2087, 20
      %v2539 = vpop.permute.xlu0 %2538
      %2540 = vrot.lane.b32.xlu0 %v2104, 20
      %v2541 = vpop.permute.xlu0 %2540
      %2542 = vrot.lane.b32.xlu0 %v2311, 20
      %v2543 = vpop.permute.xlu0 %2542
      %2544 = vrot.lane.b32.xlu0 %v2121, 20
      %v2545 = vpop.permute.xlu0 %2544
      %2546 = vrot.lane.b32.xlu0 %v2138, 20
      %v2547 = vpop.permute.xlu0 %2546
      %2548 = vrot.lane.b32.xlu0 %v2155, 20
      %v2549 = vpop.permute.xlu0 %2548
      %2550 = vrot.lane.b32.xlu0 %v2172, 20
      %v2551 = vpop.permute.xlu0 %2550
      %2552 = vrot.lane.b32.xlu0 %v2318, 20
      %v2553 = vpop.permute.xlu0 %2552
      %v2574 = vcombine.low %v1364, %v1368
      %v2575 = vcombine.low %v1372, %v1376
      %v2577 = vunpack.c.l.s4 1983009808
      %v2578 = vunpack.c.0.s8 %v2577
      %v2579 = vlaneseq
      %v2580 = vshrl.u32 %v2579, 7
      %v2581 = vsub.s32 %v2578, %v2580
      %v2582 = vrot.slane %v2574, %v2581
      %v2584 = vunpack.c.l.s4 1983009808
      %v2585 = vunpack.c.0.s8 %v2584
      %v2586 = vlaneseq
      %v2587 = vshrl.u32 %v2586, 7
      %v2588 = vsub.s32 %v2585, %v2587
      %v2589 = vrot.slane %v2575, %v2588
      %v2590 = vcombine.low %v2582, %v2589
      %v2591 = vcombine.low %v1380, %v1384
      %v2592 = vcombine.low %v1388, %v1392
      %v2594 = vunpack.c.l.s4 1983009808
      %v2595 = vunpack.c.0.s8 %v2594
      %v2596 = vlaneseq
      %v2597 = vshrl.u32 %v2596, 7
      %v2598 = vsub.s32 %v2595, %v2597
      %v2599 = vrot.slane %v2591, %v2598
      %v2601 = vunpack.c.l.s4 1983009808
      %v2602 = vunpack.c.0.s8 %v2601
      %v2603 = vlaneseq
      %v2604 = vshrl.u32 %v2603, 7
      %v2605 = vsub.s32 %v2602, %v2604
      %v2606 = vrot.slane %v2592, %v2605
      %v2607 = vcombine.low %v2599, %v2606
      %v2608 = vcombine.low %v1396, %v1400
      %v2609 = vcombine.low %v1404, %v1408
      %v2611 = vunpack.c.l.s4 1983009808
      %v2612 = vunpack.c.0.s8 %v2611
      %v2613 = vlaneseq
      %v2614 = vshrl.u32 %v2613, 7
      %v2615 = vsub.s32 %v2612, %v2614
      %v2616 = vrot.slane %v2608, %v2615
      %v2618 = vunpack.c.l.s4 1983009808
      %v2619 = vunpack.c.0.s8 %v2618
      %v2620 = vlaneseq
      %v2621 = vshrl.u32 %v2620, 7
      %v2622 = vsub.s32 %v2619, %v2621
      %v2623 = vrot.slane %v2609, %v2622
      %v2624 = vcombine.low %v2616, %v2623
      %v2625 = vcombine.low %v1412, %v1416
      %v2626 = vcombine.low %v1420, %v1424
      %v2628 = vunpack.c.l.s4 1983009808
      %v2629 = vunpack.c.0.s8 %v2628
      %v2630 = vlaneseq
      %v2631 = vshrl.u32 %v2630, 7
      %v2632 = vsub.s32 %v2629, %v2631
      %v2633 = vrot.slane %v2625, %v2632
      %v2635 = vunpack.c.l.s4 1983009808
      %v2636 = vunpack.c.0.s8 %v2635
      %v2637 = vlaneseq
      %v2638 = vshrl.u32 %v2637, 7
      %v2639 = vsub.s32 %v2636, %v2638
      %v2640 = vrot.slane %v2626, %v2639
      %v2641 = vcombine.low %v2633, %v2640
      %v2643 = vunpack.c.l.s4 1983009808
      %v2644 = vunpack.c.0.s8 %v2643
      %v2645 = vlaneseq
      %v2646 = vshrl.u32 %v2645, 7
      %v2647 = vsub.s32 %v2644, %v2646
      %v2648 = vrot.slane %v1428, %v2647
      %2649 = vrot.lane.b32.xlu0 %v1524, 24
      %v2650 = vpop.permute.xlu0 %2649
      %2651 = vrot.lane.b32.xlu0 %v1541, 24
      %v2652 = vpop.permute.xlu0 %2651
      %2653 = vrot.lane.b32.xlu0 %v1558, 24
      %v2654 = vpop.permute.xlu0 %2653
      %2655 = vrot.lane.b32.xlu0 %v1575, 24
      %v2656 = vpop.permute.xlu0 %2655
      %2657 = vrot.lane.b32.xlu0 %v1582, 24
      %v2658 = vpop.permute.xlu0 %2657
      %2659 = vrot.lane.b32.xlu0 %v1599, 24
      %v2660 = vpop.permute.xlu0 %2659
      %2661 = vrot.lane.b32.xlu0 %v1616, 24
      %v2662 = vpop.permute.xlu0 %2661
      %2663 = vrot.lane.b32.xlu0 %v1633, 24
      %v2664 = vpop.permute.xlu0 %2663
      %2665 = vrot.lane.b32.xlu0 %v1650, 24
      %v2666 = vpop.permute.xlu0 %2665
      %2667 = vrot.lane.b32.xlu0 %v1657, 24
      %v2668 = vpop.permute.xlu0 %2667
      %2669 = vrot.lane.b32.xlu0 %v1674, 24
      %v2670 = vpop.permute.xlu0 %2669
      %2671 = vrot.lane.b32.xlu0 %v1691, 24
      %v2672 = vpop.permute.xlu0 %2671
      %2673 = vrot.lane.b32.xlu0 %v1708, 24
      %v2674 = vpop.permute.xlu0 %2673
      %2675 = vrot.lane.b32.xlu0 %v1725, 24
      %v2676 = vpop.permute.xlu0 %2675
      %2677 = vrot.lane.b32.xlu0 %v1732, 24
      %v2678 = vpop.permute.xlu0 %2677
      %2679 = vrot.lane.b32.xlu0 %v1749, 24
      %v2680 = vpop.permute.xlu0 %2679
      %2681 = vrot.lane.b32.xlu0 %v1766, 24
      %v2682 = vpop.permute.xlu0 %2681
      %2683 = vrot.lane.b32.xlu0 %v1783, 24
      %v2684 = vpop.permute.xlu0 %2683
      %2685 = vrot.lane.b32.xlu0 %v1800, 24
      %v2686 = vpop.permute.xlu0 %2685
      %2687 = vrot.lane.b32.xlu0 %v1807, 24
      %v2688 = vpop.permute.xlu0 %2687
      %2689 = vrot.lane.b32.xlu0 %v2590, 24
      %v2690 = vpop.permute.xlu0 %2689
      %2691 = vrot.lane.b32.xlu0 %v2607, 24
      %v2692 = vpop.permute.xlu0 %2691
      %2693 = vrot.lane.b32.xlu0 %v2624, 24
      %v2694 = vpop.permute.xlu0 %2693
      %2695 = vrot.lane.b32.xlu0 %v2641, 24
      %v2696 = vpop.permute.xlu0 %2695
      %2697 = vrot.lane.b32.xlu0 %v2648, 24
      %v2698 = vpop.permute.xlu0 %2697
      %v2724 = vcombine.low %v1368, %v1372
      %v2725 = vcombine.low %v1376, %v1380
      %v2727 = vunpack.c.l.s4 1983009808
      %v2728 = vunpack.c.0.s8 %v2727
      %v2729 = vlaneseq
      %v2730 = vshrl.u32 %v2729, 7
      %v2731 = vsub.s32 %v2728, %v2730
      %v2732 = vrot.slane %v2724, %v2731
      %v2734 = vunpack.c.l.s4 1983009808
      %v2735 = vunpack.c.0.s8 %v2734
      %v2736 = vlaneseq
      %v2737 = vshrl.u32 %v2736, 7
      %v2738 = vsub.s32 %v2735, %v2737
      %v2739 = vrot.slane %v2725, %v2738
      %v2740 = vcombine.low %v2732, %v2739
      %v2741 = vcombine.low %v1384, %v1388
      %v2742 = vcombine.low %v1392, %v1396
      %v2744 = vunpack.c.l.s4 1983009808
      %v2745 = vunpack.c.0.s8 %v2744
      %v2746 = vlaneseq
      %v2747 = vshrl.u32 %v2746, 7
      %v2748 = vsub.s32 %v2745, %v2747
      %v2749 = vrot.slane %v2741, %v2748
      %v2751 = vunpack.c.l.s4 1983009808
      %v2752 = vunpack.c.0.s8 %v2751
      %v2753 = vlaneseq
      %v2754 = vshrl.u32 %v2753, 7
      %v2755 = vsub.s32 %v2752, %v2754
      %v2756 = vrot.slane %v2742, %v2755
      %v2757 = vcombine.low %v2749, %v2756
      %v2758 = vcombine.low %v1400, %v1404
      %v2759 = vcombine.low %v1408, %v1412
      %v2761 = vunpack.c.l.s4 1983009808
      %v2762 = vunpack.c.0.s8 %v2761
      %v2763 = vlaneseq
      %v2764 = vshrl.u32 %v2763, 7
      %v2765 = vsub.s32 %v2762, %v2764
      %v2766 = vrot.slane %v2758, %v2765
      %v2768 = vunpack.c.l.s4 1983009808
      %v2769 = vunpack.c.0.s8 %v2768
      %v2770 = vlaneseq
      %v2771 = vshrl.u32 %v2770, 7
      %v2772 = vsub.s32 %v2769, %v2771
      %v2773 = vrot.slane %v2759, %v2772
      %v2774 = vcombine.low %v2766, %v2773
      %v2775 = vcombine.low %v1416, %v1420
      %v2776 = vcombine.low %v1424, %v1428
      %v2778 = vunpack.c.l.s4 1983009808
      %v2779 = vunpack.c.0.s8 %v2778
      %v2780 = vlaneseq
      %v2781 = vshrl.u32 %v2780, 7
      %v2782 = vsub.s32 %v2779, %v2781
      %v2783 = vrot.slane %v2775, %v2782
      %v2785 = vunpack.c.l.s4 1983009808
      %v2786 = vunpack.c.0.s8 %v2785
      %v2787 = vlaneseq
      %v2788 = vshrl.u32 %v2787, 7
      %v2789 = vsub.s32 %v2786, %v2788
      %v2790 = vrot.slane %v2776, %v2789
      %v2791 = vcombine.low %v2783, %v2790
      %v2792 = vrot.slane %v2740, 7
      %v2793 = vrot.slane %v2757, 7
      %v2794 = vsel %vm2173, %v2792, %v2793
      %v2795 = vrot.slane %v2774, 7
      %v2796 = vsel %vm2173, %v2793, %v2795
      %v2797 = vrot.slane %v2791, 7
      %v2798 = vsel %vm2173, %v2795, %v2797
      %2799 = vrot.lane.b32.xlu0 %v2181, 28
      %v2800 = vpop.permute.xlu0 %2799
      %2801 = vrot.lane.b32.xlu0 %v2183, 28
      %v2802 = vpop.permute.xlu0 %2801
      %2803 = vrot.lane.b32.xlu0 %v2185, 28
      %v2804 = vpop.permute.xlu0 %2803
      %2805 = vrot.lane.b32.xlu0 %v2187, 28
      %v2806 = vpop.permute.xlu0 %2805
      %2807 = vrot.lane.b32.xlu0 %v2186, 28
      %v2808 = vpop.permute.xlu0 %2807
      %2809 = vrot.lane.b32.xlu0 %v2188, 28
      %v2810 = vpop.permute.xlu0 %2809
      %2811 = vrot.lane.b32.xlu0 %v2190, 28
      %v2812 = vpop.permute.xlu0 %2811
      %2813 = vrot.lane.b32.xlu0 %v2192, 28
      %v2814 = vpop.permute.xlu0 %2813
      %2815 = vrot.lane.b32.xlu0 %v2194, 28
      %v2816 = vpop.permute.xlu0 %2815
      %2817 = vrot.lane.b32.xlu0 %v2193, 28
      %v2818 = vpop.permute.xlu0 %2817
      %2819 = vrot.lane.b32.xlu0 %v2195, 28
      %v2820 = vpop.permute.xlu0 %2819
      %2821 = vrot.lane.b32.xlu0 %v2197, 28
      %v2822 = vpop.permute.xlu0 %2821
      %2823 = vrot.lane.b32.xlu0 %v2199, 28
      %v2824 = vpop.permute.xlu0 %2823
      %2825 = vrot.lane.b32.xlu0 %v2201, 28
      %v2826 = vpop.permute.xlu0 %2825
      %2827 = vrot.lane.b32.xlu0 %v2200, 28
      %v2828 = vpop.permute.xlu0 %2827
      %2829 = vrot.lane.b32.xlu0 %v2202, 28
      %v2830 = vpop.permute.xlu0 %2829
      %2831 = vrot.lane.b32.xlu0 %v2204, 28
      %v2832 = vpop.permute.xlu0 %2831
      %2833 = vrot.lane.b32.xlu0 %v2206, 28
      %v2834 = vpop.permute.xlu0 %2833
      %2835 = vrot.lane.b32.xlu0 %v2208, 28
      %v2836 = vpop.permute.xlu0 %2835
      %2837 = vrot.lane.b32.xlu0 %v2207, 28
      %v2838 = vpop.permute.xlu0 %2837
      %2839 = vrot.lane.b32.xlu0 %v2792, 28
      %v2840 = vpop.permute.xlu0 %2839
      %2841 = vrot.lane.b32.xlu0 %v2794, 28
      %v2842 = vpop.permute.xlu0 %2841
      %2843 = vrot.lane.b32.xlu0 %v2796, 28
      %v2844 = vpop.permute.xlu0 %2843
      %2845 = vrot.lane.b32.xlu0 %v2798, 28
      %v2846 = vpop.permute.xlu0 %2845
      %2847 = vrot.lane.b32.xlu0 %v2797, 28
      %v2848 = vpop.permute.xlu0 %2847
      %v2875 = vunpack.c.l.s4 1983009808
      %v2876 = vunpack.c.0.s8 %v2875
      %v2877 = vlaneseq
      %v2878 = vshrl.u32 %v2877, 7
      %v2879 = vsub.s32 %v2876, %v2878
      %v2880 = vrot.slane %v1432, %v2879
      %2881 = vrot.lane.b32.xlu0 %v1917, 32
      %v2882 = vpop.permute.xlu0 %2881
      %2883 = vrot.lane.b32.xlu0 %v1934, 32
      %v2884 = vpop.permute.xlu0 %2883
      %2885 = vrot.lane.b32.xlu0 %v1951, 32
      %v2886 = vpop.permute.xlu0 %2885
      %2887 = vrot.lane.b32.xlu0 %v1968, 32
      %v2888 = vpop.permute.xlu0 %2887
      %2889 = vrot.lane.b32.xlu0 %v2297, 32
      %v2890 = vpop.permute.xlu0 %2889
      %2891 = vrot.lane.b32.xlu0 %v1985, 32
      %v2892 = vpop.permute.xlu0 %2891
      %2893 = vrot.lane.b32.xlu0 %v2002, 32
      %v2894 = vpop.permute.xlu0 %2893
      %2895 = vrot.lane.b32.xlu0 %v2019, 32
      %v2896 = vpop.permute.xlu0 %2895
      %2897 = vrot.lane.b32.xlu0 %v2036, 32
      %v2898 = vpop.permute.xlu0 %2897
      %2899 = vrot.lane.b32.xlu0 %v2304, 32
      %v2900 = vpop.permute.xlu0 %2899
      %2901 = vrot.lane.b32.xlu0 %v2053, 32
      %v2902 = vpop.permute.xlu0 %2901
      %2903 = vrot.lane.b32.xlu0 %v2070, 32
      %v2904 = vpop.permute.xlu0 %2903
      %2905 = vrot.lane.b32.xlu0 %v2087, 32
      %v2906 = vpop.permute.xlu0 %2905
      %2907 = vrot.lane.b32.xlu0 %v2104, 32
      %v2908 = vpop.permute.xlu0 %2907
      %2909 = vrot.lane.b32.xlu0 %v2311, 32
      %v2910 = vpop.permute.xlu0 %2909
      %2911 = vrot.lane.b32.xlu0 %v2121, 32
      %v2912 = vpop.permute.xlu0 %2911
      %2913 = vrot.lane.b32.xlu0 %v2138, 32
      %v2914 = vpop.permute.xlu0 %2913
      %2915 = vrot.lane.b32.xlu0 %v2155, 32
      %v2916 = vpop.permute.xlu0 %2915
      %2917 = vrot.lane.b32.xlu0 %v2172, 32
      %v2918 = vpop.permute.xlu0 %2917
      %2919 = vrot.lane.b32.xlu0 %v2318, 32
      %v2920 = vpop.permute.xlu0 %2919
      %2921 = vrot.lane.b32.xlu0 %v2740, 32
      %v2922 = vpop.permute.xlu0 %2921
      %2923 = vrot.lane.b32.xlu0 %v2757, 32
      %v2924 = vpop.permute.xlu0 %2923
      %2925 = vrot.lane.b32.xlu0 %v2774, 32
      %v2926 = vpop.permute.xlu0 %2925
      %2927 = vrot.lane.b32.xlu0 %v2791, 32
      %v2928 = vpop.permute.xlu0 %2927
      %2929 = vrot.lane.b32.xlu0 %v2880, 32
      %v2930 = vpop.permute.xlu0 %2929
      %vm2956 = vcmask 31744
      %v2957 = vsel %vm2956, %v1449, %v2210
      %v2958 = vsel %vm2956, %v1466, %v2212
      %v2959 = vsel %vm2956, %v1483, %v2214
      %v2960 = vsel %vm2956, %v1500, %v2216
      %v2961 = vsel %vm2956, %v1507, %v2218
      %v2962 = vsel %vm2956, %v1524, %v2220
      %v2963 = vsel %vm2956, %v1541, %v2222
      %v2964 = vsel %vm2956, %v1558, %v2224
      %v2965 = vsel %vm2956, %v1575, %v2226
      %v2966 = vsel %vm2956, %v1582, %v2228
      %v2967 = vsel %vm2956, %v1599, %v2230
      %v2968 = vsel %vm2956, %v1616, %v2232
      %v2969 = vsel %vm2956, %v1633, %v2234
      %v2970 = vsel %vm2956, %v1650, %v2236
      %v2971 = vsel %vm2956, %v1657, %v2238
      %v2972 = vsel %vm2956, %v1674, %v2240
      %v2973 = vsel %vm2956, %v1691, %v2242
      %v2974 = vsel %vm2956, %v1708, %v2244
      %v2975 = vsel %vm2956, %v1725, %v2246
      %v2976 = vsel %vm2956, %v1732, %v2248
      %v2977 = vsel %vm2956, %v1749, %v2250
      %v2978 = vsel %vm2956, %v1766, %v2252
      %v2979 = vsel %vm2956, %v1783, %v2254
      %v2980 = vsel %vm2956, %v1800, %v2256
      %v2981 = vsel %vm2956, %v1807, %v2258
      %vm2982 = vcmask 64512
      %v2983 = vsel %vm2982, %v2957, %v2320
      %v2984 = vsel %vm2982, %v2958, %v2322
      %v2985 = vsel %vm2982, %v2959, %v2324
      %v2986 = vsel %vm2982, %v2960, %v2326
      %v2987 = vsel %vm2982, %v2961, %v2328
      %v2988 = vsel %vm2982, %v2962, %v2330
      %v2989 = vsel %vm2982, %v2963, %v2332
      %v2990 = vsel %vm2982, %v2964, %v2334
      %v2991 = vsel %vm2982, %v2965, %v2336
      %v2992 = vsel %vm2982, %v2966, %v2338
      %v2993 = vsel %vm2982, %v2967, %v2340
      %v2994 = vsel %vm2982, %v2968, %v2342
      %v2995 = vsel %vm2982, %v2969, %v2344
      %v2996 = vsel %vm2982, %v2970, %v2346
      %v2997 = vsel %vm2982, %v2971, %v2348
      %v2998 = vsel %vm2982, %v2972, %v2350
      %v2999 = vsel %vm2982, %v2973, %v2352
      %v3000 = vsel %vm2982, %v2974, %v2354
      %v3001 = vsel %vm2982, %v2975, %v2356
      %v3002 = vsel %vm2982, %v2976, %v2358
      %v3003 = vsel %vm2982, %v2977, %v2360
      %v3004 = vsel %vm2982, %v2978, %v2362
      %v3005 = vsel %vm2982, %v2979, %v2364
      %v3006 = vsel %vm2982, %v2980, %v2366
      %v3007 = vsel %vm2982, %v2981, %v2368
      %vm3008 = vcmask 97280
      %v3009 = vsel %vm3008, %v2983, %v2395
      %v3010 = vsel %vm3008, %v2984, %v2397
      %v3011 = vsel %vm3008, %v2985, %v2399
      %v3012 = vsel %vm3008, %v2986, %v2401
      %v3013 = vsel %vm3008, %v2987, %v2403
      %v3014 = vsel %vm3008, %v2988, %v2395
      %v3015 = vsel %vm3008, %v2989, %v2397
      %v3016 = vsel %vm3008, %v2990, %v2399
      %v3017 = vsel %vm3008, %v2991, %v2401
      %v3018 = vsel %vm3008, %v2992, %v2403
      %v3019 = vsel %vm3008, %v2988, %v2405
      %v3020 = vsel %vm3008, %v2989, %v2407
      %v3021 = vsel %vm3008, %v2990, %v2409
      %v3022 = vsel %vm3008, %v2991, %v2411
      %v3023 = vsel %vm3008, %v2992, %v2413
      %v3024 = vsel %vm3008, %v2993, %v2405
      %v3025 = vsel %vm3008, %v2994, %v2407
      %v3026 = vsel %vm3008, %v2995, %v2409
      %v3027 = vsel %vm3008, %v2996, %v2411
      %v3028 = vsel %vm3008, %v2997, %v2413
      %v3029 = vsel %vm3008, %v2993, %v2415
      %v3030 = vsel %vm3008, %v2994, %v2417
      %v3031 = vsel %vm3008, %v2995, %v2419
      %v3032 = vsel %vm3008, %v2996, %v2421
      %v3033 = vsel %vm3008, %v2997, %v2423
      %v3034 = vsel %vm3008, %v2998, %v2415
      %v3035 = vsel %vm3008, %v2999, %v2417
      %v3036 = vsel %vm3008, %v3000, %v2419
      %v3037 = vsel %vm3008, %v3001, %v2421
      %v3038 = vsel %vm3008, %v3002, %v2423
      %v3039 = vsel %vm3008, %v2998, %v2425
      %v3040 = vsel %vm3008, %v2999, %v2427
      %v3041 = vsel %vm3008, %v3000, %v2429
      %v3042 = vsel %vm3008, %v3001, %v2431
      %v3043 = vsel %vm3008, %v3002, %v2433
      %v3044 = vsel %vm3008, %v3003, %v2425
      %v3045 = vsel %vm3008, %v3004, %v2427
      %v3046 = vsel %vm3008, %v3005, %v2429
      %v3047 = vsel %vm3008, %v3006, %v2431
      %v3048 = vsel %vm3008, %v3007, %v2433
      %vm3049 = vcmask 130048
      %v3050 = vsel %vm3049, %v3009, %v2455
      %v3051 = vsel %vm3049, %v3010, %v2457
      %v3052 = vsel %vm3049, %v3011, %v2459
      %v3053 = vsel %vm3049, %v3012, %v2461
      %v3054 = vsel %vm3049, %v3013, %v2463
      %v3055 = vsel %vm3049, %v3014, %v2455
      %v3056 = vsel %vm3049, %v3015, %v2457
      %v3057 = vsel %vm3049, %v3016, %v2459
      %v3058 = vsel %vm3049, %v3017, %v2461
      %v3059 = vsel %vm3049, %v3018, %v2463
      %v3060 = vsel %vm3049, %v3019, %v2465
      %v3061 = vsel %vm3049, %v3020, %v2467
      %v3062 = vsel %vm3049, %v3021, %v2469
      %v3063 = vsel %vm3049, %v3022, %v2471
      %v3064 = vsel %vm3049, %v3023, %v2473
      %v3065 = vsel %vm3049, %v3024, %v2465
      %v3066 = vsel %vm3049, %v3025, %v2467
      %v3067 = vsel %vm3049, %v3026, %v2469
      %v3068 = vsel %vm3049, %v3027, %v2471
      %v3069 = vsel %vm3049, %v3028, %v2473
      %v3070 = vsel %vm3049, %v3029, %v2475
      %v3071 = vsel %vm3049, %v3030, %v2477
      %v3072 = vsel %vm3049, %v3031, %v2479
      %v3073 = vsel %vm3049, %v3032, %v2481
      %v3074 = vsel %vm3049, %v3033, %v2483
      %v3075 = vsel %vm3049, %v3034, %v2475
      %v3076 = vsel %vm3049, %v3035, %v2477
      %v3077 = vsel %vm3049, %v3036, %v2479
      %v3078 = vsel %vm3049, %v3037, %v2481
      %v3079 = vsel %vm3049, %v3038, %v2483
      %v3080 = vsel %vm3049, %v3039, %v2485
      %v3081 = vsel %vm3049, %v3040, %v2487
      %v3082 = vsel %vm3049, %v3041, %v2489
      %v3083 = vsel %vm3049, %v3042, %v2491
      %v3084 = vsel %vm3049, %v3043, %v2493
      %v3085 = vsel %vm3049, %v3044, %v2485
      %v3086 = vsel %vm3049, %v3045, %v2487
      %v3087 = vsel %vm3049, %v3046, %v2489
      %v3088 = vsel %vm3049, %v3047, %v2491
      %v3089 = vsel %vm3049, %v3048, %v2493
      %vm3090 = vcmask 162816
      %v3091 = vsel %vm3090, %v3050, %v2515
      %v3092 = vsel %vm3090, %v3051, %v2517
      %v3093 = vsel %vm3090, %v3052, %v2519
      %v3094 = vsel %vm3090, %v3053, %v2521
      %v3095 = vsel %vm3090, %v3054, %v2523
      %v3096 = vsel %vm3090, %v3055, %v2515
      %v3097 = vsel %vm3090, %v3056, %v2517
      %v3098 = vsel %vm3090, %v3057, %v2519
      %v3099 = vsel %vm3090, %v3058, %v2521
      %v3100 = vsel %vm3090, %v3059, %v2523
      %v3101 = vsel %vm3090, %v3060, %v2525
      %v3102 = vsel %vm3090, %v3061, %v2527
      %v3103 = vsel %vm3090, %v3062, %v2529
      %v3104 = vsel %vm3090, %v3063, %v2531
      %v3105 = vsel %vm3090, %v3064, %v2533
      %v3106 = vsel %vm3090, %v3065, %v2525
      %v3107 = vsel %vm3090, %v3066, %v2527
      %v3108 = vsel %vm3090, %v3067, %v2529
      %v3109 = vsel %vm3090, %v3068, %v2531
      %v3110 = vsel %vm3090, %v3069, %v2533
      %v3111 = vsel %vm3090, %v3070, %v2535
      %v3112 = vsel %vm3090, %v3071, %v2537
      %v3113 = vsel %vm3090, %v3072, %v2539
      %v3114 = vsel %vm3090, %v3073, %v2541
      %v3115 = vsel %vm3090, %v3074, %v2543
      %v3116 = vsel %vm3090, %v3075, %v2535
      %v3117 = vsel %vm3090, %v3076, %v2537
      %v3118 = vsel %vm3090, %v3077, %v2539
      %v3119 = vsel %vm3090, %v3078, %v2541
      %v3120 = vsel %vm3090, %v3079, %v2543
      %v3121 = vsel %vm3090, %v3080, %v2545
      %v3122 = vsel %vm3090, %v3081, %v2547
      %v3123 = vsel %vm3090, %v3082, %v2549
      %v3124 = vsel %vm3090, %v3083, %v2551
      %v3125 = vsel %vm3090, %v3084, %v2553
      %v3126 = vsel %vm3090, %v3085, %v2545
      %v3127 = vsel %vm3090, %v3086, %v2547
      %v3128 = vsel %vm3090, %v3087, %v2549
      %v3129 = vsel %vm3090, %v3088, %v2551
      %v3130 = vsel %vm3090, %v3089, %v2553
      %vm3131 = vcmask 195584
      %v3132 = vsel %vm3131, %v3091, %v2650
      %v3133 = vsel %vm3131, %v3092, %v2652
      %v3134 = vsel %vm3131, %v3093, %v2654
      %v3135 = vsel %vm3131, %v3094, %v2656
      %v3136 = vsel %vm3131, %v3095, %v2658
      %v3137 = vsel %vm3131, %v3096, %v2660
      %v3138 = vsel %vm3131, %v3097, %v2662
      %v3139 = vsel %vm3131, %v3098, %v2664
      %v3140 = vsel %vm3131, %v3099, %v2666
      %v3141 = vsel %vm3131, %v3100, %v2668
      %v3142 = vsel %vm3131, %v3101, %v2660
      %v3143 = vsel %vm3131, %v3102, %v2662
      %v3144 = vsel %vm3131, %v3103, %v2664
      %v3145 = vsel %vm3131, %v3104, %v2666
      %v3146 = vsel %vm3131, %v3105, %v2668
      %v3147 = vsel %vm3131, %v3106, %v2670
      %v3148 = vsel %vm3131, %v3107, %v2672
      %v3149 = vsel %vm3131, %v3108, %v2674
      %v3150 = vsel %vm3131, %v3109, %v2676
      %v3151 = vsel %vm3131, %v3110, %v2678
      %v3152 = vsel %vm3131, %v3111, %v2670
      %v3153 = vsel %vm3131, %v3112, %v2672
      %v3154 = vsel %vm3131, %v3113, %v2674
      %v3155 = vsel %vm3131, %v3114, %v2676
      %v3156 = vsel %vm3131, %v3115, %v2678
      %v3157 = vsel %vm3131, %v3116, %v2680
      %v3158 = vsel %vm3131, %v3117, %v2682
      %v3159 = vsel %vm3131, %v3118, %v2684
      %v3160 = vsel %vm3131, %v3119, %v2686
      %v3161 = vsel %vm3131, %v3120, %v2688
      %v3162 = vsel %vm3131, %v3121, %v2680
      %v3163 = vsel %vm3131, %v3122, %v2682
      %v3164 = vsel %vm3131, %v3123, %v2684
      %v3165 = vsel %vm3131, %v3124, %v2686
      %v3166 = vsel %vm3131, %v3125, %v2688
      %v3167 = vsel %vm3131, %v3126, %v2690
      %v3168 = vsel %vm3131, %v3127, %v2692
      %v3169 = vsel %vm3131, %v3128, %v2694
      %v3170 = vsel %vm3131, %v3129, %v2696
      %v3171 = vsel %vm3131, %v3130, %v2698
      %vm3172 = vcmask 228352
      %v3173 = vsel %vm3172, %v3132, %v2800
      %v3174 = vsel %vm3172, %v3133, %v2802
      %v3175 = vsel %vm3172, %v3134, %v2804
      %v3176 = vsel %vm3172, %v3135, %v2806
      %v3177 = vsel %vm3172, %v3136, %v2808
      %v3178 = vsel %vm3172, %v3137, %v2810
      %v3179 = vsel %vm3172, %v3138, %v2812
      %v3180 = vsel %vm3172, %v3139, %v2814
      %v3181 = vsel %vm3172, %v3140, %v2816
      %v3182 = vsel %vm3172, %v3141, %v2818
      %v3183 = vsel %vm3172, %v3142, %v2810
      %v3184 = vsel %vm3172, %v3143, %v2812
      %v3185 = vsel %vm3172, %v3144, %v2814
      %v3186 = vsel %vm3172, %v3145, %v2816
      %v3187 = vsel %vm3172, %v3146, %v2818
      %v3188 = vsel %vm3172, %v3147, %v2820
      %v3189 = vsel %vm3172, %v3148, %v2822
      %v3190 = vsel %vm3172, %v3149, %v2824
      %v3191 = vsel %vm3172, %v3150, %v2826
      %v3192 = vsel %vm3172, %v3151, %v2828
      %v3193 = vsel %vm3172, %v3152, %v2820
      %v3194 = vsel %vm3172, %v3153, %v2822
      %v3195 = vsel %vm3172, %v3154, %v2824
      %v3196 = vsel %vm3172, %v3155, %v2826
      %v3197 = vsel %vm3172, %v3156, %v2828
      %v3198 = vsel %vm3172, %v3157, %v2830
      %v3199 = vsel %vm3172, %v3158, %v2832
      %v3200 = vsel %vm3172, %v3159, %v2834
      %v3201 = vsel %vm3172, %v3160, %v2836
      %v3202 = vsel %vm3172, %v3161, %v2838
      %v3203 = vsel %vm3172, %v3162, %v2830
      %v3204 = vsel %vm3172, %v3163, %v2832
      %v3205 = vsel %vm3172, %v3164, %v2834
      %v3206 = vsel %vm3172, %v3165, %v2836
      %v3207 = vsel %vm3172, %v3166, %v2838
      %v3208 = vsel %vm3172, %v3167, %v2840
      %v3209 = vsel %vm3172, %v3168, %v2842
      %v3210 = vsel %vm3172, %v3169, %v2844
      %v3211 = vsel %vm3172, %v3170, %v2846
      %v3212 = vsel %vm3172, %v3171, %v2848
      %vm3213 = vcmask 261120
      %v3214 = vsel %vm3213, %v3173, %v2882
      %v3215 = vsel %vm3213, %v3174, %v2884
      %v3216 = vsel %vm3213, %v3175, %v2886
      %v3217 = vsel %vm3213, %v3176, %v2888
      %v3218 = vsel %vm3213, %v3177, %v2890
      %v3219 = vsel %vm3213, %v3178, %v2892
      %v3220 = vsel %vm3213, %v3179, %v2894
      %v3221 = vsel %vm3213, %v3180, %v2896
      %v3222 = vsel %vm3213, %v3181, %v2898
      %v3223 = vsel %vm3213, %v3182, %v2900
      %v3224 = vsel %vm3213, %v3183, %v2892
      %v3225 = vsel %vm3213, %v3184, %v2894
      %v3226 = vsel %vm3213, %v3185, %v2896
      %v3227 = vsel %vm3213, %v3186, %v2898
      %v3228 = vsel %vm3213, %v3187, %v2900
      %v3229 = vsel %vm3213, %v3188, %v2902
      %v3230 = vsel %vm3213, %v3189, %v2904
      %v3231 = vsel %vm3213, %v3190, %v2906
      %v3232 = vsel %vm3213, %v3191, %v2908
      %v3233 = vsel %vm3213, %v3192, %v2910
      %v3234 = vsel %vm3213, %v3193, %v2902
      %v3235 = vsel %vm3213, %v3194, %v2904
      %v3236 = vsel %vm3213, %v3195, %v2906
      %v3237 = vsel %vm3213, %v3196, %v2908
      %v3238 = vsel %vm3213, %v3197, %v2910
      %v3239 = vsel %vm3213, %v3198, %v2912
      %v3240 = vsel %vm3213, %v3199, %v2914
      %v3241 = vsel %vm3213, %v3200, %v2916
      %v3242 = vsel %vm3213, %v3201, %v2918
      %v3243 = vsel %vm3213, %v3202, %v2920
      %v3244 = vsel %vm3213, %v3203, %v2912
      %v3245 = vsel %vm3213, %v3204, %v2914
      %v3246 = vsel %vm3213, %v3205, %v2916
      %v3247 = vsel %vm3213, %v3206, %v2918
      %v3248 = vsel %vm3213, %v3207, %v2920
      %v3249 = vsel %vm3213, %v3208, %v2922
      %v3250 = vsel %vm3213, %v3209, %v2924
      %v3251 = vsel %vm3213, %v3210, %v2926
      %v3252 = vsel %vm3213, %v3211, %v2928
      %v3253 = vsel %vm3213, %v3212, %v2930
      %vm3294 = vcmask 1046528
      %v3295 = vrot.slane %v3214, 1
      %v3296 = vrot.slane %v3215, 1
      %v3297 = vsel %vm3294, %v3295, %v3296
      %v3298 = vrot.slane %v3216, 1
      %v3299 = vsel %vm3294, %v3296, %v3298
      %v3300 = vrot.slane %v3217, 1
      %v3301 = vsel %vm3294, %v3298, %v3300
      %v3302 = vrot.slane %v3218, 1
      %v3303 = vsel %vm3294, %v3300, %v3302
      %v3304 = vrot.slane %v3219, 1
      %v3305 = vrot.slane %v3220, 1
      %v3306 = vsel %vm3294, %v3304, %v3305
      %v3307 = vrot.slane %v3221, 1
      %v3308 = vsel %vm3294, %v3305, %v3307
      %v3309 = vrot.slane %v3222, 1
      %v3310 = vsel %vm3294, %v3307, %v3309
      %v3311 = vrot.slane %v3223, 1
      %v3312 = vsel %vm3294, %v3309, %v3311
      %v3313 = vrot.slane %v3224, 1
      %v3314 = vrot.slane %v3225, 1
      %v3315 = vsel %vm3294, %v3313, %v3314
      %v3316 = vrot.slane %v3226, 1
      %v3317 = vsel %vm3294, %v3314, %v3316
      %v3318 = vrot.slane %v3227, 1
      %v3319 = vsel %vm3294, %v3316, %v3318
      %v3320 = vrot.slane %v3228, 1
      %v3321 = vsel %vm3294, %v3318, %v3320
      %v3322 = vrot.slane %v3229, 1
      %v3323 = vrot.slane %v3230, 1
      %v3324 = vsel %vm3294, %v3322, %v3323
      %v3325 = vrot.slane %v3231, 1
      %v3326 = vsel %vm3294, %v3323, %v3325
      %v3327 = vrot.slane %v3232, 1
      %v3328 = vsel %vm3294, %v3325, %v3327
      %v3329 = vrot.slane %v3233, 1
      %v3330 = vsel %vm3294, %v3327, %v3329
      %v3331 = vrot.slane %v3234, 1
      %v3332 = vrot.slane %v3235, 1
      %v3333 = vsel %vm3294, %v3331, %v3332
      %v3334 = vrot.slane %v3236, 1
      %v3335 = vsel %vm3294, %v3332, %v3334
      %v3336 = vrot.slane %v3237, 1
      %v3337 = vsel %vm3294, %v3334, %v3336
      %v3338 = vrot.slane %v3238, 1
      %v3339 = vsel %vm3294, %v3336, %v3338
      %v3340 = vrot.slane %v3239, 1
      %v3341 = vrot.slane %v3240, 1
      %v3342 = vsel %vm3294, %v3340, %v3341
      %v3343 = vrot.slane %v3241, 1
      %v3344 = vsel %vm3294, %v3341, %v3343
      %v3345 = vrot.slane %v3242, 1
      %v3346 = vsel %vm3294, %v3343, %v3345
      %v3347 = vrot.slane %v3243, 1
      %v3348 = vsel %vm3294, %v3345, %v3347
      %v3349 = vrot.slane %v3244, 1
      %v3350 = vrot.slane %v3245, 1
      %v3351 = vsel %vm3294, %v3349, %v3350
      %v3352 = vrot.slane %v3246, 1
      %v3353 = vsel %vm3294, %v3350, %v3352
      %v3354 = vrot.slane %v3247, 1
      %v3355 = vsel %vm3294, %v3352, %v3354
      %v3356 = vrot.slane %v3248, 1
      %v3357 = vsel %vm3294, %v3354, %v3356
      %v3358 = vrot.slane %v3249, 1
      %v3359 = vrot.slane %v3250, 1
      %v3360 = vsel %vm3294, %v3358, %v3359
      %v3361 = vrot.slane %v3251, 1
      %v3362 = vsel %vm3294, %v3359, %v3361
      %v3363 = vrot.slane %v3252, 1
      %v3364 = vsel %vm3294, %v3361, %v3363
      %v3365 = vrot.slane %v3253, 1
      %v3366 = vsel %vm3294, %v3363, %v3365
      %v3367 = vld [vmem:[%s1] sm:$0xff]
      %vm3368 = vcmask 293888
      %v3370 = vsel %vm3368, %v3367, 0
      %v3372 = vsel %vm3368, %v3297, 0
      %v3374 = vsel %vm3368, %v3299, 0
      %v3376 = vsel %vm3368, %v3301, 0
      %v3378 = vsel %vm3368, %v3303, 0
      %v3380 = vsel %vm3368, %v3306, 0
      %v3382 = vsel %vm3368, %v3308, 0
      %v3384 = vsel %vm3368, %v3310, 0
      %v3386 = vsel %vm3368, %v3312, 0
      %v3388 = vsel %vm3368, %v3315, 0
      %v3390 = vsel %vm3368, %v3317, 0
      %v3392 = vsel %vm3368, %v3319, 0
      %v3394 = vsel %vm3368, %v3321, 0
      %v3396 = vsel %vm3368, %v3324, 0
      %v3398 = vsel %vm3368, %v3326, 0
      %v3400 = vsel %vm3368, %v3328, 0
      %v3402 = vsel %vm3368, %v3330, 0
      %v3404 = vsel %vm3368, %v3333, 0
      %v3406 = vsel %vm3368, %v3335, 0
      %v3408 = vsel %vm3368, %v3337, 0
      %v3410 = vsel %vm3368, %v3339, 0
      %v3412 = vsel %vm3368, %v3342, 0
      %v3414 = vsel %vm3368, %v3344, 0
      %v3416 = vsel %vm3368, %v3346, 0
      %v3418 = vsel %vm3368, %v3348, 0
      %v3420 = vsel %vm3368, %v3351, 0
      %v3422 = vsel %vm3368, %v3353, 0
      %v3424 = vsel %vm3368, %v3355, 0
      %v3426 = vsel %vm3368, %v3357, 0
      %v3428 = vsel %vm3368, %v3360, 0
      %v3430 = vsel %vm3368, %v3362, 0
      %v3432 = vsel %vm3368, %v3364, 0
      %v3434 = vsel %vm3368, %v3366, 0
      %3436 = vmatprep.subr.mxu0 0.0
      %3437 = vmatpush1.xpose.msra.mxu0 %v3402
      %3438 = vmatprep.subr.mxu0 0.0
      %3439 = vmatpush1.xpose.msra.mxu0 %v3400
      %3440 = vmatprep.subr.mxu0 0.0
      %3441 = vmatpush1.xpose.msra.mxu0 %v3398
      %3442 = vmatprep.subr.mxu0 0.0
      %3443 = vmatpush1.xpose.msra.mxu0 %v3396
      %3444 = vmatprep.subr.mxu0 0.0
      %3445 = vmatpush1.xpose.msra.mxu0 %v3394
      %3446 = vmatprep.subr.mxu0 0.0
      %3447 = vmatpush1.xpose.msra.mxu0 %v3392
      %3448 = vmatprep.subr.mxu0 0.0
      %3449 = vmatpush1.xpose.msra.mxu0 %v3390
      %3450 = vmatprep.subr.mxu0 0.0
      %3451 = vmatpush1.xpose.msra.mxu0 %v3388
      %3452 = vmatprep.subr.mxu0 0.0
      %3453 = vmatpush1.xpose.msra.mxu0 %v3386
      %3454 = vmatprep.subr.mxu0 0.0
      %3455 = vmatpush1.xpose.msra.mxu0 %v3384
      %3456 = vmatprep.subr.mxu0 0.0
      %3457 = vmatpush1.xpose.msra.mxu0 %v3382
      %3458 = vmatprep.subr.mxu0 0.0
      %3459 = vmatpush1.xpose.msra.mxu0 %v3380
      %3460 = vmatprep.subr.mxu0 0.0
      %3461 = vmatpush1.xpose.msra.mxu0 %v3378
      %3462 = vmatprep.subr.mxu0 0.0
      %3463 = vmatpush1.xpose.msra.mxu0 %v3376
      %3464 = vmatprep.subr.mxu0 0.0
      %3465 = vmatpush1.xpose.msra.mxu0 %v3374
      %3466 = vmatprep.subr.mxu0 0.0
      %3467 = vmatpush1.xpose.msra.mxu0 %v3372
      %3468 = vmatprep.subr.mxu0 0.0
      %3469 = vmatpush2.xpose.msra.mxu0 %v3434
      %3470 = vmatprep.subr.mxu0 0.0
      %3471 = vmatpush2.xpose.msra.mxu0 %v3432
      %3472 = vmatprep.subr.mxu0 0.0
      %3473 = vmatpush2.xpose.msra.mxu0 %v3430
      %3474 = vmatprep.subr.mxu0 0.0
      %3475 = vmatpush2.xpose.msra.mxu0 %v3428
      %3476 = vmatprep.subr.mxu0 0.0
      %3477 = vmatpush2.xpose.msra.mxu0 %v3426
      %3478 = vmatprep.subr.mxu0 0.0
      %3479 = vmatpush2.xpose.msra.mxu0 %v3424
      %3480 = vmatprep.subr.mxu0 0.0
      %3481 = vmatpush2.xpose.msra.mxu0 %v3422
      %3482 = vmatprep.subr.mxu0 0.0
      %3483 = vmatpush2.xpose.msra.mxu0 %v3420
      %3484 = vmatprep.subr.mxu0 0.0
      %3485 = vmatpush2.xpose.msra.mxu0 %v3418
      %3486 = vmatprep.subr.mxu0 0.0
      %3487 = vmatpush2.xpose.msra.mxu0 %v3416
      %3488 = vmatprep.subr.mxu0 0.0
      %3489 = vmatpush2.xpose.msra.mxu0 %v3414
      %3490 = vmatprep.subr.mxu0 0.0
      %3491 = vmatpush2.xpose.msra.mxu0 %v3412
      %3492 = vmatprep.subr.mxu0 0.0
      %3493 = vmatpush2.xpose.msra.mxu0 %v3410
      %3494 = vmatprep.subr.mxu0 0.0
      %3495 = vmatpush2.xpose.msra.mxu0 %v3408
      %3496 = vmatprep.subr.mxu0 0.0
      %3497 = vmatpush2.xpose.msra.mxu0 %v3406
      %3498 = vmatprep.subr.mxu0 0.0
      %3499 = vmatpush2.xpose.msra.mxu0 %v3404
      %3500 = vmatprep.mubr.f32.mxu0 0.0
      %3501 = vmatmul.mubr.f32.gmra.mxu0 %v3370
      %v3502 = vpop.f32.mrf.mxu0
      %v3503 = vadd.f32 0.0, %v3502
      %v3504 = vpop.f32.mrf.mxu0
      %v3505 = vadd.f32 0.0, %v3504
      %3506 = vdwg.mxu0
      %3507 = vst [vmem:[%s232] sm:$0xff] %v3503
      %3508 = vst [vmem:[%s232 + $0x8] sm:$0xff] %v3505
      %p3509 = scmp.eq.s32.totalorder %s21, 0
      // Predicated region
      $region29: #{_lambda_.2} parent=27 // pred_check
        %p3510 = pneg %p3509
      $region30: #{_lambda_.2} parent=27 // pred_check_branch
        %3512 = sbr.rel (%p3510) target = $region32
      $region31: #{_lambda_.2} parent=27 // pred_region
        %vm3513 = vcmask 7168
        %3514 = vst.msk [vmem:[%s237] sm:$0xff] %vm3513, 0.0
        %3515 = vst.msk [vmem:[%s241] sm:$0xff] %vm3513, 0.0
      $region32: #{_lambda_.2} parent=27 // pred_fallthru
        _
      %v3516 = vld [vmem:[%s237] sm:$0xff]
      %v3517 = vadd.f32 %v3503, %v3505
      %3518 = vadd.xlane.f32.xlu0 %v3517
      %v3519 = vpop.xlane.xlu0 %3518
      %v3520 = vadd.f32 %v3516, %v3519
      %vm3521 = vcmask 7168
      %3522 = vst.msk [vmem:[%s237] sm:$0xff] %vm3521, %v3520
      %v3523 = vld [vmem:[%s241] sm:$0xff]
      %v3524 = vmul.f32 %v3503, %v3503
      %v3525 = vmul.f32 %v3505, %v3505
      %v3526 = vadd.f32 %v3524, %v3525
      %3527 = vadd.xlane.f32.xlu0 %v3526
      %v3528 = vpop.xlane.xlu0 %3527
      %v3529 = vadd.f32 %v3523, %v3528
      %3530 = vst.msk [vmem:[%s241] sm:$0xff] %vm3521, %v3529
      %s3531 = smul.u32 2, %s21
      %p3532 = scmp.lt.s32.totalorder %s20, 1
      %s3533 = scalar_select %p3532, %s20, 1
      %p3534 = scmp.lt.s32.totalorder %s3531, 7
      %s3535 = scalar_select %p3534, %s3531, 7
      %s3536 = smul.addr %s3533, 8
      %s3537 = sadd.s32 %s3535, %s3536
      %s3538 = smul.addr %s3537, 8
      %s3539 = scalar_lea.vmem %s2, %s3538
      %p3540 = scmp.lt.s32.totalorder %s20, 1
      %s3541 = scalar_select %p3540, %s20, 1
      %s3542 = smul.addr %s3541, 8
      %s3543 = scalar_lea.vmem %s3, %s3542
      %p3544 = scmp.lt.s32.totalorder %s20, 1
      %s3545 = scalar_select %p3544, %s20, 1
      %s3546 = smul.addr %s3545, 8
      %s3547 = scalar_lea.vmem %s4, %s3546
      // Predicated region
      $region33: #{_lambda_.2} parent=27 // pred_check
        %p3548 = pneg %p95
      $region34: #{_lambda_.2} parent=27 // pred_check_branch
        %3550 = sbr.rel (%p3548) target = $region36
      $region35: #{_lambda_.2} parent=27 // pred_region
        %s3551 = smul.u32 2, %s21
      $region36: #{_lambda_.2} parent=27 // pred_fallthru
        _
      // Predicated region
      $region37: #{_lambda_.2} parent=27 // pred_check
        %p3552 = pneg %p121
      $region38: #{_lambda_.2} parent=27 // pred_check_branch
        %3554 = sbr.rel (%p3552) target = $region40
      $region39: #{_lambda_.2} parent=27 // pred_region
        _
      $region40: #{_lambda_.2} parent=27 // pred_fallthru
        _
      // Predicated region
      $region41: #{_lambda_.2} parent=27 // pred_check
        %p3555 = pneg %p147
      $region42: #{_lambda_.2} parent=27 // pred_check_branch
        %3557 = sbr.rel (%p3555) target = $region44
      $region43: #{_lambda_.2} parent=27 // pred_region
        _
      $region44: #{_lambda_.2} parent=27 // pred_fallthru
        _
    $region28: #{_lambda_.2} parent=5 // pred_fallthru
      _
    %p3558 = scmp.le.s32.totalorder 2, %s11
    // Predicated region
    $region45: #{_lambda_.2} parent=5 // pred_check
      %p3559 = pneg %p3558
    $region46: #{_lambda_.2} parent=5 // pred_check_branch
      %3561 = sbr.rel (%p3559) target = $region48
    $region47: #{_lambda_.2} parent=5 // pred_region
      %s3562 = ssub.s32 %s11, 2
      // Predicated region
      $region49: #{_lambda_.2} parent=47 // pred_check
        %p3563 = pneg %p101
      $region50: #{_lambda_.2} parent=47 // pred_check_branch
        %3565 = sbr.rel (%p3563) target = $region52
      $region51: #{_lambda_.2} parent=47 // pred_region
        %s3566 = smul.u32 2, %s23
        %p3567 = scmp.lt.s32.totalorder %s22, 1
        %s3568 = scalar_select %p3567, %s22, 1
        %p3569 = scmp.lt.s32.totalorder %s3566, 7
        %s3570 = scalar_select %p3569, %s3566, 7
        %s3571 = smul.addr %s3568, 8
        %s3572 = sadd.s32 %s3570, %s3571
        %s3573 = smul.addr %s3572, 8
        %s3574 = scalar_lea.vmem %s2, %s3573
      $region52: #{_lambda_.2} parent=47 // pred_fallthru
        _
      // Predicated region
      $region53: #{_lambda_.2} parent=47 // pred_check
        %p3575 = pneg %p127
      $region54: #{_lambda_.2} parent=47 // pred_check_branch
        %3577 = sbr.rel (%p3575) target = $region56
      $region55: #{_lambda_.2} parent=47 // pred_region
        %p3578 = scmp.lt.s32.totalorder %s22, 1
        %s3579 = scalar_select %p3578, %s22, 1
        %s3580 = smul.addr %s3579, 8
        %s3581 = scalar_lea.vmem %s3, %s3580
      $region56: #{_lambda_.2} parent=47 // pred_fallthru
        _
      // Predicated region
      $region57: #{_lambda_.2} parent=47 // pred_check
        %p3582 = pneg %p153
      $region58: #{_lambda_.2} parent=47 // pred_check_branch
        %3584 = sbr.rel (%p3582) target = $region60
      $region59: #{_lambda_.2} parent=47 // pred_region
        %p3585 = scmp.lt.s32.totalorder %s22, 1
        %s3586 = scalar_select %p3585, %s22, 1
        %s3587 = smul.addr %s3586, 8
        %s3588 = scalar_lea.vmem %s4, %s3587
      $region60: #{_lambda_.2} parent=47 // pred_fallthru
        _
    $region48: #{_lambda_.2} parent=5 // pred_fallthru
      _
  $region6: #{_lambda_.2} parent=0 // loop_footer
    %s15 = sadd.s32 1, %s11
  $region7: #{_lambda_.2} parent=0 // loop_footer_branch
    %10 = sbr.rel target = $region3
  $region8: #{_lambda_.2} parent=0 // loop_exit
    _

</llo_original>
